<compile_context>
chip_gen: v7x
topology: tpu7x:2x2x1
jax: 0.10.0
libtpu: 0.0.40
codegen_flags: <defaults>
</compile_context>

<pallas_src>
import functools
import math

import jax
import jax.numpy as jnp
from jax.experimental import pallas as pl
from jax.experimental.pallas import tpu as pltpu


# Row indices inside the packed (L, 10, D) "vec_d" operand.
(_SA_BO, _CA_BQ, _CA_BO, _FF_B2,
 _LN1_G, _LN1_B, _LN2_G, _LN2_B, _LN3_G, _LN3_B) = range(10)


# ---------------------------------------------------------------------------
# Shared math helpers
# ---------------------------------------------------------------------------
def _layernorm(x, g, b, eps=1e-5):
    # x: (R, D), g/b: (1, D) -- statistics in f32
    mu = jnp.mean(x, axis=-1, keepdims=True)
    xc = x - mu
    var = jnp.mean(xc * xc, axis=-1, keepdims=True)
    return xc * jax.lax.rsqrt(var + eps) * g + b


def _mha_heads(qmat, q_off, kvmat, k_off, v_off, wo, bo, bias, bt, sq, sk, nhead, hd):
    """Multi-head attention core, batched over the batch tile.

    qmat : (bt*sq, *)  head-packed projected queries (q columns start at q_off; the
                       1/sqrt(hd) scale is already folded into Wq/bq at pack time)
    kvmat: (bt*sk, *)  head-packed projected keys/values (k at k_off, v at v_off)
    bias : (bt, 1, sk) additive mask bias (-1e30 on masked keys), hoisted by caller
    Returns (bt*sq, D) f32 after the fused output projection (concat heads @ Wo + bo).

    NOTE: a fully-masked key row would diverge from the torch reference (which gives a
    uniform softmax via -inf everywhere); here the -1e30 bias keeps it score-dependent.
    TODO(synk): replace the per-head loop with 4-D head-batched einsums once Mosaic's
    dot_general lowering supports two batch dims without relayout-heavy transposes.
    """
    ctx_heads = []
    for h in range(nhead):
        qh = qmat[:, q_off + h * hd: q_off + (h + 1) * hd].astype(jnp.bfloat16)
        kh = kvmat[:, k_off + h * hd: k_off + (h + 1) * hd].astype(jnp.bfloat16)
        vh = kvmat[:, v_off + h * hd: v_off + (h + 1) * hd].astype(jnp.bfloat16)
        qh = qh.reshape(bt, sq, hd)
        kh = kh.reshape(bt, sk, hd)
        vh = vh.reshape(bt, sk, hd)
        s = jnp.einsum('bqd,bkd->bqk', qh, kh,
                       preferred_element_type=jnp.float32) + bias
        s = s - jnp.max(s, axis=-1, keepdims=True)
        p = jnp.exp(s)
        p = p * pl.reciprocal(jnp.sum(p, axis=-1, keepdims=True), approx=True)
        ctx = jnp.einsum('bqk,bkd->bqd', p.astype(jnp.bfloat16), vh,
                         preferred_element_type=jnp.float32)
        ctx_heads.append(ctx.reshape(bt * sq, hd))
    ctx_all = jnp.concatenate(ctx_heads, axis=-1)            # (bt*sq, D) f32
    return jnp.dot(ctx_all.astype(jnp.bfloat16), wo,
                   preferred_element_type=jnp.float32) + bo


# ---------------------------------------------------------------------------
# Pallas kernel: grid = (batch_tiles, nlayers). One decoder layer per grid step,
# residual stream carried in VMEM scratch across the layer ("arbitrary") axis.
# ---------------------------------------------------------------------------
def decoder_model_kernel(
    x_ref, mem_ref, ma_ref, mb_ref,
    sa_wqkv_ref, sa_wo_ref, ca_wq_ref, ca_wkv_ref, ca_wo_ref,
    ff_w1_ref, ff_w2_ref,
    sa_bqkv_ref, ca_bkv_ref, vec_d_ref, ff_b1_ref,
    out_w_ref, out_b_ref,
    out_ref,
    h_scratch,
    *, nhead):
    l = pl.program_id(1)
    n_l = pl.num_programs(1)
    bt, sa_len, D = x_ref.shape
    sb_len = mem_ref.shape[1]
    hd = D // nhead

    @pl.when(l == 0)
    def _init():
        h_scratch[...] = x_ref[...]                           # residual stream init (f32)

    # Flattened residual stream / memory for token-wise ops.
    h = h_scratch[...].reshape(bt * sa_len, D)                # f32
    mem_bf = mem_ref[...].reshape(bt * sb_len, D).astype(jnp.bfloat16)

    # Padding masks (float, nonzero == masked/padded position).
    ma_f = ma_ref[...]                                        # (bt, 1, Sa)
    mb_f = mb_ref[...]                                        # (bt, 1, Sb)
    bias_a = jnp.where(ma_f != 0.0, -1e30, 0.0)               # (bt, 1, Sa)
    bias_b = jnp.where(mb_f != 0.0, -1e30, 0.0)               # (bt, 1, Sb)

    def vd(i):
        return vec_d_ref[0, i:i + 1, :]                       # (1, D) f32

    # ---- self attention (fused QKV projection, bf16 MXU / f32 accumulate) ----
    qkv = jnp.dot(h.astype(jnp.bfloat16), sa_wqkv_ref[0],
                  preferred_element_type=jnp.float32) + sa_bqkv_ref[0]
    sa = _mha_heads(qkv, 0, qkv, D, 2 * D,
                    sa_wo_ref[0], vd(_SA_BO), bias_a,
                    bt, sa_len, sa_len, nhead, hd)
    h = _layernorm(h + sa, vd(_LN1_G), vd(_LN1_B))

    # ---- cross attention (fused KV projection) ----
    q = jnp.dot(h.astype(jnp.bfloat16), ca_wq_ref[0],
                preferred_element_type=jnp.float32) + vd(_CA_BQ)
    kv = jnp.dot(mem_bf, ca_wkv_ref[0],
                 preferred_element_type=jnp.float32) + ca_bkv_ref[0]
    ca = _mha_heads(q, 0, kv, 0, D,
                    ca_wo_ref[0], vd(_CA_BO), bias_b,
                    bt, sa_len, sb_len, nhead, hd)
    h = _layernorm(h + ca, vd(_LN2_G), vd(_LN2_B))

    # ---- feed-forward ----
    # TODO(synk): for realistic Sa/H, process the (bt*Sa, H) ReLU intermediate in
    # 256-512-row slabs to bound the live activation on v7x's 64 MiB VMEM.
    ff = jnp.maximum(
        jnp.dot(h.astype(jnp.bfloat16), ff_w1_ref[0],
                preferred_element_type=jnp.float32) + ff_b1_ref[0], 0.0)
    ff = jnp.dot(ff.astype(jnp.bfloat16), ff_w2_ref[0],
                 preferred_element_type=jnp.float32) + vd(_FF_B2)
    h = _layernorm(h + ff, vd(_LN3_G), vd(_LN3_B))

    h_scratch[...] = h.reshape(bt, sa_len, D)

    # ---- last layer: 'mean' pooling + output projection ----
    @pl.when(l == n_l - 1)
    def _finalize():
        # (embeddings * padding_mask).mean(dim=1): mask is a multiplicative weight,
        # mean divides by Sa — exactly the torch module's math.
        h3 = h.reshape(bt, sa_len, D)
        pooled = jnp.einsum('bqs,bsd->bqd', ma_f, h3,
                            preferred_element_type=jnp.float32)
        pooled = pooled.reshape(bt, D) / sa_len
        # TODO(synk): if ntoken is a real vocabulary, tile this projection over ntoken
        # instead of keeping out_w fully resident.
        y = jnp.dot(pooled.astype(jnp.bfloat16), out_w_ref[...],
                    preferred_element_type=jnp.float32) + out_b_ref[...]
        out_ref[...] = y[:, None, :].astype(out_ref.dtype)

    # TODO(synk): 'cross-attention', 'first' and 'mean-token' pooling branches and
    # stochastic dropout are not implemented (default 'mean' / eval path only).


# ---------------------------------------------------------------------------
# Wrapper: pack params (bf16 weights, scale folded into Wq), launch the
# (batch "parallel") x (layer "arbitrary") grid.
# ---------------------------------------------------------------------------
def _pack_params(p, *, nhead):
    D = p["sa_wq"].shape[-1]
    hd = D // nhead
    scale = 1.0 / math.sqrt(hd)
    bf = lambda a: a.astype(jnp.bfloat16)

    # bf16 matmul weights; 1/sqrt(hd) folded into Wq / bq.
    sa_wqkv = bf(jnp.concatenate([p["sa_wq"] * scale, p["sa_wk"], p["sa_wv"]],
                                 axis=-1))                                     # (L, D, 3D)
    ca_wkv = bf(jnp.concatenate([p["ca_wk"], p["ca_wv"]], axis=-1))            # (L, D, 2D)
    # f32 bias / LayerNorm vectors.
    sa_bqkv = jnp.concatenate([p["sa_bq"] * scale, p["sa_bk"], p["sa_bv"]],
                              axis=-1)                                         # (L, 1, 3D)
    ca_bkv = jnp.concatenate([p["ca_bk"], p["ca_bv"]], axis=-1)                # (L, 1, 2D)
    vec_d = jnp.concatenate(
        [p["sa_bo"], p["ca_bq"] * scale, p["ca_bo"], p["ff_b2"],
         p["ln1_g"], p["ln1_b"], p["ln2_g"], p["ln2_b"], p["ln3_g"], p["ln3_b"]],
        axis=1)                                                                # (L, 10, D)
    return [sa_wqkv, bf(p["sa_wo"]), bf(p["ca_wq"] * scale), ca_wkv, bf(p["ca_wo"]),
            bf(p["ff_w1"]), bf(p["ff_w2"]),
            sa_bqkv, ca_bkv, vec_d, p["ff_b1"],
            bf(p["out_w"]), p["out_b"]]


def _default_batch_tile(B):
    # Split the batch only on 2-TensorCore chips (v7x); on v5e/v6e a 2-step grid is a
    # serial loop that just shrinks matmul tiles and adds per-step overhead.
    try:
        kind = jax.devices()[0].device_kind.lower()
    except Exception:
        kind = ""
    if "v7" in kind and B >= 2 and B % 2 == 0:
        return B // 2
    return B


def _vmem_limit_bytes(weights, bt, Sa, Sb, D, H, ntoken):
    # Resident set: 2x (pipeline buffers) per-layer weights + resident operands,
    # + residual scratch + a live-activation margin.
    per_layer = sum(math.prod(w.shape[1:]) * w.dtype.itemsize for w in weights[:11])
    resident = sum(int(w.size) * w.dtype.itemsize for w in weights[11:])
    io = (bt * Sa * D + bt * Sb * D + bt * Sa + bt * Sb + bt * ntoken) * 4
    scratch = bt * Sa * D * 4
    act = 6 * bt * Sa * max(3 * D, H) * 4
    est = 2 * (per_layer + resident + io) + scratch + act + (4 << 20)
    return int(min(max(est, 32 << 20), 96 << 20))


def _cost_estimate(B, Sa, Sb, D, H, ntoken, nlayers, nhead, weights):
    per_layer = (2 * Sa * D * 3 * D + 2 * Sa * D * D          # QKV proj + SA out proj
                 + 4 * Sa * Sa * D                            # SA scores + context
                 + 2 * Sa * D * D + 2 * Sb * D * 2 * D        # CA q proj + kv proj
                 + 2 * Sa * D * D                             # CA out proj
                 + 4 * Sa * Sb * D                            # CA scores + context
                 + 2 * Sa * D * H + 2 * Sa * H * D)           # FFN
    flops = B * nlayers * per_layer + 2 * B * Sa * D + 2 * B * D * ntoken
    transcendentals = B * nlayers * nhead * (Sa * Sa + Sa * Sb)   # softmax exps
    bytes_accessed = (sum(int(w.size) * w.dtype.itemsize for w in weights)
                      + (B * Sa * D + B * Sb * D + B * Sa + B * Sb + B * ntoken) * 4)
    return pl.CostEstimate(flops=flops, transcendentals=transcendentals,
                           bytes_accessed=bytes_accessed)


def transformer_decoder_forward(x, mem, mask_a, mask_b, params, *,
                                nhead, nlayers, ntoken, batch_tile=None):
    B, Sa, D = x.shape
    Sb = mem.shape[1]
    H = params["ff_w1"].shape[-1]
    if batch_tile is None:
        batch_tile = _default_batch_tile(B)
    assert B % batch_tile == 0
    bt = batch_tile
    grid = (B // bt, nlayers)

    # Masks reshaped to (B, 1, S) so block shapes keep the last two dims full.
    ma3 = mask_a.astype(jnp.float32).reshape(B, 1, Sa)
    mb3 = mask_b.astype(jnp.float32).reshape(B, 1, Sb)
    weights = _pack_params(params, nhead=nhead)
    layer_weights = weights[:11]            # leading L dim -> streamed per layer
    out_w, out_b = weights[11], weights[12]  # resident

    def batch_spec(shape):
        return pl.BlockSpec(shape, lambda b, l, nd=len(shape): (b,) + (0,) * (nd - 1))

    def layer_spec(arr):
        shape = (1,) + tuple(arr.shape[1:])
        return pl.BlockSpec(shape, lambda b, l, nd=arr.ndim: (l,) + (0,) * (nd - 1))

    def const_spec(arr):
        return pl.BlockSpec(tuple(arr.shape), lambda b, l, nd=arr.ndim: (0,) * nd)

    in_specs = [
        batch_spec((bt, Sa, D)),        # x        (tiled over batch, resident over l)
        batch_spec((bt, Sb, D)),        # mem
        batch_spec((bt, 1, Sa)),        # mask_a
        batch_spec((bt, 1, Sb)),        # mask_b
    ] + [layer_spec(w) for w in layer_weights] + [const_spec(out_w), const_spec(out_b)]
    # NOTE: constant-index operands may still get 2 pipeline buffers; vmem_limit below
    # is sized with that 2x factor included.
    out_spec = pl.BlockSpec((bt, 1, ntoken), lambda b, l: (b, 0, 0))

    out3 = pl.pallas_call(
        functools.partial(decoder_model_kernel, nhead=nhead),
        out_shape=jax.ShapeDtypeStruct((B, 1, ntoken), jnp.float32),
        grid=grid,
        in_specs=in_specs,
        out_specs=out_spec,
        scratch_shapes=[pltpu.VMEM((bt, Sa, D), jnp.float32)],
        compiler_params=pltpu.CompilerParams(
            dimension_semantics=("parallel", "arbitrary"),
            vmem_limit_bytes=_vmem_limit_bytes(weights, bt, Sa, Sb, D, H, ntoken)),
        cost_estimate=_cost_estimate(B, Sa, Sb, D, H, ntoken, nlayers, nhead, weights),
    )(x, mem, ma3, mb3, *weights)
    return out3.reshape(B, ntoken)


# ---------------------------------------------------------------------------
# Deterministic parameter init (synthetic; shapes follow nn.TransformerDecoderLayer)
# ---------------------------------------------------------------------------
def init_params(key, *, nlayers, ninp, nhid, ntoken):
    L, D, H, T = nlayers, ninp, nhid, ntoken
    keys = iter(jax.random.split(key, 32))

    def w(shape, scale):
        return jax.random.normal(next(keys), shape, jnp.float32) * scale

    s_d = 1.0 / math.sqrt(D)
    s_h = 1.0 / math.sqrt(H)
    p = {
        "sa_wq": w((L, D, D), s_d), "sa_wk": w((L, D, D), s_d),
        "sa_wv": w((L, D, D), s_d), "sa_wo": w((L, D, D), s_d),
        "sa_bq": w((L, 1, D), 0.02), "sa_bk": w((L, 1, D), 0.02),
        "sa_bv": w((L, 1, D), 0.02), "sa_bo": w((L, 1, D), 0.02),
        "ln1_g": jnp.ones((L, 1, D), jnp.float32),
        "ln1_b": jnp.zeros((L, 1, D), jnp.float32),
        "ca_wq": w((L, D, D), s_d), "ca_wk": w((L, D, D), s_d),
        "ca_wv": w((L, D, D), s_d), "ca_wo": w((L, D, D), s_d),
        "ca_bq": w((L, 1, D), 0.02), "ca_bk": w((L, 1, D), 0.02),
        "ca_bv": w((L, 1, D), 0.02), "ca_bo": w((L, 1, D), 0.02),
        "ln2_g": jnp.ones((L, 1, D), jnp.float32),
        "ln2_b": jnp.zeros((L, 1, D), jnp.float32),
        "ff_w1": w((L, D, H), s_d), "ff_b1": w((L, 1, H), 0.02),
        "ff_w2": w((L, H, D), s_h), "ff_b2": w((L, 1, D), 0.02),
        "ln3_g": jnp.ones((L, 1, D), jnp.float32),
        "ln3_b": jnp.zeros((L, 1, D), jnp.float32),
        "out_w": w((D, T), s_d), "out_b": w((1, T), 0.02),
    }
    return p


# ---------------------------------------------------------------------------
# Pure-JAX f32 reference (unfused, per-batch loop) for verification.
# ---------------------------------------------------------------------------
def _mha_ref(q_in, kv_in, wq, wk, wv, wo, bq, bk, bv, bo, key_mask, nhead):
    D = q_in.shape[-1]
    hd = D // nhead
    q = jnp.dot(q_in, wq, preferred_element_type=jnp.float32) + bq
    k = jnp.dot(kv_in, wk, preferred_element_type=jnp.float32) + bk
    v = jnp.dot(kv_in, wv, preferred_element_type=jnp.float32) + bv
    scale = 1.0 / math.sqrt(hd)
    out = jnp.zeros((q_in.shape[0], D), jnp.float32)
    for h in range(nhead):
        sl = slice(h * hd, (h + 1) * hd)
        qh, kh, vh = q[:, sl], k[:, sl], v[:, sl]
        s = jax.lax.dot_general(qh, kh, (((1,), (1,)), ((), ())),
                                preferred_element_type=jnp.float32) * scale
        s = jnp.where(key_mask, -1e30, s)
        s = s - jnp.max(s, axis=-1, keepdims=True)
        p = jnp.exp(s)
        p = p / jnp.sum(p, axis=-1, keepdims=True)
        ctx = jnp.dot(p, vh, preferred_element_type=jnp.float32)
        out = out + jnp.dot(ctx, wo[sl, :], preferred_element_type=jnp.float32)
    return out + bo


def reference_forward(x, mem, ma, mb, p, *, nhead, nlayers):
    B, Sa, _ = x.shape
    outs = []
    for b in range(B):
        h = x[b]
        m = mem[b]
        maf = ma[b:b + 1]
        mask_a = maf != 0.0
        mask_b = mb[b:b + 1] != 0.0
        for l in range(nlayers):
            sa = _mha_ref(h, h, p["sa_wq"][l], p["sa_wk"][l], p["sa_wv"][l], p["sa_wo"][l],
                          p["sa_bq"][l], p["sa_bk"][l], p["sa_bv"][l], p["sa_bo"][l],
                          mask_a, nhead)
            h = _layernorm(h + sa, p["ln1_g"][l], p["ln1_b"][l])
            ca = _mha_ref(h, m, p["ca_wq"][l], p["ca_wk"][l], p["ca_wv"][l], p["ca_wo"][l],
                          p["ca_bq"][l], p["ca_bk"][l], p["ca_bv"][l], p["ca_bo"][l],
                          mask_b, nhead)
            h = _layernorm(h + ca, p["ln2_g"][l], p["ln2_b"][l])
            ff = jnp.maximum(jnp.dot(h, p["ff_w1"][l]) + p["ff_b1"][l], 0.0)
            ff = jnp.dot(ff, p["ff_w2"][l]) + p["ff_b2"][l]
            h = _layernorm(h + ff, p["ln3_g"][l], p["ln3_b"][l])
        pooled = jnp.dot(maf, h) / Sa
        outs.append(jnp.dot(pooled, p["out_w"]) + p["out_b"])
    return jnp.concatenate(outs, axis=0)


if __name__ == "__main__":
    # small shapes consistent with the module
    B, Sa, Sb = 2, 8, 12
    ninp, nhead, nhid, nlayers, ntoken = 32, 4, 64, 2, 16

    key = jax.random.PRNGKey(0)
    kx, km, kp = jax.random.split(key, 3)
    x = jax.random.normal(kx, (B, Sa, ninp), jnp.float32)       # sequence_a (tgt)
    mem = jax.random.normal(km, (B, Sb, ninp), jnp.float32)     # sequence_b (memory)

    # padding masks: trailing positions set to 1 (masked in attention, weighted in pooling)
    mask_a = (jnp.arange(Sa)[None, :] >= jnp.array([[6], [5]])).astype(jnp.float32)
    mask_b = (jnp.arange(Sb)[None, :] >= jnp.array([[10], [8]])).astype(jnp.float32)

    params = init_params(kp, nlayers=nlayers, ninp=ninp, nhid=nhid, ntoken=ntoken)

    out = transformer_decoder_forward(x, mem, mask_a, mask_b, params,
                                      nhead=nhead, nlayers=nlayers, ntoken=ntoken)
    out = jax.block_until_ready(out)

    ref = reference_forward(x, mem, mask_a, mask_b, params,
                            nhead=nhead, nlayers=nlayers)

    assert out.shape == (B, ntoken), out.shape
    assert bool(jnp.all(jnp.isfinite(out)))
    # bf16 MXU matmuls (f32 accumulation) + approx-reciprocal softmax => looser tolerance
    # than the pure-f32 reference.
    assert bool(jnp.allclose(out, ref, atol=8e-2, rtol=8e-2)), (out, ref)
    print("KERNEL_OK")
</pallas_src>

<mosaic_0001>
module attributes {stable_mosaic.version = 11 : i64} {
  func.func @decoder_model_kernel(%arg0: i32, %arg1: i32, %arg2: memref<2x8x32xf32, #tpu.memory_space<vmem>>, %arg3: memref<2x12x32xf32, #tpu.memory_space<vmem>>, %arg4: memref<2x1x8xf32, #tpu.memory_space<vmem>>, %arg5: memref<2x1x12xf32, #tpu.memory_space<vmem>>, %arg6: memref<1x32x96xbf16, #tpu.memory_space<vmem>>, %arg7: memref<1x32x32xbf16, #tpu.memory_space<vmem>>, %arg8: memref<1x32x32xbf16, #tpu.memory_space<vmem>>, %arg9: memref<1x32x64xbf16, #tpu.memory_space<vmem>>, %arg10: memref<1x32x32xbf16, #tpu.memory_space<vmem>>, %arg11: memref<1x32x64xbf16, #tpu.memory_space<vmem>>, %arg12: memref<1x64x32xbf16, #tpu.memory_space<vmem>>, %arg13: memref<1x1x96xf32, #tpu.memory_space<vmem>>, %arg14: memref<1x1x64xf32, #tpu.memory_space<vmem>>, %arg15: memref<1x10x32xf32, #tpu.memory_space<vmem>>, %arg16: memref<1x1x64xf32, #tpu.memory_space<vmem>>, %arg17: memref<32x16xbf16, #tpu.memory_space<vmem>>, %arg18: memref<1x16xf32, #tpu.memory_space<vmem>>, %arg19: memref<2x1x16xf32, #tpu.memory_space<vmem>>, %arg20: memref<2x8x32xf32, #tpu.memory_space<vmem>>) attributes {dimension_semantics = [#tpu.dimension_semantics<parallel>, #tpu.dimension_semantics<arbitrary>], iteration_bounds = array<i64: 1, 2>, scalar_prefetch = 0 : i64, scratch_operands = 1 : i64, tpu.core_type = #tpu.core_type<tc>, window_params = [{transform_indices = @transform_0, window_bounds = array<i64: 2, 8, 32>}, {transform_indices = @transform_1, window_bounds = array<i64: 2, 12, 32>}, {transform_indices = @transform_2, window_bounds = array<i64: 2, 1, 8>}, {transform_indices = @transform_3, window_bounds = array<i64: 2, 1, 12>}, {transform_indices = @transform_4, window_bounds = array<i64: 1, 32, 96>}, {transform_indices = @transform_5, window_bounds = array<i64: 1, 32, 32>}, {transform_indices = @transform_6, window_bounds = array<i64: 1, 32, 32>}, {transform_indices = @transform_7, window_bounds = array<i64: 1, 32, 64>}, {transform_indices = @transform_8, window_bounds = array<i64: 1, 32, 32>}, {transform_indices = @transform_9, window_bounds = array<i64: 1, 32, 64>}, {transform_indices = @transform_10, window_bounds = array<i64: 1, 64, 32>}, {transform_indices = @transform_11, window_bounds = array<i64: 1, 1, 96>}, {transform_indices = @transform_12, window_bounds = array<i64: 1, 1, 64>}, {transform_indices = @transform_13, window_bounds = array<i64: 1, 10, 32>}, {transform_indices = @transform_14, window_bounds = array<i64: 1, 1, 64>}, {pipeline_mode = #tpu.pipeline_mode<synchronous>, transform_indices = @transform_15, window_bounds = array<i64: 32, 16>}, {pipeline_mode = #tpu.pipeline_mode<synchronous>, transform_indices = @transform_16, window_bounds = array<i64: 1, 16>}, {transform_indices = @transform_17, window_bounds = array<i64: 2, 1, 16>}]} {
    %c0_i32 = arith.constant 0 : i32
    %0 = arith.cmpi eq, %arg1, %c0_i32 : i32
    %1 = arith.extui %0 : i1 to i32
    %c0_i32_0 = arith.constant 0 : i32
    %2 = arith.cmpi ne, %1, %c0_i32_0 : i32
    scf.if %2 {
      %c0_127 = arith.constant 0 : index
      %c0_128 = arith.constant 0 : index
      %c0_129 = arith.constant 0 : index
      %359 = vector.load %arg2[%c0_127, %c0_128, %c0_129] : memref<2x8x32xf32, #tpu.memory_space<vmem>>, vector<2x8x32xf32>
      %c0_130 = arith.constant 0 : index
      %c0_131 = arith.constant 0 : index
      %c0_132 = arith.constant 0 : index
      %360 = vector.load %arg20[%c0_130, %c0_131, %c0_132] : memref<2x8x32xf32, #tpu.memory_space<vmem>>, vector<2x8x32xf32>
      tpu.vector_store %arg20[%c0_130, %c0_131, %c0_132], %359 {strides = array<i32>} : memref<2x8x32xf32, #tpu.memory_space<vmem>>, vector<2x8x32xf32>,
    } else {
    }
    %c0 = arith.constant 0 : index
    %c0_1 = arith.constant 0 : index
    %c0_2 = arith.constant 0 : index
    %3 = vector.load %arg20[%c0, %c0_1, %c0_2] : memref<2x8x32xf32, #tpu.memory_space<vmem>>, vector<2x8x32xf32>
    %4 = vector.shape_cast %3 : vector<2x8x32xf32> to vector<16x32xf32>
    %c0_3 = arith.constant 0 : index
    %c0_4 = arith.constant 0 : index
    %c0_5 = arith.constant 0 : index
    %5 = vector.load %arg3[%c0_3, %c0_4, %c0_5] : memref<2x12x32xf32, #tpu.memory_space<vmem>>, vector<2x12x32xf32>
    %6 = vector.shape_cast %5 : vector<2x12x32xf32> to vector<24x32xf32>
    %7 = arith.truncf %6 : vector<24x32xf32> to vector<24x32xbf16>
    %c0_6 = arith.constant 0 : index
    %c0_7 = arith.constant 0 : index
    %c0_8 = arith.constant 0 : index
    %8 = vector.load %arg4[%c0_6, %c0_7, %c0_8] : memref<2x1x8xf32, #tpu.memory_space<vmem>>, vector<2x1x8xf32>
    %c0_9 = arith.constant 0 : index
    %c0_10 = arith.constant 0 : index
    %c0_11 = arith.constant 0 : index
    %9 = vector.load %arg5[%c0_9, %c0_10, %c0_11] : memref<2x1x12xf32, #tpu.memory_space<vmem>>, vector<2x1x12xf32>
    %cst = arith.constant 0.000000e+00 : f32
    %10 = vector.broadcast %cst : f32 to vector<2x1x8xf32>
    %11 = arith.cmpf one, %8, %10 : vector<2x1x8xf32>
    %cst_12 = arith.constant -1.000000e+30 : f32
    %cst_13 = arith.constant 0.000000e+00 : f32
    %12 = vector.broadcast %cst_12 : f32 to vector<2x1x8xf32>
    %13 = vector.broadcast %cst_13 : f32 to vector<2x1x8xf32>
    %14 = arith.select %11, %12, %13 : vector<2x1x8xi1>, vector<2x1x8xf32>
    %cst_14 = arith.constant 0.000000e+00 : f32
    %15 = vector.broadcast %cst_14 : f32 to vector<2x1x12xf32>
    %16 = arith.cmpf one, %9, %15 : vector<2x1x12xf32>
    %cst_15 = arith.constant -1.000000e+30 : f32
    %cst_16 = arith.constant 0.000000e+00 : f32
    %17 = vector.broadcast %cst_15 : f32 to vector<2x1x12xf32>
    %18 = vector.broadcast %cst_16 : f32 to vector<2x1x12xf32>
    %19 = arith.select %16, %17, %18 : vector<2x1x12xi1>, vector<2x1x12xf32>
    %20 = arith.truncf %4 : vector<16x32xf32> to vector<16x32xbf16>
    %c0_17 = arith.constant 0 : index
    %c0_18 = arith.constant 0 : index
    %c0_19 = arith.constant 0 : index
    %21 = vector.load %arg6[%c0_17, %c0_18, %c0_19] : memref<1x32x96xbf16, #tpu.memory_space<vmem>>, vector<1x32x96xbf16>
    %22 = vector.shape_cast %21 : vector<1x32x96xbf16> to vector<32x96xbf16>
    %cst_20 = arith.constant dense<0.000000e+00> : vector<16x96xf32>
    %23 = tpu.matmul %20, %22, %cst_20 {dimension_numbers = #tpu.dot_dimension_numbers<[1], [0], [0], [1], [0, 0, 1, 1], [], []>} : vector<16x32xbf16>, vector<32x96xbf16>, vector<16x96xf32> -> vector<16x96xf32>
    %c0_21 = arith.constant 0 : index
    %c0_22 = arith.constant 0 : index
    %c0_23 = arith.constant 0 : index
    %24 = vector.load %arg13[%c0_21, %c0_22, %c0_23] : memref<1x1x96xf32, #tpu.memory_space<vmem>>, vector<1x1x96xf32>
    %25 = vector.shape_cast %24 : vector<1x1x96xf32> to vector<1x96xf32>
    %26 = vector.broadcast %25 : vector<1x96xf32> to vector<16x96xf32>
    %27 = arith.addf %23, %26 : vector<16x96xf32>
    %c0_24 = arith.constant 0 : index
    %c0_25 = arith.constant 0 : index
    %c0_26 = arith.constant 0 : index
    %28 = vector.load %arg7[%c0_24, %c0_25, %c0_26] : memref<1x32x32xbf16, #tpu.memory_space<vmem>>, vector<1x32x32xbf16>
    %29 = vector.shape_cast %28 : vector<1x32x32xbf16> to vector<32x32xbf16>
    %c0_27 = arith.constant 0 : index
    %c0_28 = arith.constant 0 : index
    %c0_29 = arith.constant 0 : index
    %30 = vector.load %arg15[%c0_27, %c0_28, %c0_29] : memref<1x10x32xf32, #tpu.memory_space<vmem>>, vector<1x1x32xf32>
    %31 = vector.shape_cast %30 : vector<1x1x32xf32> to vector<1x32xf32>
    %32 = vector.extract_strided_slice %27 {offsets = [0, 0], sizes = [16, 8], strides = [1, 1]} : vector<16x96xf32> to vector<16x8xf32>
    %33 = arith.truncf %32 : vector<16x8xf32> to vector<16x8xbf16>
    %34 = vector.extract_strided_slice %27 {offsets = [0, 32], sizes = [16, 8], strides = [1, 1]} : vector<16x96xf32> to vector<16x8xf32>
    %35 = arith.truncf %34 : vector<16x8xf32> to vector<16x8xbf16>
    %36 = vector.extract_strided_slice %27 {offsets = [0, 64], sizes = [16, 8], strides = [1, 1]} : vector<16x96xf32> to vector<16x8xf32>
    %37 = arith.truncf %36 : vector<16x8xf32> to vector<16x8xbf16>
    %38 = vector.shape_cast %33 : vector<16x8xbf16> to vector<2x8x8xbf16>
    %39 = vector.shape_cast %35 : vector<16x8xbf16> to vector<2x8x8xbf16>
    %40 = vector.shape_cast %37 : vector<16x8xbf16> to vector<2x8x8xbf16>
    "tpu.trace_start"() <{level = 10 : i32, message = "bqd,bkd->bqk"}> : () -> ()
    %cst_30 = arith.constant dense<0.000000e+00> : vector<2x8x8xf32>
    %41 = tpu.matmul %38, %39, %cst_30 {dimension_numbers = #tpu.dot_dimension_numbers<[2], [2], [1], [1], [0, 0, 0, 1, 1, 1], [0], [0]>} : vector<2x8x8xbf16>, vector<2x8x8xbf16>, vector<2x8x8xf32> -> vector<2x8x8xf32>
    "tpu.trace_stop"() : () -> ()
    %42 = vector.broadcast %14 : vector<2x1x8xf32> to vector<2x8x8xf32>
    %43 = arith.addf %41, %42 : vector<2x8x8xf32>
    %cst_31 = arith.constant dense<0xFF800000> : vector<2x8xf32>
    %44 = vector.multi_reduction <maximumf>, %43, %cst_31 [2] : vector<2x8x8xf32> to vector<2x8xf32>
    %45 = vector.shape_cast %44 : vector<2x8xf32> to vector<2x8x1xf32>
    %46 = vector.broadcast %45 : vector<2x8x1xf32> to vector<2x8x8xf32>
    %47 = arith.subf %43, %46 : vector<2x8x8xf32>
    %48 = math.exp %47 : vector<2x8x8xf32>
    %cst_32 = arith.constant dense<0.000000e+00> : vector<2x8xf32>
    %49 = vector.multi_reduction <add>, %48, %cst_32 [2] : vector<2x8x8xf32> to vector<2x8xf32>
    %50 = vector.shape_cast %49 : vector<2x8xf32> to vector<2x8x1xf32>
    %51 = tpu.reciprocal %50 {approx = true} : vector<2x8x1xf32> -> vector<2x8x1xf32>
    %52 = vector.broadcast %51 : vector<2x8x1xf32> to vector<2x8x8xf32>
    %53 = arith.mulf %48, %52 : vector<2x8x8xf32>
    %54 = arith.truncf %53 : vector<2x8x8xf32> to vector<2x8x8xbf16>
    "tpu.trace_start"() <{level = 10 : i32, message = "bqk,bkd->bqd"}> : () -> ()
    %cst_33 = arith.constant dense<0.000000e+00> : vector<2x8x8xf32>
    %55 = tpu.matmul %54, %40, %cst_33 {dimension_numbers = #tpu.dot_dimension_numbers<[2], [1], [1], [2], [0, 0, 0, 1, 1, 2], [0], [0]>} : vector<2x8x8xbf16>, vector<2x8x8xbf16>, vector<2x8x8xf32> -> vector<2x8x8xf32>
    "tpu.trace_stop"() : () -> ()
    %56 = vector.shape_cast %55 : vector<2x8x8xf32> to vector<16x8xf32>
    %57 = vector.extract_strided_slice %27 {offsets = [0, 8], sizes = [16, 8], strides = [1, 1]} : vector<16x96xf32> to vector<16x8xf32>
    %58 = arith.truncf %57 : vector<16x8xf32> to vector<16x8xbf16>
    %59 = vector.extract_strided_slice %27 {offsets = [0, 40], sizes = [16, 8], strides = [1, 1]} : vector<16x96xf32> to vector<16x8xf32>
    %60 = arith.truncf %59 : vector<16x8xf32> to vector<16x8xbf16>
    %61 = vector.extract_strided_slice %27 {offsets = [0, 72], sizes = [16, 8], strides = [1, 1]} : vector<16x96xf32> to vector<16x8xf32>
    %62 = arith.truncf %61 : vector<16x8xf32> to vector<16x8xbf16>
    %63 = vector.shape_cast %58 : vector<16x8xbf16> to vector<2x8x8xbf16>
    %64 = vector.shape_cast %60 : vector<16x8xbf16> to vector<2x8x8xbf16>
    %65 = vector.shape_cast %62 : vector<16x8xbf16> to vector<2x8x8xbf16>
    "tpu.trace_start"() <{level = 10 : i32, message = "bqd,bkd->bqk"}> : () -> ()
    %cst_34 = arith.constant dense<0.000000e+00> : vector<2x8x8xf32>
    %66 = tpu.matmul %63, %64, %cst_34 {dimension_numbers = #tpu.dot_dimension_numbers<[2], [2], [1], [1], [0, 0, 0, 1, 1, 1], [0], [0]>} : vector<2x8x8xbf16>, vector<2x8x8xbf16>, vector<2x8x8xf32> -> vector<2x8x8xf32>
    "tpu.trace_stop"() : () -> ()
    %67 = vector.broadcast %14 : vector<2x1x8xf32> to vector<2x8x8xf32>
    %68 = arith.addf %66, %67 : vector<2x8x8xf32>
    %cst_35 = arith.constant dense<0xFF800000> : vector<2x8xf32>
    %69 = vector.multi_reduction <maximumf>, %68, %cst_35 [2] : vector<2x8x8xf32> to vector<2x8xf32>
    %70 = vector.shape_cast %69 : vector<2x8xf32> to vector<2x8x1xf32>
    %71 = vector.broadcast %70 : vector<2x8x1xf32> to vector<2x8x8xf32>
    %72 = arith.subf %68, %71 : vector<2x8x8xf32>
    %73 = math.exp %72 : vector<2x8x8xf32>
    %cst_36 = arith.constant dense<0.000000e+00> : vector<2x8xf32>
    %74 = vector.multi_reduction <add>, %73, %cst_36 [2] : vector<2x8x8xf32> to vector<2x8xf32>
    %75 = vector.shape_cast %74 : vector<2x8xf32> to vector<2x8x1xf32>
    %76 = tpu.reciprocal %75 {approx = true} : vector<2x8x1xf32> -> vector<2x8x1xf32>
    %77 = vector.broadcast %76 : vector<2x8x1xf32> to vector<2x8x8xf32>
    %78 = arith.mulf %73, %77 : vector<2x8x8xf32>
    %79 = arith.truncf %78 : vector<2x8x8xf32> to vector<2x8x8xbf16>
    "tpu.trace_start"() <{level = 10 : i32, message = "bqk,bkd->bqd"}> : () -> ()
    %cst_37 = arith.constant dense<0.000000e+00> : vector<2x8x8xf32>
    %80 = tpu.matmul %79, %65, %cst_37 {dimension_numbers = #tpu.dot_dimension_numbers<[2], [1], [1], [2], [0, 0, 0, 1, 1, 2], [0], [0]>} : vector<2x8x8xbf16>, vector<2x8x8xbf16>, vector<2x8x8xf32> -> vector<2x8x8xf32>
    "tpu.trace_stop"() : () -> ()
    %81 = vector.shape_cast %80 : vector<2x8x8xf32> to vector<16x8xf32>
    %82 = vector.extract_strided_slice %27 {offsets = [0, 16], sizes = [16, 8], strides = [1, 1]} : vector<16x96xf32> to vector<16x8xf32>
    %83 = arith.truncf %82 : vector<16x8xf32> to vector<16x8xbf16>
    %84 = vector.extract_strided_slice %27 {offsets = [0, 48], sizes = [16, 8], strides = [1, 1]} : vector<16x96xf32> to vector<16x8xf32>
    %85 = arith.truncf %84 : vector<16x8xf32> to vector<16x8xbf16>
    %86 = vector.extract_strided_slice %27 {offsets = [0, 80], sizes = [16, 8], strides = [1, 1]} : vector<16x96xf32> to vector<16x8xf32>
    %87 = arith.truncf %86 : vector<16x8xf32> to vector<16x8xbf16>
    %88 = vector.shape_cast %83 : vector<16x8xbf16> to vector<2x8x8xbf16>
    %89 = vector.shape_cast %85 : vector<16x8xbf16> to vector<2x8x8xbf16>
    %90 = vector.shape_cast %87 : vector<16x8xbf16> to vector<2x8x8xbf16>
    "tpu.trace_start"() <{level = 10 : i32, message = "bqd,bkd->bqk"}> : () -> ()
    %cst_38 = arith.constant dense<0.000000e+00> : vector<2x8x8xf32>
    %91 = tpu.matmul %88, %89, %cst_38 {dimension_numbers = #tpu.dot_dimension_numbers<[2], [2], [1], [1], [0, 0, 0, 1, 1, 1], [0], [0]>} : vector<2x8x8xbf16>, vector<2x8x8xbf16>, vector<2x8x8xf32> -> vector<2x8x8xf32>
    "tpu.trace_stop"() : () -> ()
    %92 = vector.broadcast %14 : vector<2x1x8xf32> to vector<2x8x8xf32>
    %93 = arith.addf %91, %92 : vector<2x8x8xf32>
    %cst_39 = arith.constant dense<0xFF800000> : vector<2x8xf32>
    %94 = vector.multi_reduction <maximumf>, %93, %cst_39 [2] : vector<2x8x8xf32> to vector<2x8xf32>
    %95 = vector.shape_cast %94 : vector<2x8xf32> to vector<2x8x1xf32>
    %96 = vector.broadcast %95 : vector<2x8x1xf32> to vector<2x8x8xf32>
    %97 = arith.subf %93, %96 : vector<2x8x8xf32>
    %98 = math.exp %97 : vector<2x8x8xf32>
    %cst_40 = arith.constant dense<0.000000e+00> : vector<2x8xf32>
    %99 = vector.multi_reduction <add>, %98, %cst_40 [2] : vector<2x8x8xf32> to vector<2x8xf32>
    %100 = vector.shape_cast %99 : vector<2x8xf32> to vector<2x8x1xf32>
    %101 = tpu.reciprocal %100 {approx = true} : vector<2x8x1xf32> -> vector<2x8x1xf32>
    %102 = vector.broadcast %101 : vector<2x8x1xf32> to vector<2x8x8xf32>
    %103 = arith.mulf %98, %102 : vector<2x8x8xf32>
    %104 = arith.truncf %103 : vector<2x8x8xf32> to vector<2x8x8xbf16>
    "tpu.trace_start"() <{level = 10 : i32, message = "bqk,bkd->bqd"}> : () -> ()
    %cst_41 = arith.constant dense<0.000000e+00> : vector<2x8x8xf32>
    %105 = tpu.matmul %104, %90, %cst_41 {dimension_numbers = #tpu.dot_dimension_numbers<[2], [1], [1], [2], [0, 0, 0, 1, 1, 2], [0], [0]>} : vector<2x8x8xbf16>, vector<2x8x8xbf16>, vector<2x8x8xf32> -> vector<2x8x8xf32>
    "tpu.trace_stop"() : () -> ()
    %106 = vector.shape_cast %105 : vector<2x8x8xf32> to vector<16x8xf32>
    %107 = vector.extract_strided_slice %27 {offsets = [0, 24], sizes = [16, 8], strides = [1, 1]} : vector<16x96xf32> to vector<16x8xf32>
    %108 = arith.truncf %107 : vector<16x8xf32> to vector<16x8xbf16>
    %109 = vector.extract_strided_slice %27 {offsets = [0, 56], sizes = [16, 8], strides = [1, 1]} : vector<16x96xf32> to vector<16x8xf32>
    %110 = arith.truncf %109 : vector<16x8xf32> to vector<16x8xbf16>
    %111 = vector.extract_strided_slice %27 {offsets = [0, 88], sizes = [16, 8], strides = [1, 1]} : vector<16x96xf32> to vector<16x8xf32>
    %112 = arith.truncf %111 : vector<16x8xf32> to vector<16x8xbf16>
    %113 = vector.shape_cast %108 : vector<16x8xbf16> to vector<2x8x8xbf16>
    %114 = vector.shape_cast %110 : vector<16x8xbf16> to vector<2x8x8xbf16>
    %115 = vector.shape_cast %112 : vector<16x8xbf16> to vector<2x8x8xbf16>
    "tpu.trace_start"() <{level = 10 : i32, message = "bqd,bkd->bqk"}> : () -> ()
    %cst_42 = arith.constant dense<0.000000e+00> : vector<2x8x8xf32>
    %116 = tpu.matmul %113, %114, %cst_42 {dimension_numbers = #tpu.dot_dimension_numbers<[2], [2], [1], [1], [0, 0, 0, 1, 1, 1], [0], [0]>} : vector<2x8x8xbf16>, vector<2x8x8xbf16>, vector<2x8x8xf32> -> vector<2x8x8xf32>
    "tpu.trace_stop"() : () -> ()
    %117 = vector.broadcast %14 : vector<2x1x8xf32> to vector<2x8x8xf32>
    %118 = arith.addf %116, %117 : vector<2x8x8xf32>
    %cst_43 = arith.constant dense<0xFF800000> : vector<2x8xf32>
    %119 = vector.multi_reduction <maximumf>, %118, %cst_43 [2] : vector<2x8x8xf32> to vector<2x8xf32>
    %120 = vector.shape_cast %119 : vector<2x8xf32> to vector<2x8x1xf32>
    %121 = vector.broadcast %120 : vector<2x8x1xf32> to vector<2x8x8xf32>
    %122 = arith.subf %118, %121 : vector<2x8x8xf32>
    %123 = math.exp %122 : vector<2x8x8xf32>
    %cst_44 = arith.constant dense<0.000000e+00> : vector<2x8xf32>
    %124 = vector.multi_reduction <add>, %123, %cst_44 [2] : vector<2x8x8xf32> to vector<2x8xf32>
    %125 = vector.shape_cast %124 : vector<2x8xf32> to vector<2x8x1xf32>
    %126 = tpu.reciprocal %125 {approx = true} : vector<2x8x1xf32> -> vector<2x8x1xf32>
    %127 = vector.broadcast %126 : vector<2x8x1xf32> to vector<2x8x8xf32>
    %128 = arith.mulf %123, %127 : vector<2x8x8xf32>
    %129 = arith.truncf %128 : vector<2x8x8xf32> to vector<2x8x8xbf16>
    "tpu.trace_start"() <{level = 10 : i32, message = "bqk,bkd->bqd"}> : () -> ()
    %cst_45 = arith.constant dense<0.000000e+00> : vector<2x8x8xf32>
    %130 = tpu.matmul %129, %115, %cst_45 {dimension_numbers = #tpu.dot_dimension_numbers<[2], [1], [1], [2], [0, 0, 0, 1, 1, 2], [0], [0]>} : vector<2x8x8xbf16>, vector<2x8x8xbf16>, vector<2x8x8xf32> -> vector<2x8x8xf32>
    "tpu.trace_stop"() : () -> ()
    %131 = vector.shape_cast %130 : vector<2x8x8xf32> to vector<16x8xf32>
    %132 = tpu.concatenate %56, %81, %106, %131 in 1 : vector<16x8xf32>, vector<16x8xf32>, vector<16x8xf32>, vector<16x8xf32> -> vector<16x32xf32>
    %133 = arith.truncf %132 : vector<16x32xf32> to vector<16x32xbf16>
    %cst_46 = arith.constant dense<0.000000e+00> : vector<16x32xf32>
    %134 = tpu.matmul %133, %29, %cst_46 {dimension_numbers = #tpu.dot_dimension_numbers<[1], [0], [0], [1], [0, 0, 1, 1], [], []>} : vector<16x32xbf16>, vector<32x32xbf16>, vector<16x32xf32> -> vector<16x32xf32>
    %135 = vector.broadcast %31 : vector<1x32xf32> to vector<16x32xf32>
    %136 = arith.addf %134, %135 : vector<16x32xf32>
    %137 = arith.addf %4, %136 : vector<16x32xf32>
    %c0_47 = arith.constant 0 : index
    %c4 = arith.constant 4 : index
    %c0_48 = arith.constant 0 : index
    %138 = vector.load %arg15[%c0_47, %c4, %c0_48] : memref<1x10x32xf32, #tpu.memory_space<vmem>>, vector<1x1x32xf32>
    %139 = vector.shape_cast %138 : vector<1x1x32xf32> to vector<1x32xf32>
    %c0_49 = arith.constant 0 : index
    %c5 = arith.constant 5 : index
    %c0_50 = arith.constant 0 : index
    %140 = vector.load %arg15[%c0_49, %c5, %c0_50] : memref<1x10x32xf32, #tpu.memory_space<vmem>>, vector<1x1x32xf32>
    %141 = vector.shape_cast %140 : vector<1x1x32xf32> to vector<1x32xf32>
    %cst_51 = arith.constant dense<0.000000e+00> : vector<16xf32>
    %142 = vector.multi_reduction <add>, %137, %cst_51 [1] : vector<16x32xf32> to vector<16xf32>
    %143 = vector.shape_cast %142 : vector<16xf32> to vector<16x1xf32>
    %cst_52 = arith.constant 3.200000e+01 : f32
    %144 = vector.broadcast %cst_52 : f32 to vector<16x1xf32>
    %145 = arith.divf %143, %144 : vector<16x1xf32>
    %146 = vector.broadcast %145 : vector<16x1xf32> to vector<16x32xf32>
    %147 = arith.subf %137, %146 : vector<16x32xf32>
    %148 = arith.mulf %147, %147 : vector<16x32xf32>
    %cst_53 = arith.constant dense<0.000000e+00> : vector<16xf32>
    %149 = vector.multi_reduction <add>, %148, %cst_53 [1] : vector<16x32xf32> to vector<16xf32>
    %150 = vector.shape_cast %149 : vector<16xf32> to vector<16x1xf32>
    %cst_54 = arith.constant 3.200000e+01 : f32
    %151 = vector.broadcast %cst_54 : f32 to vector<16x1xf32>
    %152 = arith.divf %150, %151 : vector<16x1xf32>
    %cst_55 = arith.constant 9.99999974E-6 : f32
    %153 = vector.broadcast %cst_55 : f32 to vector<16x1xf32>
    %154 = arith.addf %152, %153 : vector<16x1xf32>
    %155 = math.rsqrt %154 : vector<16x1xf32>
    %156 = vector.broadcast %155 : vector<16x1xf32> to vector<16x32xf32>
    %157 = arith.mulf %147, %156 : vector<16x32xf32>
    %158 = vector.broadcast %139 : vector<1x32xf32> to vector<16x32xf32>
    %159 = arith.mulf %157, %158 : vector<16x32xf32>
    %160 = vector.broadcast %141 : vector<1x32xf32> to vector<16x32xf32>
    %161 = arith.addf %159, %160 : vector<16x32xf32>
    %162 = arith.truncf %161 : vector<16x32xf32> to vector<16x32xbf16>
    %c0_56 = arith.constant 0 : index
    %c0_57 = arith.constant 0 : index
    %c0_58 = arith.constant 0 : index
    %163 = vector.load %arg8[%c0_56, %c0_57, %c0_58] : memref<1x32x32xbf16, #tpu.memory_space<vmem>>, vector<1x32x32xbf16>
    %164 = vector.shape_cast %163 : vector<1x32x32xbf16> to vector<32x32xbf16>
    %cst_59 = arith.constant dense<0.000000e+00> : vector<16x32xf32>
    %165 = tpu.matmul %162, %164, %cst_59 {dimension_numbers = #tpu.dot_dimension_numbers<[1], [0], [0], [1], [0, 0, 1, 1], [], []>} : vector<16x32xbf16>, vector<32x32xbf16>, vector<16x32xf32> -> vector<16x32xf32>
    %c0_60 = arith.constant 0 : index
    %c1 = arith.constant 1 : index
    %c0_61 = arith.constant 0 : index
    %166 = vector.load %arg15[%c0_60, %c1, %c0_61] : memref<1x10x32xf32, #tpu.memory_space<vmem>>, vector<1x1x32xf32>
    %167 = vector.shape_cast %166 : vector<1x1x32xf32> to vector<1x32xf32>
    %168 = vector.broadcast %167 : vector<1x32xf32> to vector<16x32xf32>
    %169 = arith.addf %165, %168 : vector<16x32xf32>
    %c0_62 = arith.constant 0 : index
    %c0_63 = arith.constant 0 : index
    %c0_64 = arith.constant 0 : index
    %170 = vector.load %arg9[%c0_62, %c0_63, %c0_64] : memref<1x32x64xbf16, #tpu.memory_space<vmem>>, vector<1x32x64xbf16>
    %171 = vector.shape_cast %170 : vector<1x32x64xbf16> to vector<32x64xbf16>
    %cst_65 = arith.constant dense<0.000000e+00> : vector<24x64xf32>
    %172 = tpu.matmul %7, %171, %cst_65 {dimension_numbers = #tpu.dot_dimension_numbers<[1], [0], [0], [1], [0, 0, 1, 1], [], []>} : vector<24x32xbf16>, vector<32x64xbf16>, vector<24x64xf32> -> vector<24x64xf32>
    %c0_66 = arith.constant 0 : index
    %c0_67 = arith.constant 0 : index
    %c0_68 = arith.constant 0 : index
    %173 = vector.load %arg14[%c0_66, %c0_67, %c0_68] : memref<1x1x64xf32, #tpu.memory_space<vmem>>, vector<1x1x64xf32>
    %174 = vector.shape_cast %173 : vector<1x1x64xf32> to vector<1x64xf32>
    %175 = vector.broadcast %174 : vector<1x64xf32> to vector<24x64xf32>
    %176 = arith.addf %172, %175 : vector<24x64xf32>
    %c0_69 = arith.constant 0 : index
    %c0_70 = arith.constant 0 : index
    %c0_71 = arith.constant 0 : index
    %177 = vector.load %arg10[%c0_69, %c0_70, %c0_71] : memref<1x32x32xbf16, #tpu.memory_space<vmem>>, vector<1x32x32xbf16>
    %178 = vector.shape_cast %177 : vector<1x32x32xbf16> to vector<32x32xbf16>
    %c0_72 = arith.constant 0 : index
    %c2 = arith.constant 2 : index
    %c0_73 = arith.constant 0 : index
    %179 = vector.load %arg15[%c0_72, %c2, %c0_73] : memref<1x10x32xf32, #tpu.memory_space<vmem>>, vector<1x1x32xf32>
    %180 = vector.shape_cast %179 : vector<1x1x32xf32> to vector<1x32xf32>
    %181 = vector.extract_strided_slice %169 {offsets = [0, 0], sizes = [16, 8], strides = [1, 1]} : vector<16x32xf32> to vector<16x8xf32>
    %182 = arith.truncf %181 : vector<16x8xf32> to vector<16x8xbf16>
    %183 = vector.extract_strided_slice %176 {offsets = [0, 0], sizes = [24, 8], strides = [1, 1]} : vector<24x64xf32> to vector<24x8xf32>
    %184 = arith.truncf %183 : vector<24x8xf32> to vector<24x8xbf16>
    %185 = vector.extract_strided_slice %176 {offsets = [0, 32], sizes = [24, 8], strides = [1, 1]} : vector<24x64xf32> to vector<24x8xf32>
    %186 = arith.truncf %185 : vector<24x8xf32> to vector<24x8xbf16>
    %187 = vector.shape_cast %182 : vector<16x8xbf16> to vector<2x8x8xbf16>
    %188 = vector.shape_cast %184 : vector<24x8xbf16> to vector<2x12x8xbf16>
    %189 = vector.shape_cast %186 : vector<24x8xbf16> to vector<2x12x8xbf16>
    "tpu.trace_start"() <{level = 10 : i32, message = "bqd,bkd->bqk"}> : () -> ()
    %cst_74 = arith.constant dense<0.000000e+00> : vector<2x8x12xf32>
    %190 = tpu.matmul %187, %188, %cst_74 {dimension_numbers = #tpu.dot_dimension_numbers<[2], [2], [1], [1], [0, 0, 0, 1, 1, 1], [0], [0]>} : vector<2x8x8xbf16>, vector<2x12x8xbf16>, vector<2x8x12xf32> -> vector<2x8x12xf32>
    "tpu.trace_stop"() : () -> ()
    %191 = vector.broadcast %19 : vector<2x1x12xf32> to vector<2x8x12xf32>
    %192 = arith.addf %190, %191 : vector<2x8x12xf32>
    %cst_75 = arith.constant dense<0xFF800000> : vector<2x8xf32>
    %193 = vector.multi_reduction <maximumf>, %192, %cst_75 [2] : vector<2x8x12xf32> to vector<2x8xf32>
    %194 = vector.shape_cast %193 : vector<2x8xf32> to vector<2x8x1xf32>
    %195 = vector.broadcast %194 : vector<2x8x1xf32> to vector<2x8x12xf32>
    %196 = arith.subf %192, %195 : vector<2x8x12xf32>
    %197 = math.exp %196 : vector<2x8x12xf32>
    %cst_76 = arith.constant dense<0.000000e+00> : vector<2x8xf32>
    %198 = vector.multi_reduction <add>, %197, %cst_76 [2] : vector<2x8x12xf32> to vector<2x8xf32>
    %199 = vector.shape_cast %198 : vector<2x8xf32> to vector<2x8x1xf32>
    %200 = tpu.reciprocal %199 {approx = true} : vector<2x8x1xf32> -> vector<2x8x1xf32>
    %201 = vector.broadcast %200 : vector<2x8x1xf32> to vector<2x8x12xf32>
    %202 = arith.mulf %197, %201 : vector<2x8x12xf32>
    %203 = arith.truncf %202 : vector<2x8x12xf32> to vector<2x8x12xbf16>
    "tpu.trace_start"() <{level = 10 : i32, message = "bqk,bkd->bqd"}> : () -> ()
    %cst_77 = arith.constant dense<0.000000e+00> : vector<2x8x8xf32>
    %204 = tpu.matmul %203, %189, %cst_77 {dimension_numbers = #tpu.dot_dimension_numbers<[2], [1], [1], [2], [0, 0, 0, 1, 1, 2], [0], [0]>} : vector<2x8x12xbf16>, vector<2x12x8xbf16>, vector<2x8x8xf32> -> vector<2x8x8xf32>
    "tpu.trace_stop"() : () -> ()
    %205 = vector.shape_cast %204 : vector<2x8x8xf32> to vector<16x8xf32>
    %206 = vector.extract_strided_slice %169 {offsets = [0, 8], sizes = [16, 8], strides = [1, 1]} : vector<16x32xf32> to vector<16x8xf32>
    %207 = arith.truncf %206 : vector<16x8xf32> to vector<16x8xbf16>
    %208 = vector.extract_strided_slice %176 {offsets = [0, 8], sizes = [24, 8], strides = [1, 1]} : vector<24x64xf32> to vector<24x8xf32>
    %209 = arith.truncf %208 : vector<24x8xf32> to vector<24x8xbf16>
    %210 = vector.extract_strided_slice %176 {offsets = [0, 40], sizes = [24, 8], strides = [1, 1]} : vector<24x64xf32> to vector<24x8xf32>
    %211 = arith.truncf %210 : vector<24x8xf32> to vector<24x8xbf16>
    %212 = vector.shape_cast %207 : vector<16x8xbf16> to vector<2x8x8xbf16>
    %213 = vector.shape_cast %209 : vector<24x8xbf16> to vector<2x12x8xbf16>
    %214 = vector.shape_cast %211 : vector<24x8xbf16> to vector<2x12x8xbf16>
    "tpu.trace_start"() <{level = 10 : i32, message = "bqd,bkd->bqk"}> : () -> ()
    %cst_78 = arith.constant dense<0.000000e+00> : vector<2x8x12xf32>
    %215 = tpu.matmul %212, %213, %cst_78 {dimension_numbers = #tpu.dot_dimension_numbers<[2], [2], [1], [1], [0, 0, 0, 1, 1, 1], [0], [0]>} : vector<2x8x8xbf16>, vector<2x12x8xbf16>, vector<2x8x12xf32> -> vector<2x8x12xf32>
    "tpu.trace_stop"() : () -> ()
    %216 = vector.broadcast %19 : vector<2x1x12xf32> to vector<2x8x12xf32>
    %217 = arith.addf %215, %216 : vector<2x8x12xf32>
    %cst_79 = arith.constant dense<0xFF800000> : vector<2x8xf32>
    %218 = vector.multi_reduction <maximumf>, %217, %cst_79 [2] : vector<2x8x12xf32> to vector<2x8xf32>
    %219 = vector.shape_cast %218 : vector<2x8xf32> to vector<2x8x1xf32>
    %220 = vector.broadcast %219 : vector<2x8x1xf32> to vector<2x8x12xf32>
    %221 = arith.subf %217, %220 : vector<2x8x12xf32>
    %222 = math.exp %221 : vector<2x8x12xf32>
    %cst_80 = arith.constant dense<0.000000e+00> : vector<2x8xf32>
    %223 = vector.multi_reduction <add>, %222, %cst_80 [2] : vector<2x8x12xf32> to vector<2x8xf32>
    %224 = vector.shape_cast %223 : vector<2x8xf32> to vector<2x8x1xf32>
    %225 = tpu.reciprocal %224 {approx = true} : vector<2x8x1xf32> -> vector<2x8x1xf32>
    %226 = vector.broadcast %225 : vector<2x8x1xf32> to vector<2x8x12xf32>
    %227 = arith.mulf %222, %226 : vector<2x8x12xf32>
    %228 = arith.truncf %227 : vector<2x8x12xf32> to vector<2x8x12xbf16>
    "tpu.trace_start"() <{level = 10 : i32, message = "bqk,bkd->bqd"}> : () -> ()
    %cst_81 = arith.constant dense<0.000000e+00> : vector<2x8x8xf32>
    %229 = tpu.matmul %228, %214, %cst_81 {dimension_numbers = #tpu.dot_dimension_numbers<[2], [1], [1], [2], [0, 0, 0, 1, 1, 2], [0], [0]>} : vector<2x8x12xbf16>, vector<2x12x8xbf16>, vector<2x8x8xf32> -> vector<2x8x8xf32>
    "tpu.trace_stop"() : () -> ()
    %230 = vector.shape_cast %229 : vector<2x8x8xf32> to vector<16x8xf32>
    %231 = vector.extract_strided_slice %169 {offsets = [0, 16], sizes = [16, 8], strides = [1, 1]} : vector<16x32xf32> to vector<16x8xf32>
    %232 = arith.truncf %231 : vector<16x8xf32> to vector<16x8xbf16>
    %233 = vector.extract_strided_slice %176 {offsets = [0, 16], sizes = [24, 8], strides = [1, 1]} : vector<24x64xf32> to vector<24x8xf32>
    %234 = arith.truncf %233 : vector<24x8xf32> to vector<24x8xbf16>
    %235 = vector.extract_strided_slice %176 {offsets = [0, 48], sizes = [24, 8], strides = [1, 1]} : vector<24x64xf32> to vector<24x8xf32>
    %236 = arith.truncf %235 : vector<24x8xf32> to vector<24x8xbf16>
    %237 = vector.shape_cast %232 : vector<16x8xbf16> to vector<2x8x8xbf16>
    %238 = vector.shape_cast %234 : vector<24x8xbf16> to vector<2x12x8xbf16>
    %239 = vector.shape_cast %236 : vector<24x8xbf16> to vector<2x12x8xbf16>
    "tpu.trace_start"() <{level = 10 : i32, message = "bqd,bkd->bqk"}> : () -> ()
    %cst_82 = arith.constant dense<0.000000e+00> : vector<2x8x12xf32>
    %240 = tpu.matmul %237, %238, %cst_82 {dimension_numbers = #tpu.dot_dimension_numbers<[2], [2], [1], [1], [0, 0, 0, 1, 1, 1], [0], [0]>} : vector<2x8x8xbf16>, vector<2x12x8xbf16>, vector<2x8x12xf32> -> vector<2x8x12xf32>
    "tpu.trace_stop"() : () -> ()
    %241 = vector.broadcast %19 : vector<2x1x12xf32> to vector<2x8x12xf32>
    %242 = arith.addf %240, %241 : vector<2x8x12xf32>
    %cst_83 = arith.constant dense<0xFF800000> : vector<2x8xf32>
    %243 = vector.multi_reduction <maximumf>, %242, %cst_83 [2] : vector<2x8x12xf32> to vector<2x8xf32>
    %244 = vector.shape_cast %243 : vector<2x8xf32> to vector<2x8x1xf32>
    %245 = vector.broadcast %244 : vector<2x8x1xf32> to vector<2x8x12xf32>
    %246 = arith.subf %242, %245 : vector<2x8x12xf32>
    %247 = math.exp %246 : vector<2x8x12xf32>
    %cst_84 = arith.constant dense<0.000000e+00> : vector<2x8xf32>
    %248 = vector.multi_reduction <add>, %247, %cst_84 [2] : vector<2x8x12xf32> to vector<2x8xf32>
    %249 = vector.shape_cast %248 : vector<2x8xf32> to vector<2x8x1xf32>
    %250 = tpu.reciprocal %249 {approx = true} : vector<2x8x1xf32> -> vector<2x8x1xf32>
    %251 = vector.broadcast %250 : vector<2x8x1xf32> to vector<2x8x12xf32>
    %252 = arith.mulf %247, %251 : vector<2x8x12xf32>
    %253 = arith.truncf %252 : vector<2x8x12xf32> to vector<2x8x12xbf16>
    "tpu.trace_start"() <{level = 10 : i32, message = "bqk,bkd->bqd"}> : () -> ()
    %cst_85 = arith.constant dense<0.000000e+00> : vector<2x8x8xf32>
    %254 = tpu.matmul %253, %239, %cst_85 {dimension_numbers = #tpu.dot_dimension_numbers<[2], [1], [1], [2], [0, 0, 0, 1, 1, 2], [0], [0]>} : vector<2x8x12xbf16>, vector<2x12x8xbf16>, vector<2x8x8xf32> -> vector<2x8x8xf32>
    "tpu.trace_stop"() : () -> ()
    %255 = vector.shape_cast %254 : vector<2x8x8xf32> to vector<16x8xf32>
    %256 = vector.extract_strided_slice %169 {offsets = [0, 24], sizes = [16, 8], strides = [1, 1]} : vector<16x32xf32> to vector<16x8xf32>
    %257 = arith.truncf %256 : vector<16x8xf32> to vector<16x8xbf16>
    %258 = vector.extract_strided_slice %176 {offsets = [0, 24], sizes = [24, 8], strides = [1, 1]} : vector<24x64xf32> to vector<24x8xf32>
    %259 = arith.truncf %258 : vector<24x8xf32> to vector<24x8xbf16>
    %260 = vector.extract_strided_slice %176 {offsets = [0, 56], sizes = [24, 8], strides = [1, 1]} : vector<24x64xf32> to vector<24x8xf32>
    %261 = arith.truncf %260 : vector<24x8xf32> to vector<24x8xbf16>
    %262 = vector.shape_cast %257 : vector<16x8xbf16> to vector<2x8x8xbf16>
    %263 = vector.shape_cast %259 : vector<24x8xbf16> to vector<2x12x8xbf16>
    %264 = vector.shape_cast %261 : vector<24x8xbf16> to vector<2x12x8xbf16>
    "tpu.trace_start"() <{level = 10 : i32, message = "bqd,bkd->bqk"}> : () -> ()
    %cst_86 = arith.constant dense<0.000000e+00> : vector<2x8x12xf32>
    %265 = tpu.matmul %262, %263, %cst_86 {dimension_numbers = #tpu.dot_dimension_numbers<[2], [2], [1], [1], [0, 0, 0, 1, 1, 1], [0], [0]>} : vector<2x8x8xbf16>, vector<2x12x8xbf16>, vector<2x8x12xf32> -> vector<2x8x12xf32>
    "tpu.trace_stop"() : () -> ()
    %266 = vector.broadcast %19 : vector<2x1x12xf32> to vector<2x8x12xf32>
    %267 = arith.addf %265, %266 : vector<2x8x12xf32>
    %cst_87 = arith.constant dense<0xFF800000> : vector<2x8xf32>
    %268 = vector.multi_reduction <maximumf>, %267, %cst_87 [2] : vector<2x8x12xf32> to vector<2x8xf32>
    %269 = vector.shape_cast %268 : vector<2x8xf32> to vector<2x8x1xf32>
    %270 = vector.broadcast %269 : vector<2x8x1xf32> to vector<2x8x12xf32>
    %271 = arith.subf %267, %270 : vector<2x8x12xf32>
    %272 = math.exp %271 : vector<2x8x12xf32>
    %cst_88 = arith.constant dense<0.000000e+00> : vector<2x8xf32>
    %273 = vector.multi_reduction <add>, %272, %cst_88 [2] : vector<2x8x12xf32> to vector<2x8xf32>
    %274 = vector.shape_cast %273 : vector<2x8xf32> to vector<2x8x1xf32>
    %275 = tpu.reciprocal %274 {approx = true} : vector<2x8x1xf32> -> vector<2x8x1xf32>
    %276 = vector.broadcast %275 : vector<2x8x1xf32> to vector<2x8x12xf32>
    %277 = arith.mulf %272, %276 : vector<2x8x12xf32>
    %278 = arith.truncf %277 : vector<2x8x12xf32> to vector<2x8x12xbf16>
    "tpu.trace_start"() <{level = 10 : i32, message = "bqk,bkd->bqd"}> : () -> ()
    %cst_89 = arith.constant dense<0.000000e+00> : vector<2x8x8xf32>
    %279 = tpu.matmul %278, %264, %cst_89 {dimension_numbers = #tpu.dot_dimension_numbers<[2], [1], [1], [2], [0, 0, 0, 1, 1, 2], [0], [0]>} : vector<2x8x12xbf16>, vector<2x12x8xbf16>, vector<2x8x8xf32> -> vector<2x8x8xf32>
    "tpu.trace_stop"() : () -> ()
    %280 = vector.shape_cast %279 : vector<2x8x8xf32> to vector<16x8xf32>
    %281 = tpu.concatenate %205, %230, %255, %280 in 1 : vector<16x8xf32>, vector<16x8xf32>, vector<16x8xf32>, vector<16x8xf32> -> vector<16x32xf32>
    %282 = arith.truncf %281 : vector<16x32xf32> to vector<16x32xbf16>
    %cst_90 = arith.constant dense<0.000000e+00> : vector<16x32xf32>
    %283 = tpu.matmul %282, %178, %cst_90 {dimension_numbers = #tpu.dot_dimension_numbers<[1], [0], [0], [1], [0, 0, 1, 1], [], []>} : vector<16x32xbf16>, vector<32x32xbf16>, vector<16x32xf32> -> vector<16x32xf32>
    %284 = vector.broadcast %180 : vector<1x32xf32> to vector<16x32xf32>
    %285 = arith.addf %283, %284 : vector<16x32xf32>
    %286 = arith.addf %161, %285 : vector<16x32xf32>
    %c0_91 = arith.constant 0 : index
    %c6 = arith.constant 6 : index
    %c0_92 = arith.constant 0 : index
    %287 = vector.load %arg15[%c0_91, %c6, %c0_92] : memref<1x10x32xf32, #tpu.memory_space<vmem>>, vector<1x1x32xf32>
    %288 = vector.shape_cast %287 : vector<1x1x32xf32> to vector<1x32xf32>
    %c0_93 = arith.constant 0 : index
    %c7 = arith.constant 7 : index
    %c0_94 = arith.constant 0 : index
    %289 = vector.load %arg15[%c0_93, %c7, %c0_94] : memref<1x10x32xf32, #tpu.memory_space<vmem>>, vector<1x1x32xf32>
    %290 = vector.shape_cast %289 : vector<1x1x32xf32> to vector<1x32xf32>
    %cst_95 = arith.constant dense<0.000000e+00> : vector<16xf32>
    %291 = vector.multi_reduction <add>, %286, %cst_95 [1] : vector<16x32xf32> to vector<16xf32>
    %292 = vector.shape_cast %291 : vector<16xf32> to vector<16x1xf32>
    %cst_96 = arith.constant 3.200000e+01 : f32
    %293 = vector.broadcast %cst_96 : f32 to vector<16x1xf32>
    %294 = arith.divf %292, %293 : vector<16x1xf32>
    %295 = vector.broadcast %294 : vector<16x1xf32> to vector<16x32xf32>
    %296 = arith.subf %286, %295 : vector<16x32xf32>
    %297 = arith.mulf %296, %296 : vector<16x32xf32>
    %cst_97 = arith.constant dense<0.000000e+00> : vector<16xf32>
    %298 = vector.multi_reduction <add>, %297, %cst_97 [1] : vector<16x32xf32> to vector<16xf32>
    %299 = vector.shape_cast %298 : vector<16xf32> to vector<16x1xf32>
    %cst_98 = arith.constant 3.200000e+01 : f32
    %300 = vector.broadcast %cst_98 : f32 to vector<16x1xf32>
    %301 = arith.divf %299, %300 : vector<16x1xf32>
    %cst_99 = arith.constant 9.99999974E-6 : f32
    %302 = vector.broadcast %cst_99 : f32 to vector<16x1xf32>
    %303 = arith.addf %301, %302 : vector<16x1xf32>
    %304 = math.rsqrt %303 : vector<16x1xf32>
    %305 = vector.broadcast %304 : vector<16x1xf32> to vector<16x32xf32>
    %306 = arith.mulf %296, %305 : vector<16x32xf32>
    %307 = vector.broadcast %288 : vector<1x32xf32> to vector<16x32xf32>
    %308 = arith.mulf %306, %307 : vector<16x32xf32>
    %309 = vector.broadcast %290 : vector<1x32xf32> to vector<16x32xf32>
    %310 = arith.addf %308, %309 : vector<16x32xf32>
    %311 = arith.truncf %310 : vector<16x32xf32> to vector<16x32xbf16>
    %c0_100 = arith.constant 0 : index
    %c0_101 = arith.constant 0 : index
    %c0_102 = arith.constant 0 : index
    %312 = vector.load %arg11[%c0_100, %c0_101, %c0_102] : memref<1x32x64xbf16, #tpu.memory_space<vmem>>, vector<1x32x64xbf16>
    %313 = vector.shape_cast %312 : vector<1x32x64xbf16> to vector<32x64xbf16>
    %cst_103 = arith.constant dense<0.000000e+00> : vector<16x64xf32>
    %314 = tpu.matmul %311, %313, %cst_103 {dimension_numbers = #tpu.dot_dimension_numbers<[1], [0], [0], [1], [0, 0, 1, 1], [], []>} : vector<16x32xbf16>, vector<32x64xbf16>, vector<16x64xf32> -> vector<16x64xf32>
    %c0_104 = arith.constant 0 : index
    %c0_105 = arith.constant 0 : index
    %c0_106 = arith.constant 0 : index
    %315 = vector.load %arg16[%c0_104, %c0_105, %c0_106] : memref<1x1x64xf32, #tpu.memory_space<vmem>>, vector<1x1x64xf32>
    %316 = vector.shape_cast %315 : vector<1x1x64xf32> to vector<1x64xf32>
    %317 = vector.broadcast %316 : vector<1x64xf32> to vector<16x64xf32>
    %318 = arith.addf %314, %317 : vector<16x64xf32>
    %cst_107 = arith.constant 0.000000e+00 : f32
    %319 = vector.broadcast %cst_107 : f32 to vector<16x64xf32>
    %320 = arith.maximumf %318, %319 : vector<16x64xf32>
    %321 = arith.truncf %320 : vector<16x64xf32> to vector<16x64xbf16>
    %c0_108 = arith.constant 0 : index
    %c0_109 = arith.constant 0 : index
    %c0_110 = arith.constant 0 : index
    %322 = vector.load %arg12[%c0_108, %c0_109, %c0_110] : memref<1x64x32xbf16, #tpu.memory_space<vmem>>, vector<1x64x32xbf16>
    %323 = vector.shape_cast %322 : vector<1x64x32xbf16> to vector<64x32xbf16>
    %cst_111 = arith.constant dense<0.000000e+00> : vector<16x32xf32>
    %324 = tpu.matmul %321, %323, %cst_111 {dimension_numbers = #tpu.dot_dimension_numbers<[1], [0], [0], [1], [0, 0, 1, 1], [], []>} : vector<16x64xbf16>, vector<64x32xbf16>, vector<16x32xf32> -> vector<16x32xf32>
    %c0_112 = arith.constant 0 : index
    %c3 = arith.constant 3 : index
    %c0_113 = arith.constant 0 : index
    %325 = vector.load %arg15[%c0_112, %c3, %c0_113] : memref<1x10x32xf32, #tpu.memory_space<vmem>>, vector<1x1x32xf32>
    %326 = vector.shape_cast %325 : vector<1x1x32xf32> to vector<1x32xf32>
    %327 = vector.broadcast %326 : vector<1x32xf32> to vector<16x32xf32>
    %328 = arith.addf %324, %327 : vector<16x32xf32>
    %329 = arith.addf %310, %328 : vector<16x32xf32>
    %c0_114 = arith.constant 0 : index
    %c8 = arith.constant 8 : index
    %c0_115 = arith.constant 0 : index
    %330 = vector.load %arg15[%c0_114, %c8, %c0_115] : memref<1x10x32xf32, #tpu.memory_space<vmem>>, vector<1x1x32xf32>
    %331 = vector.shape_cast %330 : vector<1x1x32xf32> to vector<1x32xf32>
    %c0_116 = arith.constant 0 : index
    %c9 = arith.constant 9 : index
    %c0_117 = arith.constant 0 : index
    %332 = vector.load %arg15[%c0_116, %c9, %c0_117] : memref<1x10x32xf32, #tpu.memory_space<vmem>>, vector<1x1x32xf32>
    %333 = vector.shape_cast %332 : vector<1x1x32xf32> to vector<1x32xf32>
    %cst_118 = arith.constant dense<0.000000e+00> : vector<16xf32>
    %334 = vector.multi_reduction <add>, %329, %cst_118 [1] : vector<16x32xf32> to vector<16xf32>
    %335 = vector.shape_cast %334 : vector<16xf32> to vector<16x1xf32>
    %cst_119 = arith.constant 3.200000e+01 : f32
    %336 = vector.broadcast %cst_119 : f32 to vector<16x1xf32>
    %337 = arith.divf %335, %336 : vector<16x1xf32>
    %338 = vector.broadcast %337 : vector<16x1xf32> to vector<16x32xf32>
    %339 = arith.subf %329, %338 : vector<16x32xf32>
    %340 = arith.mulf %339, %339 : vector<16x32xf32>
    %cst_120 = arith.constant dense<0.000000e+00> : vector<16xf32>
    %341 = vector.multi_reduction <add>, %340, %cst_120 [1] : vector<16x32xf32> to vector<16xf32>
    %342 = vector.shape_cast %341 : vector<16xf32> to vector<16x1xf32>
    %cst_121 = arith.constant 3.200000e+01 : f32
    %343 = vector.broadcast %cst_121 : f32 to vector<16x1xf32>
    %344 = arith.divf %342, %343 : vector<16x1xf32>
    %cst_122 = arith.constant 9.99999974E-6 : f32
    %345 = vector.broadcast %cst_122 : f32 to vector<16x1xf32>
    %346 = arith.addf %344, %345 : vector<16x1xf32>
    %347 = math.rsqrt %346 : vector<16x1xf32>
    %348 = vector.broadcast %347 : vector<16x1xf32> to vector<16x32xf32>
    %349 = arith.mulf %339, %348 : vector<16x32xf32>
    %350 = vector.broadcast %331 : vector<1x32xf32> to vector<16x32xf32>
    %351 = arith.mulf %349, %350 : vector<16x32xf32>
    %352 = vector.broadcast %333 : vector<1x32xf32> to vector<16x32xf32>
    %353 = arith.addf %351, %352 : vector<16x32xf32>
    %354 = vector.shape_cast %353 : vector<16x32xf32> to vector<2x8x32xf32>
    %c0_123 = arith.constant 0 : index
    %c0_124 = arith.constant 0 : index
    %c0_125 = arith.constant 0 : index
    %355 = vector.load %arg20[%c0_123, %c0_124, %c0_125] : memref<2x8x32xf32, #tpu.memory_space<vmem>>, vector<2x8x32xf32>
    tpu.vector_store %arg20[%c0_123, %c0_124, %c0_125], %354 {strides = array<i32>} : memref<2x8x32xf32, #tpu.memory_space<vmem>>, vector<2x8x32xf32>,
    %c1_i32 = arith.constant 1 : i32
    %356 = arith.cmpi eq, %arg1, %c1_i32 : i32
    %357 = arith.extui %356 : i1 to i32
    %c0_i32_126 = arith.constant 0 : i32
    %358 = arith.cmpi ne, %357, %c0_i32_126 : i32
    scf.if %358 {
      %359 = vector.shape_cast %353 : vector<16x32xf32> to vector<2x8x32xf32>
      "tpu.trace_start"() <{level = 10 : i32, message = "bqs,bsd->bqd"}> : () -> ()
      %cst_127 = arith.constant dense<0.000000e+00> : vector<2x1x32xf32>
      %360 = tpu.matmul %8, %359, %cst_127 {dimension_numbers = #tpu.dot_dimension_numbers<[2], [1], [1], [2], [0, 0, 0, 1, 1, 2], [0], [0]>} : vector<2x1x8xf32>, vector<2x8x32xf32>, vector<2x1x32xf32> -> vector<2x1x32xf32>
      "tpu.trace_stop"() : () -> ()
      %361 = vector.shape_cast %360 : vector<2x1x32xf32> to vector<2x32xf32>
      %cst_128 = arith.constant 8.000000e+00 : f32
      %362 = vector.broadcast %cst_128 : f32 to vector<2x32xf32>
      %363 = arith.divf %361, %362 : vector<2x32xf32>
      %364 = arith.truncf %363 : vector<2x32xf32> to vector<2x32xbf16>
      %c0_129 = arith.constant 0 : index
      %c0_130 = arith.constant 0 : index
      %365 = vector.load %arg17[%c0_129, %c0_130] : memref<32x16xbf16, #tpu.memory_space<vmem>>, vector<32x16xbf16>
      %cst_131 = arith.constant dense<0.000000e+00> : vector<2x16xf32>
      %366 = tpu.matmul %364, %365, %cst_131 {dimension_numbers = #tpu.dot_dimension_numbers<[1], [0], [0], [1], [0, 0, 1, 1], [], []>} : vector<2x32xbf16>, vector<32x16xbf16>, vector<2x16xf32> -> vector<2x16xf32>
      %c0_132 = arith.constant 0 : index
      %c0_133 = arith.constant 0 : index
      %367 = vector.load %arg18[%c0_132, %c0_133] : memref<1x16xf32, #tpu.memory_space<vmem>>, vector<1x16xf32>
      %368 = vector.broadcast %367 : vector<1x16xf32> to vector<2x16xf32>
      %369 = arith.addf %366, %368 : vector<2x16xf32>
      %370 = vector.shape_cast %369 : vector<2x16xf32> to vector<2x1x16xf32>
      %c0_134 = arith.constant 0 : index
      %c0_135 = arith.constant 0 : index
      %c0_136 = arith.constant 0 : index
      %371 = vector.load %arg19[%c0_134, %c0_135, %c0_136] : memref<2x1x16xf32, #tpu.memory_space<vmem>>, vector<2x1x16xf32>
      tpu.vector_store %arg19[%c0_134, %c0_135, %c0_136], %370 {strides = array<i32>} : memref<2x1x16xf32, #tpu.memory_space<vmem>>, vector<2x1x16xf32>,
    } else {
    }
    return
  }
  func.func @transform_0(%arg0: i32, %arg1: i32) -> (i32, i32, i32) {
    %c0_i32 = arith.constant 0 : i32
    %c0_i32_0 = arith.constant 0 : i32
    %c0_i32_1 = arith.constant 0 : i32
    return %arg0, %c0_i32, %c0_i32_0 : i32, i32, i32
  }
  func.func @transform_1(%arg0: i32, %arg1: i32) -> (i32, i32, i32) {
    %c0_i32 = arith.constant 0 : i32
    %c0_i32_0 = arith.constant 0 : i32
    %c0_i32_1 = arith.constant 0 : i32
    return %arg0, %c0_i32, %c0_i32_0 : i32, i32, i32
  }
  func.func @transform_2(%arg0: i32, %arg1: i32) -> (i32, i32, i32) {
    %c0_i32 = arith.constant 0 : i32
    %c0_i32_0 = arith.constant 0 : i32
    %c0_i32_1 = arith.constant 0 : i32
    return %arg0, %c0_i32, %c0_i32_0 : i32, i32, i32
  }
  func.func @transform_3(%arg0: i32, %arg1: i32) -> (i32, i32, i32) {
    %c0_i32 = arith.constant 0 : i32
    %c0_i32_0 = arith.constant 0 : i32
    %c0_i32_1 = arith.constant 0 : i32
    return %arg0, %c0_i32, %c0_i32_0 : i32, i32, i32
  }
  func.func @transform_4(%arg0: i32, %arg1: i32) -> (i32, i32, i32) {
    %c0_i32 = arith.constant 0 : i32
    %c0_i32_0 = arith.constant 0 : i32
    %c0_i32_1 = arith.constant 0 : i32
    return %arg1, %c0_i32, %c0_i32_0 : i32, i32, i32
  }
  func.func @transform_5(%arg0: i32, %arg1: i32) -> (i32, i32, i32) {
    %c0_i32 = arith.constant 0 : i32
    %c0_i32_0 = arith.constant 0 : i32
    %c0_i32_1 = arith.constant 0 : i32
    return %arg1, %c0_i32, %c0_i32_0 : i32, i32, i32
  }
  func.func @transform_6(%arg0: i32, %arg1: i32) -> (i32, i32, i32) {
    %c0_i32 = arith.constant 0 : i32
    %c0_i32_0 = arith.constant 0 : i32
    %c0_i32_1 = arith.constant 0 : i32
    return %arg1, %c0_i32, %c0_i32_0 : i32, i32, i32
  }
  func.func @transform_7(%arg0: i32, %arg1: i32) -> (i32, i32, i32) {
    %c0_i32 = arith.constant 0 : i32
    %c0_i32_0 = arith.constant 0 : i32
    %c0_i32_1 = arith.constant 0 : i32
    return %arg1, %c0_i32, %c0_i32_0 : i32, i32, i32
  }
  func.func @transform_8(%arg0: i32, %arg1: i32) -> (i32, i32, i32) {
    %c0_i32 = arith.constant 0 : i32
    %c0_i32_0 = arith.constant 0 : i32
    %c0_i32_1 = arith.constant 0 : i32
    return %arg1, %c0_i32, %c0_i32_0 : i32, i32, i32
  }
  func.func @transform_9(%arg0: i32, %arg1: i32) -> (i32, i32, i32) {
    %c0_i32 = arith.constant 0 : i32
    %c0_i32_0 = arith.constant 0 : i32
    %c0_i32_1 = arith.constant 0 : i32
    return %arg1, %c0_i32, %c0_i32_0 : i32, i32, i32
  }
  func.func @transform_10(%arg0: i32, %arg1: i32) -> (i32, i32, i32) {
    %c0_i32 = arith.constant 0 : i32
    %c0_i32_0 = arith.constant 0 : i32
    %c0_i32_1 = arith.constant 0 : i32
    return %arg1, %c0_i32, %c0_i32_0 : i32, i32, i32
  }
  func.func @transform_11(%arg0: i32, %arg1: i32) -> (i32, i32, i32) {
    %c0_i32 = arith.constant 0 : i32
    %c0_i32_0 = arith.constant 0 : i32
    %c0_i32_1 = arith.constant 0 : i32
    return %arg1, %c0_i32, %c0_i32_0 : i32, i32, i32
  }
  func.func @transform_12(%arg0: i32, %arg1: i32) -> (i32, i32, i32) {
    %c0_i32 = arith.constant 0 : i32
    %c0_i32_0 = arith.constant 0 : i32
    %c0_i32_1 = arith.constant 0 : i32
    return %arg1, %c0_i32, %c0_i32_0 : i32, i32, i32
  }
  func.func @transform_13(%arg0: i32, %arg1: i32) -> (i32, i32, i32) {
    %c0_i32 = arith.constant 0 : i32
    %c0_i32_0 = arith.constant 0 : i32
    %c0_i32_1 = arith.constant 0 : i32
    return %arg1, %c0_i32, %c0_i32_0 : i32, i32, i32
  }
  func.func @transform_14(%arg0: i32, %arg1: i32) -> (i32, i32, i32) {
    %c0_i32 = arith.constant 0 : i32
    %c0_i32_0 = arith.constant 0 : i32
    %c0_i32_1 = arith.constant 0 : i32
    return %arg1, %c0_i32, %c0_i32_0 : i32, i32, i32
  }
  func.func @transform_15(%arg0: i32, %arg1: i32) -> (i32, i32) {
    %c0_i32 = arith.constant 0 : i32
    %c0_i32_0 = arith.constant 0 : i32
    %c0_i32_1 = arith.constant 0 : i32
    return %c0_i32, %c0_i32_0 : i32, i32
  }
  func.func @transform_16(%arg0: i32, %arg1: i32) -> (i32, i32) {
    %c0_i32 = arith.constant 0 : i32
    %c0_i32_0 = arith.constant 0 : i32
    %c0_i32_1 = arith.constant 0 : i32
    return %c0_i32, %c0_i32_0 : i32, i32
  }
  func.func @transform_17(%arg0: i32, %arg1: i32) -> (i32, i32, i32) {
    %c0_i32 = arith.constant 0 : i32
    %c0_i32_0 = arith.constant 0 : i32
    %c0_i32_1 = arith.constant 0 : i32
    return %arg0, %c0_i32, %c0_i32_0 : i32, i32, i32
  }
}

</mosaic_0001>

<llo_original>
// kernel: tpu_custom_call.1
$region0: #{tpu_custom_call.1}
  #allocation0 [shape = 'u32[]', space=smem, size = 0x4, offset = 0x4, fixed_abs, tag = 'smem constant byte address 0x4 - core index']
  #allocation1 [shape = 'u32[144,128]{1,0:T(1,128)}', space=vmem, size = 0x12000, scoped, tag = 'internal scratch']
  #allocation2 [shape = 'f32[2,8,32]{2,1,0:T(8,128)}', space=vmem, size = 0x2000, scoped, tag = 'scratch operand']
  %s0 = inlined_call_operand.hbm [shape: f32[2,8,32], index: 0, kind: input, shape index: {}]
  %s1 = inlined_call_operand.vmem [shape: f32[2,12,32], index: 1, kind: input, shape index: {}]
  %s2 = inlined_call_operand.vmem [shape: f32[2,1,8], index: 2, kind: input, shape index: {}]
  %s3 = inlined_call_operand.hbm [shape: f32[2,1,12], index: 3, kind: input, shape index: {}]
  %s4 = inlined_call_operand.vmem [shape: bf16[2,32,96], index: 4, kind: input, shape index: {}]
  %s5 = inlined_call_operand.vmem [shape: bf16[2,32,32], index: 5, kind: input, shape index: {}]
  %s6 = inlined_call_operand.vmem [shape: bf16[2,32,32], index: 6, kind: input, shape index: {}]
  %s7 = inlined_call_operand.vmem [shape: bf16[2,32,64], index: 7, kind: input, shape index: {}]
  %s8 = inlined_call_operand.vmem [shape: bf16[2,32,32], index: 8, kind: input, shape index: {}]
  %s9 = inlined_call_operand.vmem [shape: bf16[2,32,64], index: 9, kind: input, shape index: {}]
  %s10 = inlined_call_operand.vmem [shape: bf16[2,64,32], index: 10, kind: input, shape index: {}]
  %s11 = inlined_call_operand.vmem [shape: f32[2,1,96], index: 11, kind: input, shape index: {}]
  %s12 = inlined_call_operand.vmem [shape: f32[2,1,64], index: 12, kind: input, shape index: {}]
  %s13 = inlined_call_operand.vmem [shape: f32[2,10,32], index: 13, kind: input, shape index: {}]
  %s14 = inlined_call_operand.vmem [shape: f32[2,1,64], index: 14, kind: input, shape index: {}]
  %s15 = inlined_call_operand.vmem [shape: bf16[32,16], index: 15, kind: input, shape index: {}]
  %s16 = inlined_call_operand.vmem [shape: f32[1,16], index: 16, kind: input, shape index: {}]
  %s17 = inlined_call_operand.hbm [shape: f32[2,1,16], index: 17, kind: output, shape index: {}]
  %s18 = sld [smem:[#allocation0]]
  $region117: #{tpu_custom_call.1} parent=0
    _
  %s20 = ssub.s32 1, %s18
  %s21 = scalar_select 0, %s20, %s18
  $region1: #{tpu_custom_call.1} parent=0
    #allocation3 [shape = 'u8[8192]{0}', space=vmem, size = 0x2000, scoped, tag = 'input window, operand 0, single buffered']
    #allocation4 [shape = 's32[2]{0}', space=sflag, size = 0x8, scoped, tag = 'scoped memory for tpu_custom_call.1']
    #allocation5 [shape = 's32[2]{0}', space=sflag, size = 0x8, scoped, tag = 'scoped memory for tpu_custom_call.1']
    #allocation6 [shape = 'u8[1024]{0}', space=vmem, size = 0x400, scoped, tag = 'input window, operand 3, single buffered']
    #allocation7 [shape = 's32[1]{0}', space=sflag, size = 0x4, scoped, tag = 'scoped memory for tpu_custom_call.1']
    #allocation8 [shape = 'u8[1024]{0}', space=vmem, size = 0x400, scoped, tag = 'output window, operand 0, single buffered']
    %22 = vsyncpa [#allocation4], 0
    %23 = vsyncpa [#allocation7], 0
    %24 = vsyncpa [#allocation5], 0
    loop: start=0, step=1, limit=4
    $region2: #{tpu_custom_call.1} parent=1 // loop_pre_header
      _
    $region3: #{tpu_custom_call.1} parent=1 // loop_header
      %s26 = sphi 0, %s30
      %p27 = scmp.ge.s32.totalorder %s26, 4
      %s33 = sphi 0, %s45
      %s34 = sphi 0, %s41
      %s35 = sphi 0, %s33
      %s36 = sphi 0, %s34
      %s37 = sphi 0, %s35
      %s38 = sphi 0, %s36
      %s48 = sphi 0, %s50
      %s51 = sphi 0, %s48
      %s52 = sphi 0, %s51
      %s68 = sphi 0, %s52
      %s74 = sphi 0, %s76
      %s77 = sphi 0, %s74
      %s78 = sphi 0, %s77
      %s94 = sphi 0, %s78
      %s100 = sphi 0, %s102
      %s103 = sphi 0, %s100
      %s104 = sphi 0, %s103
      %s120 = sphi 0, %s104
      %s126 = sphi 0, %s128
      %s129 = sphi 0, %s126
      %s130 = sphi 0, %s129
      %s146 = sphi 0, %s130
      %s152 = sphi 0, %s154
      %s155 = sphi 0, %s152
      %s156 = sphi 0, %s155
      %s172 = sphi 0, %s156
      %s178 = sphi 0, %s180
      %s181 = sphi 0, %s178
      %s182 = sphi 0, %s181
      %s198 = sphi 0, %s182
      %s204 = sphi 0, %s206
      %s207 = sphi 0, %s204
      %s208 = sphi 0, %s207
      %s224 = sphi 0, %s208
      %s230 = sphi 0, %s232
      %s233 = sphi 0, %s230
      %s234 = sphi 0, %s233
      %s250 = sphi 0, %s234
      %s256 = sphi 0, %s258
      %s259 = sphi 0, %s256
      %s260 = sphi 0, %s259
      %s276 = sphi 0, %s260
      %s282 = sphi 0, %s284
      %s285 = sphi 0, %s282
      %s286 = sphi 0, %s285
      %s302 = sphi 0, %s286
      %s308 = sphi 0, %s310
      %s311 = sphi 0, %s308
      %s312 = sphi 0, %s311
      %s328 = sphi 0, %s312
      %s334 = sphi 0, %s336
      %s337 = sphi 0, %s334
      %s338 = sphi 0, %s337
      %s354 = sphi 0, %s338
      %s360 = sphi 0, %s362
      %s363 = sphi 0, %s360
      %s364 = sphi 0, %s363
      %s380 = sphi 0, %s364
      %s386 = sphi 0, %s388
      %s389 = sphi 0, %s386
      %s390 = sphi 0, %s389
      %s406 = sphi 0, %s390
      %s412 = sphi 0, %s414
      %s415 = sphi 0, %s412
      %s416 = sphi 0, %s415
      %s432 = sphi 0, %s416
      %s436 = sphi 0, %s436
      %s438 = sphi 0, %s436
      %s439 = sphi 0, %s438
      %s453 = sphi 0, %s439
      %s457 = sphi 0, %s457
      %s459 = sphi 0, %s457
      %s460 = sphi 0, %s459
      %s474 = sphi 0, %s460
      %s480 = sphi 0, %s482
      %s483 = sphi 0, %s480
      %s484 = sphi 0, %s483
      %s500 = sphi 0, %s484
    $region4: #{tpu_custom_call.1} parent=1 // loop_header_branch
      %29 = sbr.rel (%p27) target = $region8
    $region5: #{tpu_custom_call.1} parent=1 // loop_body
      %s31 = ssub.s32 %s26, 1
      %s32 = ssub.s32 %s26, 2
      %s39 = sadd.s32 1, %s34
      %p40 = scmp.ge.s32.totalorder %s39, 2
      %s41 = scalar_select %p40, 0, %s39
      %s42 = sadd.s32 1, %s33
      %s43 = scalar_select %p40, %s42, %s33
      %p44 = scmp.ge.s32.totalorder %s43, 1
      %s45 = scalar_select %p44, 0, %s43
      %s46 = ssub.s32 %s33, %s45
      %p47 = scmp.eq.s32.totalorder %s46, 0
      %s49 = sadd.s32 %s48, 1
      %s50 = scalar_select %p47, %s48, %s49
      %p53 = pneg %p47
      %p54 = scmp.eq.s32.totalorder %s26, 1
      %p55 = por %p53, %p54
      %p56 = scmp.ne.s32.totalorder %s48, %s51
      %p57 = scmp.eq.s32.totalorder %s26, 0
      %p58 = por %p56, %p57
      %p59 = scmp.ne.s32.totalorder %s48, %s51
      %p60 = scmp.eq.s32.totalorder %s31, 1
      %p61 = por %p59, %p60
      %p62 = scmp.ne.s32.totalorder %s51, %s52
      %p63 = scmp.eq.s32.totalorder %s31, 0
      %p64 = por %p62, %p63
      %p65 = scmp.ne.s32.totalorder %s51, %s52
      %p66 = scmp.eq.s32.totalorder %s32, 1
      %p67 = por %p65, %p66
      %p69 = scmp.ne.s32.totalorder %s52, %s68
      %p70 = scmp.eq.s32.totalorder %s32, 0
      %p71 = por %p69, %p70
      %s72 = ssub.s32 %s33, %s45
      %p73 = scmp.eq.s32.totalorder %s72, 0
      %s75 = sadd.s32 %s74, 1
      %s76 = scalar_select %p73, %s74, %s75
      %p79 = pneg %p73
      %p80 = scmp.eq.s32.totalorder %s26, 1
      %p81 = por %p79, %p80
      %p82 = scmp.ne.s32.totalorder %s74, %s77
      %p83 = scmp.eq.s32.totalorder %s26, 0
      %p84 = por %p82, %p83
      %p85 = scmp.ne.s32.totalorder %s74, %s77
      %p86 = scmp.eq.s32.totalorder %s31, 1
      %p87 = por %p85, %p86
      %p88 = scmp.ne.s32.totalorder %s77, %s78
      %p89 = scmp.eq.s32.totalorder %s31, 0
      %p90 = por %p88, %p89
      %p91 = scmp.ne.s32.totalorder %s77, %s78
      %p92 = scmp.eq.s32.totalorder %s32, 1
      %p93 = por %p91, %p92
      %p95 = scmp.ne.s32.totalorder %s78, %s94
      %p96 = scmp.eq.s32.totalorder %s32, 0
      %p97 = por %p95, %p96
      %s98 = ssub.s32 %s33, %s45
      %p99 = scmp.eq.s32.totalorder %s98, 0
      %s101 = sadd.s32 %s100, 1
      %s102 = scalar_select %p99, %s100, %s101
      %p105 = pneg %p99
      %p106 = scmp.eq.s32.totalorder %s26, 1
      %p107 = por %p105, %p106
      %p108 = scmp.ne.s32.totalorder %s100, %s103
      %p109 = scmp.eq.s32.totalorder %s26, 0
      %p110 = por %p108, %p109
      %p111 = scmp.ne.s32.totalorder %s100, %s103
      %p112 = scmp.eq.s32.totalorder %s31, 1
      %p113 = por %p111, %p112
      %p114 = scmp.ne.s32.totalorder %s103, %s104
      %p115 = scmp.eq.s32.totalorder %s31, 0
      %p116 = por %p114, %p115
      %p117 = scmp.ne.s32.totalorder %s103, %s104
      %p118 = scmp.eq.s32.totalorder %s32, 1
      %p119 = por %p117, %p118
      %p121 = scmp.ne.s32.totalorder %s104, %s120
      %p122 = scmp.eq.s32.totalorder %s32, 0
      %p123 = por %p121, %p122
      %s124 = ssub.s32 %s33, %s45
      %p125 = scmp.eq.s32.totalorder %s124, 0
      %s127 = sadd.s32 %s126, 1
      %s128 = scalar_select %p125, %s126, %s127
      %p131 = pneg %p125
      %p132 = scmp.eq.s32.totalorder %s26, 1
      %p133 = por %p131, %p132
      %p134 = scmp.ne.s32.totalorder %s126, %s129
      %p135 = scmp.eq.s32.totalorder %s26, 0
      %p136 = por %p134, %p135
      %p137 = scmp.ne.s32.totalorder %s126, %s129
      %p138 = scmp.eq.s32.totalorder %s31, 1
      %p139 = por %p137, %p138
      %p140 = scmp.ne.s32.totalorder %s129, %s130
      %p141 = scmp.eq.s32.totalorder %s31, 0
      %p142 = por %p140, %p141
      %p143 = scmp.ne.s32.totalorder %s129, %s130
      %p144 = scmp.eq.s32.totalorder %s32, 1
      %p145 = por %p143, %p144
      %p147 = scmp.ne.s32.totalorder %s130, %s146
      %p148 = scmp.eq.s32.totalorder %s32, 0
      %p149 = por %p147, %p148
      %s150 = ssub.s32 %s34, %s41
      %p151 = scmp.eq.s32.totalorder %s150, 0
      %s153 = sadd.s32 %s152, 1
      %s154 = scalar_select %p151, %s152, %s153
      %p157 = pneg %p151
      %p158 = scmp.eq.s32.totalorder %s26, 1
      %p159 = por %p157, %p158
      %p160 = scmp.ne.s32.totalorder %s152, %s155
      %p161 = scmp.eq.s32.totalorder %s26, 0
      %p162 = por %p160, %p161
      %p163 = scmp.ne.s32.totalorder %s152, %s155
      %p164 = scmp.eq.s32.totalorder %s31, 1
      %p165 = por %p163, %p164
      %p166 = scmp.ne.s32.totalorder %s155, %s156
      %p167 = scmp.eq.s32.totalorder %s31, 0
      %p168 = por %p166, %p167
      %p169 = scmp.ne.s32.totalorder %s155, %s156
      %p170 = scmp.eq.s32.totalorder %s32, 1
      %p171 = por %p169, %p170
      %p173 = scmp.ne.s32.totalorder %s156, %s172
      %p174 = scmp.eq.s32.totalorder %s32, 0
      %p175 = por %p173, %p174
      %s176 = ssub.s32 %s34, %s41
      %p177 = scmp.eq.s32.totalorder %s176, 0
      %s179 = sadd.s32 %s178, 1
      %s180 = scalar_select %p177, %s178, %s179
      %p183 = pneg %p177
      %p184 = scmp.eq.s32.totalorder %s26, 1
      %p185 = por %p183, %p184
      %p186 = scmp.ne.s32.totalorder %s178, %s181
      %p187 = scmp.eq.s32.totalorder %s26, 0
      %p188 = por %p186, %p187
      %p189 = scmp.ne.s32.totalorder %s178, %s181
      %p190 = scmp.eq.s32.totalorder %s31, 1
      %p191 = por %p189, %p190
      %p192 = scmp.ne.s32.totalorder %s181, %s182
      %p193 = scmp.eq.s32.totalorder %s31, 0
      %p194 = por %p192, %p193
      %p195 = scmp.ne.s32.totalorder %s181, %s182
      %p196 = scmp.eq.s32.totalorder %s32, 1
      %p197 = por %p195, %p196
      %p199 = scmp.ne.s32.totalorder %s182, %s198
      %p200 = scmp.eq.s32.totalorder %s32, 0
      %p201 = por %p199, %p200
      %s202 = ssub.s32 %s34, %s41
      %p203 = scmp.eq.s32.totalorder %s202, 0
      %s205 = sadd.s32 %s204, 1
      %s206 = scalar_select %p203, %s204, %s205
      %p209 = pneg %p203
      %p210 = scmp.eq.s32.totalorder %s26, 1
      %p211 = por %p209, %p210
      %p212 = scmp.ne.s32.totalorder %s204, %s207
      %p213 = scmp.eq.s32.totalorder %s26, 0
      %p214 = por %p212, %p213
      %p215 = scmp.ne.s32.totalorder %s204, %s207
      %p216 = scmp.eq.s32.totalorder %s31, 1
      %p217 = por %p215, %p216
      %p218 = scmp.ne.s32.totalorder %s207, %s208
      %p219 = scmp.eq.s32.totalorder %s31, 0
      %p220 = por %p218, %p219
      %p221 = scmp.ne.s32.totalorder %s207, %s208
      %p222 = scmp.eq.s32.totalorder %s32, 1
      %p223 = por %p221, %p222
      %p225 = scmp.ne.s32.totalorder %s208, %s224
      %p226 = scmp.eq.s32.totalorder %s32, 0
      %p227 = por %p225, %p226
      %s228 = ssub.s32 %s34, %s41
      %p229 = scmp.eq.s32.totalorder %s228, 0
      %s231 = sadd.s32 %s230, 1
      %s232 = scalar_select %p229, %s230, %s231
      %p235 = pneg %p229
      %p236 = scmp.eq.s32.totalorder %s26, 1
      %p237 = por %p235, %p236
      %p238 = scmp.ne.s32.totalorder %s230, %s233
      %p239 = scmp.eq.s32.totalorder %s26, 0
      %p240 = por %p238, %p239
      %p241 = scmp.ne.s32.totalorder %s230, %s233
      %p242 = scmp.eq.s32.totalorder %s31, 1
      %p243 = por %p241, %p242
      %p244 = scmp.ne.s32.totalorder %s233, %s234
      %p245 = scmp.eq.s32.totalorder %s31, 0
      %p246 = por %p244, %p245
      %p247 = scmp.ne.s32.totalorder %s233, %s234
      %p248 = scmp.eq.s32.totalorder %s32, 1
      %p249 = por %p247, %p248
      %p251 = scmp.ne.s32.totalorder %s234, %s250
      %p252 = scmp.eq.s32.totalorder %s32, 0
      %p253 = por %p251, %p252
      %s254 = ssub.s32 %s34, %s41
      %p255 = scmp.eq.s32.totalorder %s254, 0
      %s257 = sadd.s32 %s256, 1
      %s258 = scalar_select %p255, %s256, %s257
      %p261 = pneg %p255
      %p262 = scmp.eq.s32.totalorder %s26, 1
      %p263 = por %p261, %p262
      %p264 = scmp.ne.s32.totalorder %s256, %s259
      %p265 = scmp.eq.s32.totalorder %s26, 0
      %p266 = por %p264, %p265
      %p267 = scmp.ne.s32.totalorder %s256, %s259
      %p268 = scmp.eq.s32.totalorder %s31, 1
      %p269 = por %p267, %p268
      %p270 = scmp.ne.s32.totalorder %s259, %s260
      %p271 = scmp.eq.s32.totalorder %s31, 0
      %p272 = por %p270, %p271
      %p273 = scmp.ne.s32.totalorder %s259, %s260
      %p274 = scmp.eq.s32.totalorder %s32, 1
      %p275 = por %p273, %p274
      %p277 = scmp.ne.s32.totalorder %s260, %s276
      %p278 = scmp.eq.s32.totalorder %s32, 0
      %p279 = por %p277, %p278
      %s280 = ssub.s32 %s34, %s41
      %p281 = scmp.eq.s32.totalorder %s280, 0
      %s283 = sadd.s32 %s282, 1
      %s284 = scalar_select %p281, %s282, %s283
      %p287 = pneg %p281
      %p288 = scmp.eq.s32.totalorder %s26, 1
      %p289 = por %p287, %p288
      %p290 = scmp.ne.s32.totalorder %s282, %s285
      %p291 = scmp.eq.s32.totalorder %s26, 0
      %p292 = por %p290, %p291
      %p293 = scmp.ne.s32.totalorder %s282, %s285
      %p294 = scmp.eq.s32.totalorder %s31, 1
      %p295 = por %p293, %p294
      %p296 = scmp.ne.s32.totalorder %s285, %s286
      %p297 = scmp.eq.s32.totalorder %s31, 0
      %p298 = por %p296, %p297
      %p299 = scmp.ne.s32.totalorder %s285, %s286
      %p300 = scmp.eq.s32.totalorder %s32, 1
      %p301 = por %p299, %p300
      %p303 = scmp.ne.s32.totalorder %s286, %s302
      %p304 = scmp.eq.s32.totalorder %s32, 0
      %p305 = por %p303, %p304
      %s306 = ssub.s32 %s34, %s41
      %p307 = scmp.eq.s32.totalorder %s306, 0
      %s309 = sadd.s32 %s308, 1
      %s310 = scalar_select %p307, %s308, %s309
      %p313 = pneg %p307
      %p314 = scmp.eq.s32.totalorder %s26, 1
      %p315 = por %p313, %p314
      %p316 = scmp.ne.s32.totalorder %s308, %s311
      %p317 = scmp.eq.s32.totalorder %s26, 0
      %p318 = por %p316, %p317
      %p319 = scmp.ne.s32.totalorder %s308, %s311
      %p320 = scmp.eq.s32.totalorder %s31, 1
      %p321 = por %p319, %p320
      %p322 = scmp.ne.s32.totalorder %s311, %s312
      %p323 = scmp.eq.s32.totalorder %s31, 0
      %p324 = por %p322, %p323
      %p325 = scmp.ne.s32.totalorder %s311, %s312
      %p326 = scmp.eq.s32.totalorder %s32, 1
      %p327 = por %p325, %p326
      %p329 = scmp.ne.s32.totalorder %s312, %s328
      %p330 = scmp.eq.s32.totalorder %s32, 0
      %p331 = por %p329, %p330
      %s332 = ssub.s32 %s34, %s41
      %p333 = scmp.eq.s32.totalorder %s332, 0
      %s335 = sadd.s32 %s334, 1
      %s336 = scalar_select %p333, %s334, %s335
      %p339 = pneg %p333
      %p340 = scmp.eq.s32.totalorder %s26, 1
      %p341 = por %p339, %p340
      %p342 = scmp.ne.s32.totalorder %s334, %s337
      %p343 = scmp.eq.s32.totalorder %s26, 0
      %p344 = por %p342, %p343
      %p345 = scmp.ne.s32.totalorder %s334, %s337
      %p346 = scmp.eq.s32.totalorder %s31, 1
      %p347 = por %p345, %p346
      %p348 = scmp.ne.s32.totalorder %s337, %s338
      %p349 = scmp.eq.s32.totalorder %s31, 0
      %p350 = por %p348, %p349
      %p351 = scmp.ne.s32.totalorder %s337, %s338
      %p352 = scmp.eq.s32.totalorder %s32, 1
      %p353 = por %p351, %p352
      %p355 = scmp.ne.s32.totalorder %s338, %s354
      %p356 = scmp.eq.s32.totalorder %s32, 0
      %p357 = por %p355, %p356
      %s358 = ssub.s32 %s34, %s41
      %p359 = scmp.eq.s32.totalorder %s358, 0
      %s361 = sadd.s32 %s360, 1
      %s362 = scalar_select %p359, %s360, %s361
      %p365 = pneg %p359
      %p366 = scmp.eq.s32.totalorder %s26, 1
      %p367 = por %p365, %p366
      %p368 = scmp.ne.s32.totalorder %s360, %s363
      %p369 = scmp.eq.s32.totalorder %s26, 0
      %p370 = por %p368, %p369
      %p371 = scmp.ne.s32.totalorder %s360, %s363
      %p372 = scmp.eq.s32.totalorder %s31, 1
      %p373 = por %p371, %p372
      %p374 = scmp.ne.s32.totalorder %s363, %s364
      %p375 = scmp.eq.s32.totalorder %s31, 0
      %p376 = por %p374, %p375
      %p377 = scmp.ne.s32.totalorder %s363, %s364
      %p378 = scmp.eq.s32.totalorder %s32, 1
      %p379 = por %p377, %p378
      %p381 = scmp.ne.s32.totalorder %s364, %s380
      %p382 = scmp.eq.s32.totalorder %s32, 0
      %p383 = por %p381, %p382
      %s384 = ssub.s32 %s34, %s41
      %p385 = scmp.eq.s32.totalorder %s384, 0
      %s387 = sadd.s32 %s386, 1
      %s388 = scalar_select %p385, %s386, %s387
      %p391 = pneg %p385
      %p392 = scmp.eq.s32.totalorder %s26, 1
      %p393 = por %p391, %p392
      %p394 = scmp.ne.s32.totalorder %s386, %s389
      %p395 = scmp.eq.s32.totalorder %s26, 0
      %p396 = por %p394, %p395
      %p397 = scmp.ne.s32.totalorder %s386, %s389
      %p398 = scmp.eq.s32.totalorder %s31, 1
      %p399 = por %p397, %p398
      %p400 = scmp.ne.s32.totalorder %s389, %s390
      %p401 = scmp.eq.s32.totalorder %s31, 0
      %p402 = por %p400, %p401
      %p403 = scmp.ne.s32.totalorder %s389, %s390
      %p404 = scmp.eq.s32.totalorder %s32, 1
      %p405 = por %p403, %p404
      %p407 = scmp.ne.s32.totalorder %s390, %s406
      %p408 = scmp.eq.s32.totalorder %s32, 0
      %p409 = por %p407, %p408
      %s410 = ssub.s32 %s34, %s41
      %p411 = scmp.eq.s32.totalorder %s410, 0
      %s413 = sadd.s32 %s412, 1
      %s414 = scalar_select %p411, %s412, %s413
      %p417 = pneg %p411
      %p418 = scmp.eq.s32.totalorder %s26, 1
      %p419 = por %p417, %p418
      %p420 = scmp.ne.s32.totalorder %s412, %s415
      %p421 = scmp.eq.s32.totalorder %s26, 0
      %p422 = por %p420, %p421
      %p423 = scmp.ne.s32.totalorder %s412, %s415
      %p424 = scmp.eq.s32.totalorder %s31, 1
      %p425 = por %p423, %p424
      %p426 = scmp.ne.s32.totalorder %s415, %s416
      %p427 = scmp.eq.s32.totalorder %s31, 0
      %p428 = por %p426, %p427
      %p429 = scmp.ne.s32.totalorder %s415, %s416
      %p430 = scmp.eq.s32.totalorder %s32, 1
      %p431 = por %p429, %p430
      %p433 = scmp.ne.s32.totalorder %s416, %s432
      %p434 = scmp.eq.s32.totalorder %s32, 0
      %p435 = por %p433, %p434
      %s437 = sadd.s32 %s436, 1
      %p440 = scmp.eq.s32.totalorder %s26, 1
      %p441 = scmp.ne.s32.totalorder %s436, %s438
      %p442 = scmp.eq.s32.totalorder %s26, 0
      %p443 = por %p441, %p442
      %p444 = scmp.ne.s32.totalorder %s436, %s438
      %p445 = scmp.eq.s32.totalorder %s31, 1
      %p446 = por %p444, %p445
      %p447 = scmp.ne.s32.totalorder %s438, %s439
      %p448 = scmp.eq.s32.totalorder %s31, 0
      %p449 = por %p447, %p448
      %p450 = scmp.ne.s32.totalorder %s438, %s439
      %p451 = scmp.eq.s32.totalorder %s32, 1
      %p452 = por %p450, %p451
      %p454 = scmp.ne.s32.totalorder %s439, %s453
      %p455 = scmp.eq.s32.totalorder %s32, 0
      %p456 = por %p454, %p455
      %s458 = sadd.s32 %s457, 1
      %p461 = scmp.eq.s32.totalorder %s26, 1
      %p462 = scmp.ne.s32.totalorder %s457, %s459
      %p463 = scmp.eq.s32.totalorder %s26, 0
      %p464 = por %p462, %p463
      %p465 = scmp.ne.s32.totalorder %s457, %s459
      %p466 = scmp.eq.s32.totalorder %s31, 1
      %p467 = por %p465, %p466
      %p468 = scmp.ne.s32.totalorder %s459, %s460
      %p469 = scmp.eq.s32.totalorder %s31, 0
      %p470 = por %p468, %p469
      %p471 = scmp.ne.s32.totalorder %s459, %s460
      %p472 = scmp.eq.s32.totalorder %s32, 1
      %p473 = por %p471, %p472
      %p475 = scmp.ne.s32.totalorder %s460, %s474
      %p476 = scmp.eq.s32.totalorder %s32, 0
      %p477 = por %p475, %p476
      %s478 = ssub.s32 %s33, %s45
      %p479 = scmp.eq.s32.totalorder %s478, 0
      %s481 = sadd.s32 %s480, 1
      %s482 = scalar_select %p479, %s480, %s481
      %p485 = pneg %p479
      %p486 = scmp.eq.s32.totalorder %s26, 1
      %p487 = por %p485, %p486
      %p488 = scmp.ne.s32.totalorder %s480, %s483
      %p489 = scmp.eq.s32.totalorder %s26, 0
      %p490 = por %p488, %p489
      %p491 = scmp.ne.s32.totalorder %s480, %s483
      %p492 = scmp.eq.s32.totalorder %s31, 1
      %p493 = por %p491, %p492
      %p494 = scmp.ne.s32.totalorder %s483, %s484
      %p495 = scmp.eq.s32.totalorder %s31, 0
      %p496 = por %p494, %p495
      %p497 = scmp.ne.s32.totalorder %s483, %s484
      %p498 = scmp.eq.s32.totalorder %s32, 1
      %p499 = por %p497, %p498
      %p501 = scmp.ne.s32.totalorder %s484, %s500
      %p502 = scmp.eq.s32.totalorder %s32, 0
      %p503 = por %p501, %p502
      %p504 = scmp.le.s32.totalorder 1, %s26
      %p505 = scmp.lt.s32.totalorder %s26, 3
      %p506 = pnand %p504, %p505
      %p507 = pneg %p506
      // Predicated region
      $region9: #{tpu_custom_call.1} parent=5 // pred_check
        _
      $region10: #{tpu_custom_call.1} parent=5 // pred_check_branch
        %509 = sbr.rel (%p506) target = $region12
      $region11: #{tpu_custom_call.1} parent=5 // pred_region
        %s510 = ssub.s32 %s26, 1
        // Predicated region
        $region13: #{tpu_custom_call.1} parent=11 // pred_check
          %p511 = pneg %p64
        $region14: #{tpu_custom_call.1} parent=11 // pred_check_branch
          %513 = sbr.rel (%p511) target = $region16
        $region15: #{tpu_custom_call.1} parent=11 // pred_region
          %s514 = smul.u32 2, %s35
          %s516 = ssub.s32 256, 256
          %517 = vsyncadd [#allocation4], %s516
          %s518 = smul.addr %s514, 128
          %s519 = scalar_lea.hbm %s0, %s518
          %s520 = sshll.u32 [#allocation3], 4
          %s521 = int_to_ptr.vmem [resolvable:$true] %s520
          %526 = dma.hbm_to_vmem [thread:$0]  %s519, 256, %s521, [#allocation4], 128, 128, 8
        $region16: #{tpu_custom_call.1} parent=11 // pred_fallthru
          _
        // Predicated region
        $region17: #{tpu_custom_call.1} parent=11 // pred_check
          %p527 = pneg %p90
        $region18: #{tpu_custom_call.1} parent=11 // pred_check_branch
          %529 = sbr.rel (%p527) target = $region20
        $region19: #{tpu_custom_call.1} parent=11 // pred_region
          %s530 = smul.u32 2, %s35
          %p531 = scmp.lt.s32.totalorder %s530, 1
          %s532 = scalar_select %p531, %s530, 1
          %s533 = smul.addr %s532, 2
          %s534 = smul.addr %s533, 8
          %s535 = scalar_lea.vmem %s1, %s534
          %s536 = smul.u32 2, %s35
        $region20: #{tpu_custom_call.1} parent=11 // pred_fallthru
          _
        // Predicated region
        $region21: #{tpu_custom_call.1} parent=11 // pred_check
          %p537 = pneg %p116
        $region22: #{tpu_custom_call.1} parent=11 // pred_check_branch
          %539 = sbr.rel (%p537) target = $region24
        $region23: #{tpu_custom_call.1} parent=11 // pred_region
          %s540 = smul.u32 2, %s35
          %p541 = scmp.lt.s32.totalorder %s540, 1
          %s542 = scalar_select %p541, %s540, 1
          %s543 = scalar_lea.vmem %s2, %s542
          %s544 = smul.u32 2, %s35
        $region24: #{tpu_custom_call.1} parent=11 // pred_fallthru
          _
        // Predicated region
        $region25: #{tpu_custom_call.1} parent=11 // pred_check
          %p545 = pneg %p142
        $region26: #{tpu_custom_call.1} parent=11 // pred_check_branch
          %547 = sbr.rel (%p545) target = $region28
        $region27: #{tpu_custom_call.1} parent=11 // pred_region
          %s548 = smul.u32 2, %s35
          %s550 = ssub.s32 32, 32
          %551 = vsyncadd [#allocation7], %s550
          %s552 = smul.addr %s548, 16
          %s553 = scalar_lea.hbm %s3, %s552
          %s554 = sshll.u32 [#allocation6], 4
          %s555 = int_to_ptr.vmem [resolvable:$true] %s554
          %560 = dma.hbm_to_vmem [thread:$0]  %s553, 32, %s555, [#allocation7], 16, 16, 1
        $region28: #{tpu_custom_call.1} parent=11 // pred_fallthru
          _
        // Predicated region
        $region29: #{tpu_custom_call.1} parent=11 // pred_check
          %p561 = pneg %p449
        $region30: #{tpu_custom_call.1} parent=11 // pred_check_branch
          %563 = sbr.rel (%p561) target = $region32
        $region31: #{tpu_custom_call.1} parent=11 // pred_region
          _
        $region32: #{tpu_custom_call.1} parent=11 // pred_fallthru
          _
        // Predicated region
        $region33: #{tpu_custom_call.1} parent=11 // pred_check
          %p564 = pneg %p470
        $region34: #{tpu_custom_call.1} parent=11 // pred_check_branch
          %566 = sbr.rel (%p564) target = $region36
        $region35: #{tpu_custom_call.1} parent=11 // pred_region
          _
        $region36: #{tpu_custom_call.1} parent=11 // pred_fallthru
          _
      $region12: #{tpu_custom_call.1} parent=5 // pred_fallthru
        _
      %p567 = scmp.lt.s32.totalorder %s26, 2
      // Predicated region
      $region37: #{tpu_custom_call.1} parent=5 // pred_check
        %p568 = pneg %p567
      $region38: #{tpu_custom_call.1} parent=5 // pred_check_branch
        %570 = sbr.rel (%p568) target = $region40
      $region39: #{tpu_custom_call.1} parent=5 // pred_region
        // Predicated region
        $region41: #{tpu_custom_call.1} parent=39 // pred_check
          %p571 = pneg %p162
        $region42: #{tpu_custom_call.1} parent=39 // pred_check_branch
          %573 = sbr.rel (%p571) target = $region44
        $region43: #{tpu_custom_call.1} parent=39 // pred_region
          %p574 = scmp.lt.s32.totalorder %s34, 1
          %s575 = scalar_select %p574, %s34, 1
          %s576 = smul.addr %s575, 4
          %s577 = smul.addr %s576, 4
          %s578 = scalar_lea.vmem %s4, %s577
        $region44: #{tpu_custom_call.1} parent=39 // pred_fallthru
          _
        // Predicated region
        $region45: #{tpu_custom_call.1} parent=39 // pred_check
          %p579 = pneg %p188
        $region46: #{tpu_custom_call.1} parent=39 // pred_check_branch
          %581 = sbr.rel (%p579) target = $region48
        $region47: #{tpu_custom_call.1} parent=39 // pred_region
          %p582 = scmp.lt.s32.totalorder %s34, 1
          %s583 = scalar_select %p582, %s34, 1
          %s584 = smul.addr %s583, 4
          %s585 = smul.addr %s584, 4
          %s586 = scalar_lea.vmem %s5, %s585
        $region48: #{tpu_custom_call.1} parent=39 // pred_fallthru
          _
        // Predicated region
        $region49: #{tpu_custom_call.1} parent=39 // pred_check
          %p587 = pneg %p214
        $region50: #{tpu_custom_call.1} parent=39 // pred_check_branch
          %589 = sbr.rel (%p587) target = $region52
        $region51: #{tpu_custom_call.1} parent=39 // pred_region
          %p590 = scmp.lt.s32.totalorder %s34, 1
          %s591 = scalar_select %p590, %s34, 1
          %s592 = smul.addr %s591, 4
          %s593 = smul.addr %s592, 4
          %s594 = scalar_lea.vmem %s6, %s593
        $region52: #{tpu_custom_call.1} parent=39 // pred_fallthru
          _
        // Predicated region
        $region53: #{tpu_custom_call.1} parent=39 // pred_check
          %p595 = pneg %p240
        $region54: #{tpu_custom_call.1} parent=39 // pred_check_branch
          %597 = sbr.rel (%p595) target = $region56
        $region55: #{tpu_custom_call.1} parent=39 // pred_region
          %p598 = scmp.lt.s32.totalorder %s34, 1
          %s599 = scalar_select %p598, %s34, 1
          %s600 = smul.addr %s599, 4
          %s601 = smul.addr %s600, 4
          %s602 = scalar_lea.vmem %s7, %s601
        $region56: #{tpu_custom_call.1} parent=39 // pred_fallthru
          _
        // Predicated region
        $region57: #{tpu_custom_call.1} parent=39 // pred_check
          %p603 = pneg %p266
        $region58: #{tpu_custom_call.1} parent=39 // pred_check_branch
          %605 = sbr.rel (%p603) target = $region60
        $region59: #{tpu_custom_call.1} parent=39 // pred_region
          %p606 = scmp.lt.s32.totalorder %s34, 1
          %s607 = scalar_select %p606, %s34, 1
          %s608 = smul.addr %s607, 4
          %s609 = smul.addr %s608, 4
          %s610 = scalar_lea.vmem %s8, %s609
        $region60: #{tpu_custom_call.1} parent=39 // pred_fallthru
          _
        // Predicated region
        $region61: #{tpu_custom_call.1} parent=39 // pred_check
          %p611 = pneg %p292
        $region62: #{tpu_custom_call.1} parent=39 // pred_check_branch
          %613 = sbr.rel (%p611) target = $region64
        $region63: #{tpu_custom_call.1} parent=39 // pred_region
          %p614 = scmp.lt.s32.totalorder %s34, 1
          %s615 = scalar_select %p614, %s34, 1
          %s616 = smul.addr %s615, 4
          %s617 = smul.addr %s616, 4
          %s618 = scalar_lea.vmem %s9, %s617
        $region64: #{tpu_custom_call.1} parent=39 // pred_fallthru
          _
        // Predicated region
        $region65: #{tpu_custom_call.1} parent=39 // pred_check
          %p619 = pneg %p318
        $region66: #{tpu_custom_call.1} parent=39 // pred_check_branch
          %621 = sbr.rel (%p619) target = $region68
        $region67: #{tpu_custom_call.1} parent=39 // pred_region
          %p622 = scmp.lt.s32.totalorder %s34, 1
          %s623 = scalar_select %p622, %s34, 1
          %s624 = smul.addr %s623, 8
          %s625 = smul.addr %s624, 4
          %s626 = scalar_lea.vmem %s10, %s625
        $region68: #{tpu_custom_call.1} parent=39 // pred_fallthru
          _
        // Predicated region
        $region69: #{tpu_custom_call.1} parent=39 // pred_check
          %p627 = pneg %p344
        $region70: #{tpu_custom_call.1} parent=39 // pred_check_branch
          %629 = sbr.rel (%p627) target = $region72
        $region71: #{tpu_custom_call.1} parent=39 // pred_region
          %p630 = scmp.lt.s32.totalorder %s34, 1
          %s631 = scalar_select %p630, %s34, 1
          %s632 = scalar_lea.vmem %s11, %s631
        $region72: #{tpu_custom_call.1} parent=39 // pred_fallthru
          _
        // Predicated region
        $region73: #{tpu_custom_call.1} parent=39 // pred_check
          %p633 = pneg %p370
        $region74: #{tpu_custom_call.1} parent=39 // pred_check_branch
          %635 = sbr.rel (%p633) target = $region76
        $region75: #{tpu_custom_call.1} parent=39 // pred_region
          %p636 = scmp.lt.s32.totalorder %s34, 1
          %s637 = scalar_select %p636, %s34, 1
          %s638 = scalar_lea.vmem %s12, %s637
        $region76: #{tpu_custom_call.1} parent=39 // pred_fallthru
          _
        // Predicated region
        $region77: #{tpu_custom_call.1} parent=39 // pred_check
          %p639 = pneg %p396
        $region78: #{tpu_custom_call.1} parent=39 // pred_check_branch
          %641 = sbr.rel (%p639) target = $region80
        $region79: #{tpu_custom_call.1} parent=39 // pred_region
          %p642 = scmp.lt.s32.totalorder %s34, 1
          %s643 = scalar_select %p642, %s34, 1
          %s644 = smul.addr %s643, 2
          %s645 = smul.addr %s644, 8
          %s646 = scalar_lea.vmem %s13, %s645
        $region80: #{tpu_custom_call.1} parent=39 // pred_fallthru
          _
        // Predicated region
        $region81: #{tpu_custom_call.1} parent=39 // pred_check
          %p647 = pneg %p422
        $region82: #{tpu_custom_call.1} parent=39 // pred_check_branch
          %649 = sbr.rel (%p647) target = $region84
        $region83: #{tpu_custom_call.1} parent=39 // pred_region
          %p650 = scmp.lt.s32.totalorder %s34, 1
          %s651 = scalar_select %p650, %s34, 1
          %s652 = scalar_lea.vmem %s14, %s651
        $region84: #{tpu_custom_call.1} parent=39 // pred_fallthru
          _
      $region40: #{tpu_custom_call.1} parent=5 // pred_fallthru
        _
      %p653 = scmp.le.s32.totalorder 1, %s26
      %p654 = scmp.lt.s32.totalorder %s26, 3
      %p655 = pnand %p653, %p654
      %p656 = pneg %p655
      // Predicated region
      $region85: #{tpu_custom_call.1} parent=5 // pred_check
        _
      $region86: #{tpu_custom_call.1} parent=5 // pred_check_branch
        %658 = sbr.rel (%p655) target = $region88
      $region87: #{tpu_custom_call.1} parent=5 // pred_region
        %s659 = ssub.s32 %s26, 1
        // Predicated region
        $region89: #{tpu_custom_call.1} parent=87 // pred_check
          %p660 = pneg %p64
        $region90: #{tpu_custom_call.1} parent=87 // pred_check_branch
          %662 = sbr.rel (%p660) target = $region92
        $region91: #{tpu_custom_call.1} parent=87 // pred_region
          %663 = dma.done [#allocation4], 256
        $region92: #{tpu_custom_call.1} parent=87 // pred_fallthru
          _
        // Predicated region
        $region93: #{tpu_custom_call.1} parent=87 // pred_check
          %p664 = pneg %p142
        $region94: #{tpu_custom_call.1} parent=87 // pred_check_branch
          %666 = sbr.rel (%p664) target = $region96
        $region95: #{tpu_custom_call.1} parent=87 // pred_region
          %667 = dma.done [#allocation7], 32
        $region96: #{tpu_custom_call.1} parent=87 // pred_fallthru
          _
        %p668 = pneg %p64
        %p669 = pneg %p61
        %s670 = smul.u32 2, %s35
        %p671 = scmp.lt.s32.totalorder %s670, 1
        %s672 = scalar_select %p671, %s670, 1
        %s673 = smul.addr %s672, 2
        %s674 = smul.addr %s673, 8
        %s675 = scalar_lea.vmem %s1, %s674
        %p676 = pneg %p90
        %p677 = pneg %p87
        %s678 = smul.u32 2, %s35
        %p679 = scmp.lt.s32.totalorder %s678, 1
        %s680 = scalar_select %p679, %s678, 1
        %s681 = scalar_lea.vmem %s2, %s680
        %p682 = pneg %p116
        %p683 = pneg %p113
        %p684 = pneg %p142
        %p685 = pneg %p139
        %p686 = scmp.lt.s32.totalorder %s36, 1
        %s687 = scalar_select %p686, %s36, 1
        %s688 = smul.addr %s687, 4
        %s689 = smul.addr %s688, 4
        %s690 = scalar_lea.vmem %s4, %s689
        %p691 = pneg %p168
        %p692 = pneg %p165
        %p693 = scmp.lt.s32.totalorder %s36, 1
        %s694 = scalar_select %p693, %s36, 1
        %s695 = smul.addr %s694, 4
        %s696 = smul.addr %s695, 4
        %s697 = scalar_lea.vmem %s5, %s696
        %p698 = pneg %p194
        %p699 = pneg %p191
        %p700 = scmp.lt.s32.totalorder %s36, 1
        %s701 = scalar_select %p700, %s36, 1
        %s702 = smul.addr %s701, 4
        %s703 = smul.addr %s702, 4
        %s704 = scalar_lea.vmem %s6, %s703
        %p705 = pneg %p220
        %p706 = pneg %p217
        %p707 = scmp.lt.s32.totalorder %s36, 1
        %s708 = scalar_select %p707, %s36, 1
        %s709 = smul.addr %s708, 4
        %s710 = smul.addr %s709, 4
        %s711 = scalar_lea.vmem %s7, %s710
        %p712 = pneg %p246
        %p713 = pneg %p243
        %p714 = scmp.lt.s32.totalorder %s36, 1
        %s715 = scalar_select %p714, %s36, 1
        %s716 = smul.addr %s715, 4
        %s717 = smul.addr %s716, 4
        %s718 = scalar_lea.vmem %s8, %s717
        %p719 = pneg %p272
        %p720 = pneg %p269
        %p721 = scmp.lt.s32.totalorder %s36, 1
        %s722 = scalar_select %p721, %s36, 1
        %s723 = smul.addr %s722, 4
        %s724 = smul.addr %s723, 4
        %s725 = scalar_lea.vmem %s9, %s724
        %p726 = pneg %p298
        %p727 = pneg %p295
        %p728 = scmp.lt.s32.totalorder %s36, 1
        %s729 = scalar_select %p728, %s36, 1
        %s730 = smul.addr %s729, 8
        %s731 = smul.addr %s730, 4
        %s732 = scalar_lea.vmem %s10, %s731
        %p733 = pneg %p324
        %p734 = pneg %p321
        %p735 = scmp.lt.s32.totalorder %s36, 1
        %s736 = scalar_select %p735, %s36, 1
        %s737 = scalar_lea.vmem %s11, %s736
        %p738 = pneg %p350
        %p739 = pneg %p347
        %p740 = scmp.lt.s32.totalorder %s36, 1
        %s741 = scalar_select %p740, %s36, 1
        %s742 = scalar_lea.vmem %s12, %s741
        %p743 = pneg %p376
        %p744 = pneg %p373
        %p745 = scmp.lt.s32.totalorder %s36, 1
        %s746 = scalar_select %p745, %s36, 1
        %s747 = smul.addr %s746, 2
        %s748 = smul.addr %s747, 8
        %s749 = scalar_lea.vmem %s13, %s748
        %p750 = pneg %p402
        %p751 = pneg %p399
        %p752 = scmp.lt.s32.totalorder %s36, 1
        %s753 = scalar_select %p752, %s36, 1
        %s754 = scalar_lea.vmem %s14, %s753
        %p755 = pneg %p428
        %p756 = pneg %p425
        %p757 = pneg %p449
        %p758 = pneg %p446
        %p759 = pneg %p470
        %p760 = pneg %p467
        %p761 = pneg %p496
        %p762 = pneg %p493
        %s763 = smul.u32 2, %s35
        %s764 = smul.u32 2, %s35
        %p765 = scmp.lt.s32.totalorder %s764, 1
        %s766 = scalar_select %p765, %s764, 1
        %s767 = smul.addr %s766, 2
        %s768 = smul.addr %s767, 8
        %s769 = scalar_lea.vmem %s1, %s768
        %s770 = smul.u32 2, %s35
        %s771 = smul.u32 2, %s35
        %p772 = scmp.lt.s32.totalorder %s771, 1
        %s773 = scalar_select %p772, %s771, 1
        %s774 = scalar_lea.vmem %s2, %s773
        %s775 = smul.u32 2, %s35
        %s776 = smul.u32 2, %s35
        %p777 = scmp.lt.s32.totalorder %s36, 1
        %s778 = scalar_select %p777, %s36, 1
        %s779 = smul.addr %s778, 4
        %s780 = smul.addr %s779, 4
        %s781 = scalar_lea.vmem %s4, %s780
        %p782 = scmp.lt.s32.totalorder %s36, 1
        %s783 = scalar_select %p782, %s36, 1
        %s784 = smul.addr %s783, 4
        %s785 = smul.addr %s784, 4
        %s786 = scalar_lea.vmem %s5, %s785
        %p787 = scmp.lt.s32.totalorder %s36, 1
        %s788 = scalar_select %p787, %s36, 1
        %s789 = smul.addr %s788, 4
        %s790 = smul.addr %s789, 4
        %s791 = scalar_lea.vmem %s6, %s790
        %p792 = scmp.lt.s32.totalorder %s36, 1
        %s793 = scalar_select %p792, %s36, 1
        %s794 = smul.addr %s793, 4
        %s795 = smul.addr %s794, 4
        %s796 = scalar_lea.vmem %s7, %s795
        %p797 = scmp.lt.s32.totalorder %s36, 1
        %s798 = scalar_select %p797, %s36, 1
        %s799 = smul.addr %s798, 4
        %s800 = smul.addr %s799, 4
        %s801 = scalar_lea.vmem %s8, %s800
        %p802 = scmp.lt.s32.totalorder %s36, 1
        %s803 = scalar_select %p802, %s36, 1
        %s804 = smul.addr %s803, 4
        %s805 = smul.addr %s804, 4
        %s806 = scalar_lea.vmem %s9, %s805
        %p807 = scmp.lt.s32.totalorder %s36, 1
        %s808 = scalar_select %p807, %s36, 1
        %s809 = smul.addr %s808, 8
        %s810 = smul.addr %s809, 4
        %s811 = scalar_lea.vmem %s10, %s810
        %p812 = scmp.lt.s32.totalorder %s36, 1
        %s813 = scalar_select %p812, %s36, 1
        %s814 = scalar_lea.vmem %s11, %s813
        %p815 = scmp.lt.s32.totalorder %s36, 1
        %s816 = scalar_select %p815, %s36, 1
        %s817 = scalar_lea.vmem %s12, %s816
        %p818 = scmp.lt.s32.totalorder %s36, 1
        %s819 = scalar_select %p818, %s36, 1
        %s820 = smul.addr %s819, 2
        %s821 = smul.addr %s820, 8
        %s822 = scalar_lea.vmem %s13, %s821
        %p823 = scmp.lt.s32.totalorder %s36, 1
        %s824 = scalar_select %p823, %s36, 1
        %s825 = scalar_lea.vmem %s14, %s824
        %s826 = smul.u32 2, %s35
        %p828 = scmp.eq.s32.totalorder %s36, 0
        // Predicated region
        $region97: #{tpu_custom_call.1} parent=87 // pred_check
          %p829 = pneg %p828
        $region98: #{tpu_custom_call.1} parent=87 // pred_check_branch
          %831 = sbr.rel (%p829) target = $region100
        $region99: #{tpu_custom_call.1} parent=87 // pred_region
          %v832 = vld [vmem:[#allocation3] sm:$0xff]
          %v833 = vld [vmem:[#allocation3 + $0x8] sm:$0xff]
          %vm834 = vcmask 261120
          %835 = vst.msk [vmem:[#allocation2] sm:$0xff] %vm834, %v832
          %836 = vst.msk [vmem:[#allocation2 + $0x8] sm:$0xff] %vm834, %v833
        $region100: #{tpu_custom_call.1} parent=87 // pred_fallthru
          _
        %v837 = vld [vmem:[#allocation2] sm:$0xff]
        %v838 = vld [vmem:[#allocation2 + $0x8] sm:$0xff]
        %v839 = vld [vmem:[%s769] sm:$0xff]
        %v840 = vld [vmem:[%s769 + $0x8] sm:$0xf]
        %v841 = vld [vmem:[%s769 + $0x10] sm:$0xff]
        %v842 = vld [vmem:[%s769 + $0x18] sm:$0xf]
        %v847 = vcombine.high %v839, %v839
        %v848 = vcombine.high %v841, %v841
        %v849 = vcombine.low %v839, %v847
        %v850 = vcombine.low %v840, %v841
        %v851 = vcombine.low %v848, %v842
        %v855 = vpack.c.bf16 %v850, %v849
        %v856 = vpack.c.bf16 %v851, %v851
        %v857 = vld [vmem:[%s774] sm:$0x1]
        %v858 = vld [vmem:[%s774 + $0x1] sm:$0x1]
        %v859 = vld [vmem:[#allocation6] sm:$0x1]
        %v860 = vld [vmem:[#allocation6 + $0x1] sm:$0x1]
        %vm861 = vcmp.ne.f32.partialorder %v857, 0.0
        %vm862 = vcmp.ne.f32.partialorder %v858, 0.0
        %v863 = vsel %vm861, -1e+30, 0.0
        %v864 = vsel %vm862, -1e+30, 0.0
        %vm865 = vcmp.ne.f32.partialorder %v859, 0.0
        %vm866 = vcmp.ne.f32.partialorder %v860, 0.0
        %v867 = vsel %vm865, -1e+30, 0.0
        %v868 = vsel %vm866, -1e+30, 0.0
        %v869 = vpack.c.bf16 %v838, %v837
        %v870 = vld [vmem:[%s781] sm:$0xf]
        %v871 = vld [vmem:[%s781 + $0x4] sm:$0xf]
        %v872 = vld [vmem:[%s781 + $0x8] sm:$0xf]
        %v873 = vld [vmem:[%s781 + $0xc] sm:$0xf]
        %v874 = vld [vmem:[%s814] sm:$0x1]
        %v876 = vlaneseq
        %v877 = vshrl.u32 %v876, 7
        %v878 = vsub.s32 0, %v877
        %v879 = vrot.slane %v874, %v878
        %v885 = vunpack.c.l.b16 %v870
        %v886 = vunpack.c.l.b16 %v871
        %v887 = vunpack.c.l.b16 %v872
        %v888 = vunpack.c.l.b16 %v873
        %v889 = vpack.c.b16 %v886, %v885
        %v890 = vpack.c.b16 %v888, %v887
        %vm893 = vcmask 261120
        %v895 = vsel %vm893, %v869, 0
        %897 = vmatprep.subr.bf16.mxu0 0
        %898 = vmatpush1.bf16.msra.mxu0 %v889
        %899 = vmatprep.subr.bf16.mxu0 0
        %900 = vmatpush1.bf16.msra.mxu0 %v890
        %901 = vmatprep.subr.bf16.mxu0 0
        %902 = vmatpush1.bf16.msra.mxu0 0
        %903 = vmatprep.subr.bf16.mxu0 0
        %904 = vmatpush1.bf16.msra.mxu0 0
        %905 = vmatprep.subr.bf16.mxu0 0
        %906 = vmatpush1.bf16.msra.mxu0 0
        %907 = vmatprep.subr.bf16.mxu0 0
        %908 = vmatpush1.bf16.msra.mxu0 0
        %909 = vmatprep.subr.bf16.mxu0 0
        %910 = vmatpush1.bf16.msra.mxu0 0
        %911 = vmatprep.subr.bf16.mxu0 0
        %912 = vmatpush1.bf16.msra.mxu0 0
        %913 = vmatprep.subr.bf16.mxu0 0
        %914 = vmatpush1.bf16.msra.mxu0 0
        %915 = vmatprep.subr.bf16.mxu0 0
        %916 = vmatpush1.bf16.msra.mxu0 0
        %917 = vmatprep.subr.bf16.mxu0 0
        %918 = vmatpush1.bf16.msra.mxu0 0
        %919 = vmatprep.subr.bf16.mxu0 0
        %920 = vmatpush1.bf16.msra.mxu0 0
        %921 = vmatprep.subr.bf16.mxu0 0
        %922 = vmatpush1.bf16.msra.mxu0 0
        %923 = vmatprep.subr.bf16.mxu0 0
        %924 = vmatpush1.bf16.msra.mxu0 0
        %925 = vmatprep.subr.bf16.mxu0 0
        %926 = vmatpush1.bf16.msra.mxu0 0
        %927 = vmatprep.subr.bf16.mxu0 0
        %928 = vmatpush1.bf16.msra.mxu0 0
        %929 = vmatprep.mubr.bf16.mxu0 0
        %930 = vmatmul.mubr.bf16.gmra.mrb[0].mxu0 %v895
        %v931 = vpop.f32.mrb[0].mxu0
        %v932 = vadd.f32 %v879, %v931
        %v933 = vpop.f32.mrb[0].mxu0
        %v934 = vpop.f32.mrb[0].mxu0
        %v935 = vadd.f32 %v879, %v934
        %v936 = vpop.f32.mrb[0].mxu0
        %937 = vdwg.mxu0
        %v938 = vld [vmem:[%s786] sm:$0xf]
        %v939 = vld [vmem:[%s786 + $0x4] sm:$0xf]
        %v940 = vld [vmem:[%s786 + $0x8] sm:$0xf]
        %v941 = vld [vmem:[%s786 + $0xc] sm:$0xf]
        %v942 = vld [vmem:[%s822] sm:$0x1]
        %v943 = vpack.c.bf16 %v935, %v932
        %v945 = vunpack.c.l.b16 %v943
        %v946 = vunpack.c.h.b16 %v943
        %v947 = vpack.c.b16 %v945, %v945
        %v948 = vpack.c.b16 %v946, %v946
        %v951 = vlaneseq
        %v952 = vshrl.u32 %v951, 7
        %v953 = vsub.s32 0, %v952
        %v954 = vrot.slane %v863, %v953
        %v955 = vlaneseq
        %v956 = vshrl.u32 %v955, 7
        %v957 = vsub.s32 0, %v956
        %v958 = vrot.slane %v864, %v957
        %961 = vrot.lane.b32.xlu0 %v947, 96
        %v962 = vpop.permute.xlu0 %961
        %vm963 = vcmask 64512
        %v965 = vsel %vm963, %v947, 0
        %v968 = vsel %vm963, %v962, 0
        %970 = vmatprep.subr.bf16.mxu0 0
        %971 = vmatpush1.bf16.xpose.msra.mxu0 %v968
        %972 = vmatprep.subr.bf16.mxu0 0
        %973 = vmatpush1.bf16.xpose.msra.mxu0 0
        %974 = vmatprep.subr.bf16.mxu0 0
        %975 = vmatpush1.bf16.xpose.msra.mxu0 0
        %976 = vmatprep.subr.bf16.mxu0 0
        %977 = vmatpush1.bf16.xpose.msra.mxu0 0
        %978 = vmatprep.subr.bf16.mxu0 0
        %979 = vmatpush1.bf16.xpose.msra.mxu0 0
        %980 = vmatprep.subr.bf16.mxu0 0
        %981 = vmatpush1.bf16.xpose.msra.mxu0 0
        %982 = vmatprep.subr.bf16.mxu0 0
        %983 = vmatpush1.bf16.xpose.msra.mxu0 0
        %984 = vmatprep.subr.bf16.mxu0 0
        %985 = vmatpush1.bf16.xpose.msra.mxu0 0
        %986 = vmatprep.subr.bf16.mxu0 0
        %987 = vmatpush1.bf16.xpose.msra.mxu0 0
        %988 = vmatprep.subr.bf16.mxu0 0
        %989 = vmatpush1.bf16.xpose.msra.mxu0 0
        %990 = vmatprep.subr.bf16.mxu0 0
        %991 = vmatpush1.bf16.xpose.msra.mxu0 0
        %992 = vmatprep.subr.bf16.mxu0 0
        %993 = vmatpush1.bf16.xpose.msra.mxu0 0
        %994 = vmatprep.subr.bf16.mxu0 0
        %995 = vmatpush1.bf16.xpose.msra.mxu0 0
        %996 = vmatprep.subr.bf16.mxu0 0
        %997 = vmatpush1.bf16.xpose.msra.mxu0 0
        %998 = vmatprep.subr.bf16.mxu0 0
        %999 = vmatpush1.bf16.xpose.msra.mxu0 0
        %1000 = vmatprep.subr.bf16.mxu0 0
        %1001 = vmatpush1.bf16.xpose.msra.mxu0 0
        %1002 = vmatprep.mubr.bf16.mxu0 0
        %1003 = vmatmul.mubr.bf16.gmra.mrb[0].mxu0 %v965
        %v1004 = vpop.f32.mrb[0].mxu0
        %v1005 = vadd.f32 %v954, %v1004
        %v1006 = vpop.f32.mrb[0].mxu0
        %v1007 = vpop.f32.mrb[0].mxu0
        %v1008 = vpop.f32.mrb[0].mxu0
        %1009 = vdwg.mxu0
        %1010 = vrot.lane.b32.xlu0 %v948, 96
        %v1011 = vpop.permute.xlu0 %1010
        %v1013 = vsel %vm963, %v948, 0
        %v1016 = vsel %vm963, %v1011, 0
        %1018 = vmatprep.subr.bf16.mxu0 0
        %1019 = vmatpush1.bf16.xpose.msra.mxu0 %v1016
        %1020 = vmatprep.subr.bf16.mxu0 0
        %1021 = vmatpush1.bf16.xpose.msra.mxu0 0
        %1022 = vmatprep.subr.bf16.mxu0 0
        %1023 = vmatpush1.bf16.xpose.msra.mxu0 0
        %1024 = vmatprep.subr.bf16.mxu0 0
        %1025 = vmatpush1.bf16.xpose.msra.mxu0 0
        %1026 = vmatprep.subr.bf16.mxu0 0
        %1027 = vmatpush1.bf16.xpose.msra.mxu0 0
        %1028 = vmatprep.subr.bf16.mxu0 0
        %1029 = vmatpush1.bf16.xpose.msra.mxu0 0
        %1030 = vmatprep.subr.bf16.mxu0 0
        %1031 = vmatpush1.bf16.xpose.msra.mxu0 0
        %1032 = vmatprep.subr.bf16.mxu0 0
        %1033 = vmatpush1.bf16.xpose.msra.mxu0 0
        %1034 = vmatprep.subr.bf16.mxu0 0
        %1035 = vmatpush1.bf16.xpose.msra.mxu0 0
        %1036 = vmatprep.subr.bf16.mxu0 0
        %1037 = vmatpush1.bf16.xpose.msra.mxu0 0
        %1038 = vmatprep.subr.bf16.mxu0 0
        %1039 = vmatpush1.bf16.xpose.msra.mxu0 0
        %1040 = vmatprep.subr.bf16.mxu0 0
        %1041 = vmatpush1.bf16.xpose.msra.mxu0 0
        %1042 = vmatprep.subr.bf16.mxu0 0
        %1043 = vmatpush1.bf16.xpose.msra.mxu0 0
        %1044 = vmatprep.subr.bf16.mxu0 0
        %1045 = vmatpush1.bf16.xpose.msra.mxu0 0
        %1046 = vmatprep.subr.bf16.mxu0 0
        %1047 = vmatpush1.bf16.xpose.msra.mxu0 0
        %1048 = vmatprep.subr.bf16.mxu0 0
        %1049 = vmatpush1.bf16.xpose.msra.mxu0 0
        %1050 = vmatprep.mubr.bf16.mxu0 0
        %1051 = vmatmul.mubr.bf16.gmra.mrb[0].mxu0 %v1013
        %v1052 = vpop.f32.mrb[0].mxu0
        %v1053 = vadd.f32 %v958, %v1052
        %v1054 = vpop.f32.mrb[0].mxu0
        %v1055 = vpop.f32.mrb[0].mxu0
        %v1056 = vpop.f32.mrb[0].mxu0
        %1057 = vdwg.mxu0
        %v1058 = vsel %vm963, %v1005, -inf
        %1059 = vmax.xlane.f32.xlu0 %v1058
        %v1060 = vpop.xlane.xlu0 %1059
        %v1061 = vsel %vm963, %v1053, -inf
        %1062 = vmax.xlane.f32.xlu0 %v1061
        %v1063 = vpop.xlane.xlu0 %1062
        %v1064 = vsub.f32 %v1005, %v1060
        %v1065 = vsub.f32 %v1053, %v1063
        %v1066 = vmul.f32 %v1064, 1.442695
        %v1067 = vpow.pop %v1066
        %v1068 = vmul.f32 %v1065, 1.442695
        %v1069 = vpow.pop %v1068
        %v1070 = vsel %vm963, %v1067, 0.0
        %1071 = vadd.xlane.f32.xlu0 %v1070
        %v1072 = vpop.xlane.xlu0 %1071
        %v1073 = vsel %vm963, %v1069, 0.0
        %1074 = vadd.xlane.f32.xlu0 %v1073
        %v1075 = vpop.xlane.xlu0 %1074
        %v1076 = vrcp.pop %v1072
        %v1077 = vrcp.pop %v1075
        %v1078 = vmul.f32 %v1067, %v1076
        %v1079 = vmul.f32 %v1069, %v1077
        %v1080 = vpack.c.bf16 %v1078, %v1078
        %v1081 = vpack.c.bf16 %v1079, %v1079
        %1082 = vrot.lane.b32.xlu0 %v947, 64
        %v1083 = vpop.permute.xlu0 %1082
        %v1085 = vsel %vm963, %v1080, 0
        %vm1087 = vcmask 1043456
        %v1089 = vsel %vm1087, %v1083, 0
        %1091 = vmatprep.subr.bf16.mxu0 0
        %1092 = vmatpush1.bf16.msra.mxu0 %v1089
        %1093 = vmatprep.subr.bf16.mxu0 0
        %1094 = vmatpush1.bf16.msra.mxu0 0
        %1095 = vmatprep.subr.bf16.mxu0 0
        %1096 = vmatpush1.bf16.msra.mxu0 0
        %1097 = vmatprep.subr.bf16.mxu0 0
        %1098 = vmatpush1.bf16.msra.mxu0 0
        %1099 = vmatprep.subr.bf16.mxu0 0
        %1100 = vmatpush1.bf16.msra.mxu0 0
        %1101 = vmatprep.subr.bf16.mxu0 0
        %1102 = vmatpush1.bf16.msra.mxu0 0
        %1103 = vmatprep.subr.bf16.mxu0 0
        %1104 = vmatpush1.bf16.msra.mxu0 0
        %1105 = vmatprep.subr.bf16.mxu0 0
        %1106 = vmatpush1.bf16.msra.mxu0 0
        %1107 = vmatprep.subr.bf16.mxu0 0
        %1108 = vmatpush1.bf16.msra.mxu0 0
        %1109 = vmatprep.subr.bf16.mxu0 0
        %1110 = vmatpush1.bf16.msra.mxu0 0
        %1111 = vmatprep.subr.bf16.mxu0 0
        %1112 = vmatpush1.bf16.msra.mxu0 0
        %1113 = vmatprep.subr.bf16.mxu0 0
        %1114 = vmatpush1.bf16.msra.mxu0 0
        %1115 = vmatprep.subr.bf16.mxu0 0
        %1116 = vmatpush1.bf16.msra.mxu0 0
        %1117 = vmatprep.subr.bf16.mxu0 0
        %1118 = vmatpush1.bf16.msra.mxu0 0
        %1119 = vmatprep.subr.bf16.mxu0 0
        %1120 = vmatpush1.bf16.msra.mxu0 0
        %1121 = vmatprep.subr.bf16.mxu0 0
        %1122 = vmatpush1.bf16.msra.mxu0 0
        %1123 = vmatprep.mubr.bf16.mxu0 0
        %1124 = vmatmul.mubr.bf16.gmra.mrb[0].mxu0 %v1085
        %v1125 = vpop.f32.mrb[0].mxu0
        %v1126 = vadd.f32 0.0, %v1125
        %v1127 = vpop.f32.mrb[0].mxu0
        %v1128 = vpop.f32.mrb[0].mxu0
        %v1129 = vpop.f32.mrb[0].mxu0
        %1130 = vdwg.mxu0
        %1131 = vrot.lane.b32.xlu0 %v948, 64
        %v1132 = vpop.permute.xlu0 %1131
        %v1134 = vsel %vm963, %v1081, 0
        %v1137 = vsel %vm1087, %v1132, 0
        %1139 = vmatprep.subr.bf16.mxu0 0
        %1140 = vmatpush1.bf16.msra.mxu0 %v1137
        %1141 = vmatprep.subr.bf16.mxu0 0
        %1142 = vmatpush1.bf16.msra.mxu0 0
        %1143 = vmatprep.subr.bf16.mxu0 0
        %1144 = vmatpush1.bf16.msra.mxu0 0
        %1145 = vmatprep.subr.bf16.mxu0 0
        %1146 = vmatpush1.bf16.msra.mxu0 0
        %1147 = vmatprep.subr.bf16.mxu0 0
        %1148 = vmatpush1.bf16.msra.mxu0 0
        %1149 = vmatprep.subr.bf16.mxu0 0
        %1150 = vmatpush1.bf16.msra.mxu0 0
        %1151 = vmatprep.subr.bf16.mxu0 0
        %1152 = vmatpush1.bf16.msra.mxu0 0
        %1153 = vmatprep.subr.bf16.mxu0 0
        %1154 = vmatpush1.bf16.msra.mxu0 0
        %1155 = vmatprep.subr.bf16.mxu0 0
        %1156 = vmatpush1.bf16.msra.mxu0 0
        %1157 = vmatprep.subr.bf16.mxu0 0
        %1158 = vmatpush1.bf16.msra.mxu0 0
        %1159 = vmatprep.subr.bf16.mxu0 0
        %1160 = vmatpush1.bf16.msra.mxu0 0
        %1161 = vmatprep.subr.bf16.mxu0 0
        %1162 = vmatpush1.bf16.msra.mxu0 0
        %1163 = vmatprep.subr.bf16.mxu0 0
        %1164 = vmatpush1.bf16.msra.mxu0 0
        %1165 = vmatprep.subr.bf16.mxu0 0
        %1166 = vmatpush1.bf16.msra.mxu0 0
        %1167 = vmatprep.subr.bf16.mxu0 0
        %1168 = vmatpush1.bf16.msra.mxu0 0
        %1169 = vmatprep.subr.bf16.mxu0 0
        %1170 = vmatpush1.bf16.msra.mxu0 0
        %1171 = vmatprep.mubr.bf16.mxu0 0
        %1172 = vmatmul.mubr.bf16.gmra.mrb[0].mxu0 %v1134
        %v1173 = vpop.f32.mrb[0].mxu0
        %v1174 = vadd.f32 0.0, %v1173
        %v1175 = vpop.f32.mrb[0].mxu0
        %v1176 = vpop.f32.mrb[0].mxu0
        %v1177 = vpop.f32.mrb[0].mxu0
        %1178 = vdwg.mxu0
        %1179 = vrot.lane.b32.xlu0 %v947, 120
        %v1180 = vpop.permute.xlu0 %1179
        %1181 = vrot.lane.b32.xlu0 %v947, 88
        %v1182 = vpop.permute.xlu0 %1181
        %v1184 = vsel %vm963, %v1180, 0
        %v1187 = vsel %vm963, %v1182, 0
        %1189 = vmatprep.subr.bf16.mxu0 0
        %1190 = vmatpush1.bf16.xpose.msra.mxu0 %v1187
        %1191 = vmatprep.subr.bf16.mxu0 0
        %1192 = vmatpush1.bf16.xpose.msra.mxu0 0
        %1193 = vmatprep.subr.bf16.mxu0 0
        %1194 = vmatpush1.bf16.xpose.msra.mxu0 0
        %1195 = vmatprep.subr.bf16.mxu0 0
        %1196 = vmatpush1.bf16.xpose.msra.mxu0 0
        %1197 = vmatprep.subr.bf16.mxu0 0
        %1198 = vmatpush1.bf16.xpose.msra.mxu0 0
        %1199 = vmatprep.subr.bf16.mxu0 0
        %1200 = vmatpush1.bf16.xpose.msra.mxu0 0
        %1201 = vmatprep.subr.bf16.mxu0 0
        %1202 = vmatpush1.bf16.xpose.msra.mxu0 0
        %1203 = vmatprep.subr.bf16.mxu0 0
        %1204 = vmatpush1.bf16.xpose.msra.mxu0 0
        %1205 = vmatprep.subr.bf16.mxu0 0
        %1206 = vmatpush1.bf16.xpose.msra.mxu0 0
        %1207 = vmatprep.subr.bf16.mxu0 0
        %1208 = vmatpush1.bf16.xpose.msra.mxu0 0
        %1209 = vmatprep.subr.bf16.mxu0 0
        %1210 = vmatpush1.bf16.xpose.msra.mxu0 0
        %1211 = vmatprep.subr.bf16.mxu0 0
        %1212 = vmatpush1.bf16.xpose.msra.mxu0 0
        %1213 = vmatprep.subr.bf16.mxu0 0
        %1214 = vmatpush1.bf16.xpose.msra.mxu0 0
        %1215 = vmatprep.subr.bf16.mxu0 0
        %1216 = vmatpush1.bf16.xpose.msra.mxu0 0
        %1217 = vmatprep.subr.bf16.mxu0 0
        %1218 = vmatpush1.bf16.xpose.msra.mxu0 0
        %1219 = vmatprep.subr.bf16.mxu0 0
        %1220 = vmatpush1.bf16.xpose.msra.mxu0 0
        %1221 = vmatprep.mubr.bf16.mxu0 0
        %1222 = vmatmul.mubr.bf16.gmra.mrb[0].mxu0 %v1184
        %v1223 = vpop.f32.mrb[0].mxu0
        %v1224 = vadd.f32 %v954, %v1223
        %v1225 = vpop.f32.mrb[0].mxu0
        %v1226 = vpop.f32.mrb[0].mxu0
        %v1227 = vpop.f32.mrb[0].mxu0
        %1228 = vdwg.mxu0
        %1229 = vrot.lane.b32.xlu0 %v948, 120
        %v1230 = vpop.permute.xlu0 %1229
        %1231 = vrot.lane.b32.xlu0 %v948, 88
        %v1232 = vpop.permute.xlu0 %1231
        %v1234 = vsel %vm963, %v1230, 0
        %v1237 = vsel %vm963, %v1232, 0
        %1239 = vmatprep.subr.bf16.mxu0 0
        %1240 = vmatpush1.bf16.xpose.msra.mxu0 %v1237
        %1241 = vmatprep.subr.bf16.mxu0 0
        %1242 = vmatpush1.bf16.xpose.msra.mxu0 0
        %1243 = vmatprep.subr.bf16.mxu0 0
        %1244 = vmatpush1.bf16.xpose.msra.mxu0 0
        %1245 = vmatprep.subr.bf16.mxu0 0
        %1246 = vmatpush1.bf16.xpose.msra.mxu0 0
        %1247 = vmatprep.subr.bf16.mxu0 0
        %1248 = vmatpush1.bf16.xpose.msra.mxu0 0
        %1249 = vmatprep.subr.bf16.mxu0 0
        %1250 = vmatpush1.bf16.xpose.msra.mxu0 0
        %1251 = vmatprep.subr.bf16.mxu0 0
        %1252 = vmatpush1.bf16.xpose.msra.mxu0 0
        %1253 = vmatprep.subr.bf16.mxu0 0
        %1254 = vmatpush1.bf16.xpose.msra.mxu0 0
        %1255 = vmatprep.subr.bf16.mxu0 0
        %1256 = vmatpush1.bf16.xpose.msra.mxu0 0
        %1257 = vmatprep.subr.bf16.mxu0 0
        %1258 = vmatpush1.bf16.xpose.msra.mxu0 0
        %1259 = vmatprep.subr.bf16.mxu0 0
        %1260 = vmatpush1.bf16.xpose.msra.mxu0 0
        %1261 = vmatprep.subr.bf16.mxu0 0
        %1262 = vmatpush1.bf16.xpose.msra.mxu0 0
        %1263 = vmatprep.subr.bf16.mxu0 0
        %1264 = vmatpush1.bf16.xpose.msra.mxu0 0
        %1265 = vmatprep.subr.bf16.mxu0 0
        %1266 = vmatpush1.bf16.xpose.msra.mxu0 0
        %1267 = vmatprep.subr.bf16.mxu0 0
        %1268 = vmatpush1.bf16.xpose.msra.mxu0 0
        %1269 = vmatprep.subr.bf16.mxu0 0
        %1270 = vmatpush1.bf16.xpose.msra.mxu0 0
        %1271 = vmatprep.mubr.bf16.mxu0 0
        %1272 = vmatmul.mubr.bf16.gmra.mrb[0].mxu0 %v1234
        %v1273 = vpop.f32.mrb[0].mxu0
        %v1274 = vadd.f32 %v958, %v1273
        %v1275 = vpop.f32.mrb[0].mxu0
        %v1276 = vpop.f32.mrb[0].mxu0
        %v1277 = vpop.f32.mrb[0].mxu0
        %1278 = vdwg.mxu0
        %v1279 = vsel %vm963, %v1224, -inf
        %1280 = vmax.xlane.f32.xlu0 %v1279
        %v1281 = vpop.xlane.xlu0 %1280
        %v1282 = vsel %vm963, %v1274, -inf
        %1283 = vmax.xlane.f32.xlu0 %v1282
        %v1284 = vpop.xlane.xlu0 %1283
        %v1285 = vsub.f32 %v1224, %v1281
        %v1286 = vsub.f32 %v1274, %v1284
        %v1287 = vmul.f32 %v1285, 1.442695
        %v1288 = vpow.pop %v1287
        %v1289 = vmul.f32 %v1286, 1.442695
        %v1290 = vpow.pop %v1289
        %v1291 = vsel %vm963, %v1288, 0.0
        %1292 = vadd.xlane.f32.xlu0 %v1291
        %v1293 = vpop.xlane.xlu0 %1292
        %v1294 = vsel %vm963, %v1290, 0.0
        %1295 = vadd.xlane.f32.xlu0 %v1294
        %v1296 = vpop.xlane.xlu0 %1295
        %v1297 = vrcp.pop %v1293
        %v1298 = vrcp.pop %v1296
        %v1299 = vmul.f32 %v1288, %v1297
        %v1300 = vmul.f32 %v1290, %v1298
        %v1301 = vpack.c.bf16 %v1299, %v1299
        %v1302 = vpack.c.bf16 %v1300, %v1300
        %1303 = vrot.lane.b32.xlu0 %v947, 56
        %v1304 = vpop.permute.xlu0 %1303
        %v1306 = vsel %vm963, %v1301, 0
        %v1309 = vsel %vm1087, %v1304, 0
        %1311 = vmatprep.subr.bf16.mxu0 0
        %1312 = vmatpush1.bf16.msra.mxu0 %v1309
        %1313 = vmatprep.subr.bf16.mxu0 0
        %1314 = vmatpush1.bf16.msra.mxu0 0
        %1315 = vmatprep.subr.bf16.mxu0 0
        %1316 = vmatpush1.bf16.msra.mxu0 0
        %1317 = vmatprep.subr.bf16.mxu0 0
        %1318 = vmatpush1.bf16.msra.mxu0 0
        %1319 = vmatprep.subr.bf16.mxu0 0
        %1320 = vmatpush1.bf16.msra.mxu0 0
        %1321 = vmatprep.subr.bf16.mxu0 0
        %1322 = vmatpush1.bf16.msra.mxu0 0
        %1323 = vmatprep.subr.bf16.mxu0 0
        %1324 = vmatpush1.bf16.msra.mxu0 0
        %1325 = vmatprep.subr.bf16.mxu0 0
        %1326 = vmatpush1.bf16.msra.mxu0 0
        %1327 = vmatprep.subr.bf16.mxu0 0
        %1328 = vmatpush1.bf16.msra.mxu0 0
        %1329 = vmatprep.subr.bf16.mxu0 0
        %1330 = vmatpush1.bf16.msra.mxu0 0
        %1331 = vmatprep.subr.bf16.mxu0 0
        %1332 = vmatpush1.bf16.msra.mxu0 0
        %1333 = vmatprep.subr.bf16.mxu0 0
        %1334 = vmatpush1.bf16.msra.mxu0 0
        %1335 = vmatprep.subr.bf16.mxu0 0
        %1336 = vmatpush1.bf16.msra.mxu0 0
        %1337 = vmatprep.subr.bf16.mxu0 0
        %1338 = vmatpush1.bf16.msra.mxu0 0
        %1339 = vmatprep.subr.bf16.mxu0 0
        %1340 = vmatpush1.bf16.msra.mxu0 0
        %1341 = vmatprep.subr.bf16.mxu0 0
        %1342 = vmatpush1.bf16.msra.mxu0 0
        %1343 = vmatprep.mubr.bf16.mxu0 0
        %1344 = vmatmul.mubr.bf16.gmra.mrb[0].mxu0 %v1306
        %v1345 = vpop.f32.mrb[0].mxu0
        %v1346 = vadd.f32 0.0, %v1345
        %v1347 = vpop.f32.mrb[0].mxu0
        %v1348 = vpop.f32.mrb[0].mxu0
        %v1349 = vpop.f32.mrb[0].mxu0
        %1350 = vdwg.mxu0
        %1351 = vrot.lane.b32.xlu0 %v948, 56
        %v1352 = vpop.permute.xlu0 %1351
        %v1354 = vsel %vm963, %v1302, 0
        %v1357 = vsel %vm1087, %v1352, 0
        %1359 = vmatprep.subr.bf16.mxu0 0
        %1360 = vmatpush1.bf16.msra.mxu0 %v1357
        %1361 = vmatprep.subr.bf16.mxu0 0
        %1362 = vmatpush1.bf16.msra.mxu0 0
        %1363 = vmatprep.subr.bf16.mxu0 0
        %1364 = vmatpush1.bf16.msra.mxu0 0
        %1365 = vmatprep.subr.bf16.mxu0 0
        %1366 = vmatpush1.bf16.msra.mxu0 0
        %1367 = vmatprep.subr.bf16.mxu0 0
        %1368 = vmatpush1.bf16.msra.mxu0 0
        %1369 = vmatprep.subr.bf16.mxu0 0
        %1370 = vmatpush1.bf16.msra.mxu0 0
        %1371 = vmatprep.subr.bf16.mxu0 0
        %1372 = vmatpush1.bf16.msra.mxu0 0
        %1373 = vmatprep.subr.bf16.mxu0 0
        %1374 = vmatpush1.bf16.msra.mxu0 0
        %1375 = vmatprep.subr.bf16.mxu0 0
        %1376 = vmatpush1.bf16.msra.mxu0 0
        %1377 = vmatprep.subr.bf16.mxu0 0
        %1378 = vmatpush1.bf16.msra.mxu0 0
        %1379 = vmatprep.subr.bf16.mxu0 0
        %1380 = vmatpush1.bf16.msra.mxu0 0
        %1381 = vmatprep.subr.bf16.mxu0 0
        %1382 = vmatpush1.bf16.msra.mxu0 0
        %1383 = vmatprep.subr.bf16.mxu0 0
        %1384 = vmatpush1.bf16.msra.mxu0 0
        %1385 = vmatprep.subr.bf16.mxu0 0
        %1386 = vmatpush1.bf16.msra.mxu0 0
        %1387 = vmatprep.subr.bf16.mxu0 0
        %1388 = vmatpush1.bf16.msra.mxu0 0
        %1389 = vmatprep.subr.bf16.mxu0 0
        %1390 = vmatpush1.bf16.msra.mxu0 0
        %1391 = vmatprep.mubr.bf16.mxu0 0
        %1392 = vmatmul.mubr.bf16.gmra.mrb[0].mxu0 %v1354
        %v1393 = vpop.f32.mrb[0].mxu0
        %v1394 = vadd.f32 0.0, %v1393
        %v1395 = vpop.f32.mrb[0].mxu0
        %v1396 = vpop.f32.mrb[0].mxu0
        %v1397 = vpop.f32.mrb[0].mxu0
        %1398 = vdwg.mxu0
        %1399 = vrot.lane.b32.xlu0 %v947, 112
        %v1400 = vpop.permute.xlu0 %1399
        %1401 = vrot.lane.b32.xlu0 %v947, 80
        %v1402 = vpop.permute.xlu0 %1401
        %v1404 = vsel %vm963, %v1400, 0
        %v1407 = vsel %vm963, %v1402, 0
        %1409 = vmatprep.subr.bf16.mxu0 0
        %1410 = vmatpush1.bf16.xpose.msra.mxu0 %v1407
        %1411 = vmatprep.subr.bf16.mxu0 0
        %1412 = vmatpush1.bf16.xpose.msra.mxu0 0
        %1413 = vmatprep.subr.bf16.mxu0 0
        %1414 = vmatpush1.bf16.xpose.msra.mxu0 0
        %1415 = vmatprep.subr.bf16.mxu0 0
        %1416 = vmatpush1.bf16.xpose.msra.mxu0 0
        %1417 = vmatprep.subr.bf16.mxu0 0
        %1418 = vmatpush1.bf16.xpose.msra.mxu0 0
        %1419 = vmatprep.subr.bf16.mxu0 0
        %1420 = vmatpush1.bf16.xpose.msra.mxu0 0
        %1421 = vmatprep.subr.bf16.mxu0 0
        %1422 = vmatpush1.bf16.xpose.msra.mxu0 0
        %1423 = vmatprep.subr.bf16.mxu0 0
        %1424 = vmatpush1.bf16.xpose.msra.mxu0 0
        %1425 = vmatprep.subr.bf16.mxu0 0
        %1426 = vmatpush1.bf16.xpose.msra.mxu0 0
        %1427 = vmatprep.subr.bf16.mxu0 0
        %1428 = vmatpush1.bf16.xpose.msra.mxu0 0
        %1429 = vmatprep.subr.bf16.mxu0 0
        %1430 = vmatpush1.bf16.xpose.msra.mxu0 0
        %1431 = vmatprep.subr.bf16.mxu0 0
        %1432 = vmatpush1.bf16.xpose.msra.mxu0 0
        %1433 = vmatprep.subr.bf16.mxu0 0
        %1434 = vmatpush1.bf16.xpose.msra.mxu0 0
        %1435 = vmatprep.subr.bf16.mxu0 0
        %1436 = vmatpush1.bf16.xpose.msra.mxu0 0
        %1437 = vmatprep.subr.bf16.mxu0 0
        %1438 = vmatpush1.bf16.xpose.msra.mxu0 0
        %1439 = vmatprep.subr.bf16.mxu0 0
        %1440 = vmatpush1.bf16.xpose.msra.mxu0 0
        %1441 = vmatprep.mubr.bf16.mxu0 0
        %1442 = vmatmul.mubr.bf16.gmra.mrb[0].mxu0 %v1404
        %v1443 = vpop.f32.mrb[0].mxu0
        %v1444 = vadd.f32 %v954, %v1443
        %v1445 = vpop.f32.mrb[0].mxu0
        %v1446 = vpop.f32.mrb[0].mxu0
        %v1447 = vpop.f32.mrb[0].mxu0
        %1448 = vdwg.mxu0
        %1449 = vrot.lane.b32.xlu0 %v948, 112
        %v1450 = vpop.permute.xlu0 %1449
        %1451 = vrot.lane.b32.xlu0 %v948, 80
        %v1452 = vpop.permute.xlu0 %1451
        %v1454 = vsel %vm963, %v1450, 0
        %v1457 = vsel %vm963, %v1452, 0
        %1459 = vmatprep.subr.bf16.mxu0 0
        %1460 = vmatpush1.bf16.xpose.msra.mxu0 %v1457
        %1461 = vmatprep.subr.bf16.mxu0 0
        %1462 = vmatpush1.bf16.xpose.msra.mxu0 0
        %1463 = vmatprep.subr.bf16.mxu0 0
        %1464 = vmatpush1.bf16.xpose.msra.mxu0 0
        %1465 = vmatprep.subr.bf16.mxu0 0
        %1466 = vmatpush1.bf16.xpose.msra.mxu0 0
        %1467 = vmatprep.subr.bf16.mxu0 0
        %1468 = vmatpush1.bf16.xpose.msra.mxu0 0
        %1469 = vmatprep.subr.bf16.mxu0 0
        %1470 = vmatpush1.bf16.xpose.msra.mxu0 0
        %1471 = vmatprep.subr.bf16.mxu0 0
        %1472 = vmatpush1.bf16.xpose.msra.mxu0 0
        %1473 = vmatprep.subr.bf16.mxu0 0
        %1474 = vmatpush1.bf16.xpose.msra.mxu0 0
        %1475 = vmatprep.subr.bf16.mxu0 0
        %1476 = vmatpush1.bf16.xpose.msra.mxu0 0
        %1477 = vmatprep.subr.bf16.mxu0 0
        %1478 = vmatpush1.bf16.xpose.msra.mxu0 0
        %1479 = vmatprep.subr.bf16.mxu0 0
        %1480 = vmatpush1.bf16.xpose.msra.mxu0 0
        %1481 = vmatprep.subr.bf16.mxu0 0
        %1482 = vmatpush1.bf16.xpose.msra.mxu0 0
        %1483 = vmatprep.subr.bf16.mxu0 0
        %1484 = vmatpush1.bf16.xpose.msra.mxu0 0
        %1485 = vmatprep.subr.bf16.mxu0 0
        %1486 = vmatpush1.bf16.xpose.msra.mxu0 0
        %1487 = vmatprep.subr.bf16.mxu0 0
        %1488 = vmatpush1.bf16.xpose.msra.mxu0 0
        %1489 = vmatprep.subr.bf16.mxu0 0
        %1490 = vmatpush1.bf16.xpose.msra.mxu0 0
        %1491 = vmatprep.mubr.bf16.mxu0 0
        %1492 = vmatmul.mubr.bf16.gmra.mrb[0].mxu0 %v1454
        %v1493 = vpop.f32.mrb[0].mxu0
        %v1494 = vadd.f32 %v958, %v1493
        %v1495 = vpop.f32.mrb[0].mxu0
        %v1496 = vpop.f32.mrb[0].mxu0
        %v1497 = vpop.f32.mrb[0].mxu0
        %1498 = vdwg.mxu0
        %v1499 = vsel %vm963, %v1444, -inf
        %1500 = vmax.xlane.f32.xlu0 %v1499
        %v1501 = vpop.xlane.xlu0 %1500
        %v1502 = vsel %vm963, %v1494, -inf
        %1503 = vmax.xlane.f32.xlu0 %v1502
        %v1504 = vpop.xlane.xlu0 %1503
        %v1505 = vsub.f32 %v1444, %v1501
        %v1506 = vsub.f32 %v1494, %v1504
        %v1507 = vmul.f32 %v1505, 1.442695
        %v1508 = vpow.pop %v1507
        %v1509 = vmul.f32 %v1506, 1.442695
        %v1510 = vpow.pop %v1509
        %v1511 = vsel %vm963, %v1508, 0.0
        %1512 = vadd.xlane.f32.xlu0 %v1511
        %v1513 = vpop.xlane.xlu0 %1512
        %v1514 = vsel %vm963, %v1510, 0.0
        %1515 = vadd.xlane.f32.xlu0 %v1514
        %v1516 = vpop.xlane.xlu0 %1515
        %v1517 = vrcp.pop %v1513
        %v1518 = vrcp.pop %v1516
        %v1519 = vmul.f32 %v1508, %v1517
        %v1520 = vmul.f32 %v1510, %v1518
        %v1521 = vpack.c.bf16 %v1519, %v1519
        %v1522 = vpack.c.bf16 %v1520, %v1520
        %1523 = vrot.lane.b32.xlu0 %v947, 48
        %v1524 = vpop.permute.xlu0 %1523
        %v1526 = vsel %vm963, %v1521, 0
        %v1529 = vsel %vm1087, %v1524, 0
        %1531 = vmatprep.subr.bf16.mxu0 0
        %1532 = vmatpush1.bf16.msra.mxu0 %v1529
        %1533 = vmatprep.subr.bf16.mxu0 0
        %1534 = vmatpush1.bf16.msra.mxu0 0
        %1535 = vmatprep.subr.bf16.mxu0 0
        %1536 = vmatpush1.bf16.msra.mxu0 0
        %1537 = vmatprep.subr.bf16.mxu0 0
        %1538 = vmatpush1.bf16.msra.mxu0 0
        %1539 = vmatprep.subr.bf16.mxu0 0
        %1540 = vmatpush1.bf16.msra.mxu0 0
        %1541 = vmatprep.subr.bf16.mxu0 0
        %1542 = vmatpush1.bf16.msra.mxu0 0
        %1543 = vmatprep.subr.bf16.mxu0 0
        %1544 = vmatpush1.bf16.msra.mxu0 0
        %1545 = vmatprep.subr.bf16.mxu0 0
        %1546 = vmatpush1.bf16.msra.mxu0 0
        %1547 = vmatprep.subr.bf16.mxu0 0
        %1548 = vmatpush1.bf16.msra.mxu0 0
        %1549 = vmatprep.subr.bf16.mxu0 0
        %1550 = vmatpush1.bf16.msra.mxu0 0
        %1551 = vmatprep.subr.bf16.mxu0 0
        %1552 = vmatpush1.bf16.msra.mxu0 0
        %1553 = vmatprep.subr.bf16.mxu0 0
        %1554 = vmatpush1.bf16.msra.mxu0 0
        %1555 = vmatprep.subr.bf16.mxu0 0
        %1556 = vmatpush1.bf16.msra.mxu0 0
        %1557 = vmatprep.subr.bf16.mxu0 0
        %1558 = vmatpush1.bf16.msra.mxu0 0
        %1559 = vmatprep.subr.bf16.mxu0 0
        %1560 = vmatpush1.bf16.msra.mxu0 0
        %1561 = vmatprep.subr.bf16.mxu0 0
        %1562 = vmatpush1.bf16.msra.mxu0 0
        %1563 = vmatprep.mubr.bf16.mxu0 0
        %1564 = vmatmul.mubr.bf16.gmra.mrb[0].mxu0 %v1526
        %v1565 = vpop.f32.mrb[0].mxu0
        %v1566 = vadd.f32 0.0, %v1565
        %v1567 = vpop.f32.mrb[0].mxu0
        %v1568 = vpop.f32.mrb[0].mxu0
        %v1569 = vpop.f32.mrb[0].mxu0
        %1570 = vdwg.mxu0
        %1571 = vrot.lane.b32.xlu0 %v948, 48
        %v1572 = vpop.permute.xlu0 %1571
        %v1574 = vsel %vm963, %v1522, 0
        %v1577 = vsel %vm1087, %v1572, 0
        %1579 = vmatprep.subr.bf16.mxu0 0
        %1580 = vmatpush1.bf16.msra.mxu0 %v1577
        %1581 = vmatprep.subr.bf16.mxu0 0
        %1582 = vmatpush1.bf16.msra.mxu0 0
        %1583 = vmatprep.subr.bf16.mxu0 0
        %1584 = vmatpush1.bf16.msra.mxu0 0
        %1585 = vmatprep.subr.bf16.mxu0 0
        %1586 = vmatpush1.bf16.msra.mxu0 0
        %1587 = vmatprep.subr.bf16.mxu0 0
        %1588 = vmatpush1.bf16.msra.mxu0 0
        %1589 = vmatprep.subr.bf16.mxu0 0
        %1590 = vmatpush1.bf16.msra.mxu0 0
        %1591 = vmatprep.subr.bf16.mxu0 0
        %1592 = vmatpush1.bf16.msra.mxu0 0
        %1593 = vmatprep.subr.bf16.mxu0 0
        %1594 = vmatpush1.bf16.msra.mxu0 0
        %1595 = vmatprep.subr.bf16.mxu0 0
        %1596 = vmatpush1.bf16.msra.mxu0 0
        %1597 = vmatprep.subr.bf16.mxu0 0
        %1598 = vmatpush1.bf16.msra.mxu0 0
        %1599 = vmatprep.subr.bf16.mxu0 0
        %1600 = vmatpush1.bf16.msra.mxu0 0
        %1601 = vmatprep.subr.bf16.mxu0 0
        %1602 = vmatpush1.bf16.msra.mxu0 0
        %1603 = vmatprep.subr.bf16.mxu0 0
        %1604 = vmatpush1.bf16.msra.mxu0 0
        %1605 = vmatprep.subr.bf16.mxu0 0
        %1606 = vmatpush1.bf16.msra.mxu0 0
        %1607 = vmatprep.subr.bf16.mxu0 0
        %1608 = vmatpush1.bf16.msra.mxu0 0
        %1609 = vmatprep.subr.bf16.mxu0 0
        %1610 = vmatpush1.bf16.msra.mxu0 0
        %1611 = vmatprep.mubr.bf16.mxu0 0
        %1612 = vmatmul.mubr.bf16.gmra.mrb[0].mxu0 %v1574
        %v1613 = vpop.f32.mrb[0].mxu0
        %v1614 = vadd.f32 0.0, %v1613
        %v1615 = vpop.f32.mrb[0].mxu0
        %v1616 = vpop.f32.mrb[0].mxu0
        %v1617 = vpop.f32.mrb[0].mxu0
        %1618 = vdwg.mxu0
        %1619 = vrot.lane.b32.xlu0 %v947, 104
        %v1620 = vpop.permute.xlu0 %1619
        %1621 = vrot.lane.b32.xlu0 %v947, 72
        %v1622 = vpop.permute.xlu0 %1621
        %v1624 = vsel %vm963, %v1620, 0
        %v1627 = vsel %vm963, %v1622, 0
        %1629 = vmatprep.subr.bf16.mxu0 0
        %1630 = vmatpush1.bf16.xpose.msra.mxu0 %v1627
        %1631 = vmatprep.subr.bf16.mxu0 0
        %1632 = vmatpush1.bf16.xpose.msra.mxu0 0
        %1633 = vmatprep.subr.bf16.mxu0 0
        %1634 = vmatpush1.bf16.xpose.msra.mxu0 0
        %1635 = vmatprep.subr.bf16.mxu0 0
        %1636 = vmatpush1.bf16.xpose.msra.mxu0 0
        %1637 = vmatprep.subr.bf16.mxu0 0
        %1638 = vmatpush1.bf16.xpose.msra.mxu0 0
        %1639 = vmatprep.subr.bf16.mxu0 0
        %1640 = vmatpush1.bf16.xpose.msra.mxu0 0
        %1641 = vmatprep.subr.bf16.mxu0 0
        %1642 = vmatpush1.bf16.xpose.msra.mxu0 0
        %1643 = vmatprep.subr.bf16.mxu0 0
        %1644 = vmatpush1.bf16.xpose.msra.mxu0 0
        %1645 = vmatprep.subr.bf16.mxu0 0
        %1646 = vmatpush1.bf16.xpose.msra.mxu0 0
        %1647 = vmatprep.subr.bf16.mxu0 0
        %1648 = vmatpush1.bf16.xpose.msra.mxu0 0
        %1649 = vmatprep.subr.bf16.mxu0 0
        %1650 = vmatpush1.bf16.xpose.msra.mxu0 0
        %1651 = vmatprep.subr.bf16.mxu0 0
        %1652 = vmatpush1.bf16.xpose.msra.mxu0 0
        %1653 = vmatprep.subr.bf16.mxu0 0
        %1654 = vmatpush1.bf16.xpose.msra.mxu0 0
        %1655 = vmatprep.subr.bf16.mxu0 0
        %1656 = vmatpush1.bf16.xpose.msra.mxu0 0
        %1657 = vmatprep.subr.bf16.mxu0 0
        %1658 = vmatpush1.bf16.xpose.msra.mxu0 0
        %1659 = vmatprep.subr.bf16.mxu0 0
        %1660 = vmatpush1.bf16.xpose.msra.mxu0 0
        %1661 = vmatprep.mubr.bf16.mxu0 0
        %1662 = vmatmul.mubr.bf16.gmra.mrb[0].mxu0 %v1624
        %v1663 = vpop.f32.mrb[0].mxu0
        %v1664 = vadd.f32 %v954, %v1663
        %v1665 = vpop.f32.mrb[0].mxu0
        %v1666 = vpop.f32.mrb[0].mxu0
        %v1667 = vpop.f32.mrb[0].mxu0
        %1668 = vdwg.mxu0
        %1669 = vrot.lane.b32.xlu0 %v948, 104
        %v1670 = vpop.permute.xlu0 %1669
        %1671 = vrot.lane.b32.xlu0 %v948, 72
        %v1672 = vpop.permute.xlu0 %1671
        %v1674 = vsel %vm963, %v1670, 0
        %v1677 = vsel %vm963, %v1672, 0
        %1679 = vmatprep.subr.bf16.mxu0 0
        %1680 = vmatpush1.bf16.xpose.msra.mxu0 %v1677
        %1681 = vmatprep.subr.bf16.mxu0 0
        %1682 = vmatpush1.bf16.xpose.msra.mxu0 0
        %1683 = vmatprep.subr.bf16.mxu0 0
        %1684 = vmatpush1.bf16.xpose.msra.mxu0 0
        %1685 = vmatprep.subr.bf16.mxu0 0
        %1686 = vmatpush1.bf16.xpose.msra.mxu0 0
        %1687 = vmatprep.subr.bf16.mxu0 0
        %1688 = vmatpush1.bf16.xpose.msra.mxu0 0
        %1689 = vmatprep.subr.bf16.mxu0 0
        %1690 = vmatpush1.bf16.xpose.msra.mxu0 0
        %1691 = vmatprep.subr.bf16.mxu0 0
        %1692 = vmatpush1.bf16.xpose.msra.mxu0 0
        %1693 = vmatprep.subr.bf16.mxu0 0
        %1694 = vmatpush1.bf16.xpose.msra.mxu0 0
        %1695 = vmatprep.subr.bf16.mxu0 0
        %1696 = vmatpush1.bf16.xpose.msra.mxu0 0
        %1697 = vmatprep.subr.bf16.mxu0 0
        %1698 = vmatpush1.bf16.xpose.msra.mxu0 0
        %1699 = vmatprep.subr.bf16.mxu0 0
        %1700 = vmatpush1.bf16.xpose.msra.mxu0 0
        %1701 = vmatprep.subr.bf16.mxu0 0
        %1702 = vmatpush1.bf16.xpose.msra.mxu0 0
        %1703 = vmatprep.subr.bf16.mxu0 0
        %1704 = vmatpush1.bf16.xpose.msra.mxu0 0
        %1705 = vmatprep.subr.bf16.mxu0 0
        %1706 = vmatpush1.bf16.xpose.msra.mxu0 0
        %1707 = vmatprep.subr.bf16.mxu0 0
        %1708 = vmatpush1.bf16.xpose.msra.mxu0 0
        %1709 = vmatprep.subr.bf16.mxu0 0
        %1710 = vmatpush1.bf16.xpose.msra.mxu0 0
        %1711 = vmatprep.mubr.bf16.mxu0 0
        %1712 = vmatmul.mubr.bf16.gmra.mrb[0].mxu0 %v1674
        %v1713 = vpop.f32.mrb[0].mxu0
        %v1714 = vadd.f32 %v958, %v1713
        %v1715 = vpop.f32.mrb[0].mxu0
        %v1716 = vpop.f32.mrb[0].mxu0
        %v1717 = vpop.f32.mrb[0].mxu0
        %1718 = vdwg.mxu0
        %v1719 = vsel %vm963, %v1664, -inf
        %1720 = vmax.xlane.f32.xlu0 %v1719
        %v1721 = vpop.xlane.xlu0 %1720
        %v1722 = vsel %vm963, %v1714, -inf
        %1723 = vmax.xlane.f32.xlu0 %v1722
        %v1724 = vpop.xlane.xlu0 %1723
        %v1725 = vsub.f32 %v1664, %v1721
        %v1726 = vsub.f32 %v1714, %v1724
        %v1727 = vmul.f32 %v1725, 1.442695
        %v1728 = vpow.pop %v1727
        %v1729 = vmul.f32 %v1726, 1.442695
        %v1730 = vpow.pop %v1729
        %v1731 = vsel %vm963, %v1728, 0.0
        %1732 = vadd.xlane.f32.xlu0 %v1731
        %v1733 = vpop.xlane.xlu0 %1732
        %v1734 = vsel %vm963, %v1730, 0.0
        %1735 = vadd.xlane.f32.xlu0 %v1734
        %v1736 = vpop.xlane.xlu0 %1735
        %v1737 = vrcp.pop %v1733
        %v1738 = vrcp.pop %v1736
        %v1739 = vmul.f32 %v1728, %v1737
        %v1740 = vmul.f32 %v1730, %v1738
        %v1741 = vpack.c.bf16 %v1739, %v1739
        %v1742 = vpack.c.bf16 %v1740, %v1740
        %1743 = vrot.lane.b32.xlu0 %v947, 40
        %v1744 = vpop.permute.xlu0 %1743
        %v1746 = vsel %vm963, %v1741, 0
        %v1749 = vsel %vm1087, %v1744, 0
        %1751 = vmatprep.subr.bf16.mxu0 0
        %1752 = vmatpush1.bf16.msra.mxu0 %v1749
        %1753 = vmatprep.subr.bf16.mxu0 0
        %1754 = vmatpush1.bf16.msra.mxu0 0
        %1755 = vmatprep.subr.bf16.mxu0 0
        %1756 = vmatpush1.bf16.msra.mxu0 0
        %1757 = vmatprep.subr.bf16.mxu0 0
        %1758 = vmatpush1.bf16.msra.mxu0 0
        %1759 = vmatprep.subr.bf16.mxu0 0
        %1760 = vmatpush1.bf16.msra.mxu0 0
        %1761 = vmatprep.subr.bf16.mxu0 0
        %1762 = vmatpush1.bf16.msra.mxu0 0
        %1763 = vmatprep.subr.bf16.mxu0 0
        %1764 = vmatpush1.bf16.msra.mxu0 0
        %1765 = vmatprep.subr.bf16.mxu0 0
        %1766 = vmatpush1.bf16.msra.mxu0 0
        %1767 = vmatprep.subr.bf16.mxu0 0
        %1768 = vmatpush1.bf16.msra.mxu0 0
        %1769 = vmatprep.subr.bf16.mxu0 0
        %1770 = vmatpush1.bf16.msra.mxu0 0
        %1771 = vmatprep.subr.bf16.mxu0 0
        %1772 = vmatpush1.bf16.msra.mxu0 0
        %1773 = vmatprep.subr.bf16.mxu0 0
        %1774 = vmatpush1.bf16.msra.mxu0 0
        %1775 = vmatprep.subr.bf16.mxu0 0
        %1776 = vmatpush1.bf16.msra.mxu0 0
        %1777 = vmatprep.subr.bf16.mxu0 0
        %1778 = vmatpush1.bf16.msra.mxu0 0
        %1779 = vmatprep.subr.bf16.mxu0 0
        %1780 = vmatpush1.bf16.msra.mxu0 0
        %1781 = vmatprep.subr.bf16.mxu0 0
        %1782 = vmatpush1.bf16.msra.mxu0 0
        %1783 = vmatprep.mubr.bf16.mxu0 0
        %1784 = vmatmul.mubr.bf16.gmra.mrb[0].mxu0 %v1746
        %v1785 = vpop.f32.mrb[0].mxu0
        %v1786 = vadd.f32 0.0, %v1785
        %v1787 = vpop.f32.mrb[0].mxu0
        %v1788 = vpop.f32.mrb[0].mxu0
        %v1789 = vpop.f32.mrb[0].mxu0
        %1790 = vdwg.mxu0
        %1791 = vrot.lane.b32.xlu0 %v948, 40
        %v1792 = vpop.permute.xlu0 %1791
        %v1794 = vsel %vm963, %v1742, 0
        %v1797 = vsel %vm1087, %v1792, 0
        %1799 = vmatprep.subr.bf16.mxu0 0
        %1800 = vmatpush1.bf16.msra.mxu0 %v1797
        %1801 = vmatprep.subr.bf16.mxu0 0
        %1802 = vmatpush1.bf16.msra.mxu0 0
        %1803 = vmatprep.subr.bf16.mxu0 0
        %1804 = vmatpush1.bf16.msra.mxu0 0
        %1805 = vmatprep.subr.bf16.mxu0 0
        %1806 = vmatpush1.bf16.msra.mxu0 0
        %1807 = vmatprep.subr.bf16.mxu0 0
        %1808 = vmatpush1.bf16.msra.mxu0 0
        %1809 = vmatprep.subr.bf16.mxu0 0
        %1810 = vmatpush1.bf16.msra.mxu0 0
        %1811 = vmatprep.subr.bf16.mxu0 0
        %1812 = vmatpush1.bf16.msra.mxu0 0
        %1813 = vmatprep.subr.bf16.mxu0 0
        %1814 = vmatpush1.bf16.msra.mxu0 0
        %1815 = vmatprep.subr.bf16.mxu0 0
        %1816 = vmatpush1.bf16.msra.mxu0 0
        %1817 = vmatprep.subr.bf16.mxu0 0
        %1818 = vmatpush1.bf16.msra.mxu0 0
        %1819 = vmatprep.subr.bf16.mxu0 0
        %1820 = vmatpush1.bf16.msra.mxu0 0
        %1821 = vmatprep.subr.bf16.mxu0 0
        %1822 = vmatpush1.bf16.msra.mxu0 0
        %1823 = vmatprep.subr.bf16.mxu0 0
        %1824 = vmatpush1.bf16.msra.mxu0 0
        %1825 = vmatprep.subr.bf16.mxu0 0
        %1826 = vmatpush1.bf16.msra.mxu0 0
        %1827 = vmatprep.subr.bf16.mxu0 0
        %1828 = vmatpush1.bf16.msra.mxu0 0
        %1829 = vmatprep.subr.bf16.mxu0 0
        %1830 = vmatpush1.bf16.msra.mxu0 0
        %1831 = vmatprep.mubr.bf16.mxu0 0
        %1832 = vmatmul.mubr.bf16.gmra.mrb[0].mxu0 %v1794
        %v1833 = vpop.f32.mrb[0].mxu0
        %v1834 = vadd.f32 0.0, %v1833
        %v1835 = vpop.f32.mrb[0].mxu0
        %v1836 = vpop.f32.mrb[0].mxu0
        %v1837 = vpop.f32.mrb[0].mxu0
        %1838 = vdwg.mxu0
        %1841 = vrot.lane.b32.xlu0 %v1346, 8
        %v1842 = vpop.permute.xlu0 %1841
        %1843 = vrot.lane.b32.xlu0 %v1394, 8
        %v1844 = vpop.permute.xlu0 %1843
        %1849 = vrot.lane.b32.xlu0 %v1566, 16
        %v1850 = vpop.permute.xlu0 %1849
        %1851 = vrot.lane.b32.xlu0 %v1614, 16
        %v1852 = vpop.permute.xlu0 %1851
        %1857 = vrot.lane.b32.xlu0 %v1786, 24
        %v1858 = vpop.permute.xlu0 %1857
        %1859 = vrot.lane.b32.xlu0 %v1834, 24
        %v1860 = vpop.permute.xlu0 %1859
        %v1863 = vsel %vm963, %v1126, %v1842
        %v1864 = vsel %vm963, %v1174, %v1844
        %vm1865 = vcmask 130048
        %v1866 = vsel %vm1865, %v1863, %v1850
        %v1867 = vsel %vm1865, %v1864, %v1852
        %vm1868 = vcmask 195584
        %v1869 = vsel %vm1868, %v1866, %v1858
        %v1870 = vsel %vm1868, %v1867, %v1860
        %v1871 = vpack.c.bf16 %v1870, %v1869
        %v1872 = vlaneseq
        %v1873 = vshrl.u32 %v1872, 7
        %v1874 = vsub.s32 0, %v1873
        %v1875 = vrot.slane %v942, %v1874
        %v1880 = vunpack.c.l.b16 %v938
        %v1881 = vunpack.c.l.b16 %v939
        %v1882 = vunpack.c.l.b16 %v940
        %v1883 = vunpack.c.l.b16 %v941
        %v1884 = vpack.c.b16 %v1881, %v1880
        %v1885 = vpack.c.b16 %v1883, %v1882
        %v1889 = vsel %vm893, %v1871, 0
        %1891 = vmatprep.subr.bf16.mxu0 0
        %1892 = vmatpush1.bf16.msra.mxu0 %v1884
        %1893 = vmatprep.subr.bf16.mxu0 0
        %1894 = vmatpush1.bf16.msra.mxu0 %v1885
        %1895 = vmatprep.subr.bf16.mxu0 0
        %1896 = vmatpush1.bf16.msra.mxu0 0
        %1897 = vmatprep.subr.bf16.mxu0 0
        %1898 = vmatpush1.bf16.msra.mxu0 0
        %1899 = vmatprep.subr.bf16.mxu0 0
        %1900 = vmatpush1.bf16.msra.mxu0 0
        %1901 = vmatprep.subr.bf16.mxu0 0
        %1902 = vmatpush1.bf16.msra.mxu0 0
        %1903 = vmatprep.subr.bf16.mxu0 0
        %1904 = vmatpush1.bf16.msra.mxu0 0
        %1905 = vmatprep.subr.bf16.mxu0 0
        %1906 = vmatpush1.bf16.msra.mxu0 0
        %1907 = vmatprep.subr.bf16.mxu0 0
        %1908 = vmatpush1.bf16.msra.mxu0 0
        %1909 = vmatprep.subr.bf16.mxu0 0
        %1910 = vmatpush1.bf16.msra.mxu0 0
        %1911 = vmatprep.subr.bf16.mxu0 0
        %1912 = vmatpush1.bf16.msra.mxu0 0
        %1913 = vmatprep.subr.bf16.mxu0 0
        %1914 = vmatpush1.bf16.msra.mxu0 0
        %1915 = vmatprep.subr.bf16.mxu0 0
        %1916 = vmatpush1.bf16.msra.mxu0 0
        %1917 = vmatprep.subr.bf16.mxu0 0
        %1918 = vmatpush1.bf16.msra.mxu0 0
        %1919 = vmatprep.subr.bf16.mxu0 0
        %1920 = vmatpush1.bf16.msra.mxu0 0
        %1921 = vmatprep.subr.bf16.mxu0 0
        %1922 = vmatpush1.bf16.msra.mxu0 0
        %1923 = vmatprep.mubr.bf16.mxu0 0
        %1924 = vmatmul.mubr.bf16.gmra.mrb[0].mxu0 %v1889
        %v1925 = vpop.f32.mrb[0].mxu0
        %v1926 = vadd.f32 %v1875, %v1925
        %v1927 = vpop.f32.mrb[0].mxu0
        %v1928 = vpop.f32.mrb[0].mxu0
        %v1929 = vadd.f32 %v1875, %v1928
        %v1930 = vpop.f32.mrb[0].mxu0
        %1931 = vdwg.mxu0
        %v1932 = vadd.f32 %v837, %v1926
        %v1933 = vadd.f32 %v838, %v1929
        %v1934 = vld [vmem:[%s822 + $0x4] sm:$0x1]
        %v1935 = vld [vmem:[%s822 + $0x5] sm:$0x1]
        %v1936 = vsel %vm893, %v1932, 0.0
        %1937 = vadd.xlane.f32.xlu0 %v1936
        %v1938 = vpop.xlane.xlu0 %1937
        %v1939 = vsel %vm893, %v1933, 0.0
        %1940 = vadd.xlane.f32.xlu0 %v1939
        %v1941 = vpop.xlane.xlu0 %1940
        %v1942 = vrcp.pop 32.0
        %v1943 = vmul.f32 %v1938, %v1942
        %v1944 = vmul.f32 %v1941, %v1942
        %v1945 = vsub.f32 %v1932, %v1943
        %v1946 = vsub.f32 %v1933, %v1944
        %v1947 = vmul.f32 %v1945, %v1945
        %v1948 = vmul.f32 %v1946, %v1946
        %v1949 = vsel %vm893, %v1947, 0.0
        %1950 = vadd.xlane.f32.xlu0 %v1949
        %v1951 = vpop.xlane.xlu0 %1950
        %v1952 = vsel %vm893, %v1948, 0.0
        %1953 = vadd.xlane.f32.xlu0 %v1952
        %v1954 = vpop.xlane.xlu0 %1953
        %v1955 = vmul.f32 %v1951, %v1942
        %v1956 = vmul.f32 %v1954, %v1942
        %v1957 = vadd.f32 %v1955, 1e-05
        %v1958 = vadd.f32 %v1956, 1e-05
        %v1959 = vrsqrt.pop %v1957
        %v1960 = vrsqrt.pop %v1958
        %v1961 = vmul.f32 %v1945, %v1959
        %v1962 = vmul.f32 %v1946, %v1960
        %v1963 = vlaneseq
        %v1964 = vshrl.u32 %v1963, 7
        %v1965 = vsub.s32 0, %v1964
        %v1966 = vrot.slane %v1934, %v1965
        %v1967 = vmul.f32 %v1961, %v1966
        %v1968 = vmul.f32 %v1962, %v1966
        %v1969 = vlaneseq
        %v1970 = vshrl.u32 %v1969, 7
        %v1971 = vsub.s32 0, %v1970
        %v1972 = vrot.slane %v1935, %v1971
        %v1973 = vadd.f32 %v1967, %v1972
        %v1974 = vadd.f32 %v1968, %v1972
        %v1975 = vpack.c.bf16 %v1974, %v1973
        %v1976 = vld [vmem:[%s791] sm:$0xf]
        %v1977 = vld [vmem:[%s791 + $0x4] sm:$0xf]
        %v1978 = vld [vmem:[%s791 + $0x8] sm:$0xf]
        %v1979 = vld [vmem:[%s791 + $0xc] sm:$0xf]
        %v1980 = vld [vmem:[%s822 + $0x1] sm:$0x1]
        %v1981 = vlaneseq
        %v1982 = vshrl.u32 %v1981, 7
        %v1983 = vsub.s32 0, %v1982
        %v1984 = vrot.slane %v1980, %v1983
        %v1989 = vunpack.c.l.b16 %v1976
        %v1990 = vunpack.c.l.b16 %v1977
        %v1991 = vunpack.c.l.b16 %v1978
        %v1992 = vunpack.c.l.b16 %v1979
        %v1993 = vpack.c.b16 %v1990, %v1989
        %v1994 = vpack.c.b16 %v1992, %v1991
        %v1998 = vsel %vm893, %v1975, 0
        %2000 = vmatprep.subr.bf16.mxu0 0
        %2001 = vmatpush1.bf16.msra.mxu0 %v1993
        %2002 = vmatprep.subr.bf16.mxu0 0
        %2003 = vmatpush1.bf16.msra.mxu0 %v1994
        %2004 = vmatprep.subr.bf16.mxu0 0
        %2005 = vmatpush1.bf16.msra.mxu0 0
        %2006 = vmatprep.subr.bf16.mxu0 0
        %2007 = vmatpush1.bf16.msra.mxu0 0
        %2008 = vmatprep.subr.bf16.mxu0 0
        %2009 = vmatpush1.bf16.msra.mxu0 0
        %2010 = vmatprep.subr.bf16.mxu0 0
        %2011 = vmatpush1.bf16.msra.mxu0 0
        %2012 = vmatprep.subr.bf16.mxu0 0
        %2013 = vmatpush1.bf16.msra.mxu0 0
        %2014 = vmatprep.subr.bf16.mxu0 0
        %2015 = vmatpush1.bf16.msra.mxu0 0
        %2016 = vmatprep.subr.bf16.mxu0 0
        %2017 = vmatpush1.bf16.msra.mxu0 0
        %2018 = vmatprep.subr.bf16.mxu0 0
        %2019 = vmatpush1.bf16.msra.mxu0 0
        %2020 = vmatprep.subr.bf16.mxu0 0
        %2021 = vmatpush1.bf16.msra.mxu0 0
        %2022 = vmatprep.subr.bf16.mxu0 0
        %2023 = vmatpush1.bf16.msra.mxu0 0
        %2024 = vmatprep.subr.bf16.mxu0 0
        %2025 = vmatpush1.bf16.msra.mxu0 0
        %2026 = vmatprep.subr.bf16.mxu0 0
        %2027 = vmatpush1.bf16.msra.mxu0 0
        %2028 = vmatprep.subr.bf16.mxu0 0
        %2029 = vmatpush1.bf16.msra.mxu0 0
        %2030 = vmatprep.subr.bf16.mxu0 0
        %2031 = vmatpush1.bf16.msra.mxu0 0
        %2032 = vmatprep.mubr.bf16.mxu0 0
        %2033 = vmatmul.mubr.bf16.gmra.mrb[0].mxu0 %v1998
        %v2034 = vpop.f32.mrb[0].mxu0
        %v2035 = vadd.f32 %v1984, %v2034
        %v2036 = vpop.f32.mrb[0].mxu0
        %v2037 = vpop.f32.mrb[0].mxu0
        %v2038 = vadd.f32 %v1984, %v2037
        %v2039 = vpop.f32.mrb[0].mxu0
        %2040 = vdwg.mxu0
        %v2041 = vld [vmem:[%s796] sm:$0xf]
        %v2042 = vld [vmem:[%s796 + $0x4] sm:$0xf]
        %v2043 = vld [vmem:[%s796 + $0x8] sm:$0xf]
        %v2044 = vld [vmem:[%s796 + $0xc] sm:$0xf]
        %v2045 = vld [vmem:[%s817] sm:$0x1]
        %v2047 = vlaneseq
        %v2048 = vshrl.u32 %v2047, 7
        %v2049 = vsub.s32 0, %v2048
        %v2050 = vrot.slane %v2045, %v2049
        %v2056 = vunpack.c.l.b16 %v2041
        %v2057 = vunpack.c.l.b16 %v2042
        %v2058 = vunpack.c.l.b16 %v2043
        %v2059 = vunpack.c.l.b16 %v2044
        %v2060 = vpack.c.b16 %v2057, %v2056
        %v2061 = vpack.c.b16 %v2059, %v2058
        %v2065 = vsel %vm893, %v855, 0
        %v2068 = vsel %vm893, %v856, 0
        %2070 = vmatprep.subr.bf16.mxu0 0
        %2071 = vmatpush1.bf16.msra.mxu0 %v2060
        %2072 = vmatprep.subr.bf16.mxu0 0
        %2073 = vmatpush1.bf16.msra.mxu0 %v2061
        %2074 = vmatprep.subr.bf16.mxu0 0
        %2075 = vmatpush1.bf16.msra.mxu0 0
        %2076 = vmatprep.subr.bf16.mxu0 0
        %2077 = vmatpush1.bf16.msra.mxu0 0
        %2078 = vmatprep.subr.bf16.mxu0 0
        %2079 = vmatpush1.bf16.msra.mxu0 0
        %2080 = vmatprep.subr.bf16.mxu0 0
        %2081 = vmatpush1.bf16.msra.mxu0 0
        %2082 = vmatprep.subr.bf16.mxu0 0
        %2083 = vmatpush1.bf16.msra.mxu0 0
        %2084 = vmatprep.subr.bf16.mxu0 0
        %2085 = vmatpush1.bf16.msra.mxu0 0
        %2086 = vmatprep.subr.bf16.mxu0 0
        %2087 = vmatpush1.bf16.msra.mxu0 0
        %2088 = vmatprep.subr.bf16.mxu0 0
        %2089 = vmatpush1.bf16.msra.mxu0 0
        %2090 = vmatprep.subr.bf16.mxu0 0
        %2091 = vmatpush1.bf16.msra.mxu0 0
        %2092 = vmatprep.subr.bf16.mxu0 0
        %2093 = vmatpush1.bf16.msra.mxu0 0
        %2094 = vmatprep.subr.bf16.mxu0 0
        %2095 = vmatpush1.bf16.msra.mxu0 0
        %2096 = vmatprep.subr.bf16.mxu0 0
        %2097 = vmatpush1.bf16.msra.mxu0 0
        %2098 = vmatprep.subr.bf16.mxu0 0
        %2099 = vmatpush1.bf16.msra.mxu0 0
        %2100 = vmatprep.subr.bf16.mxu0 0
        %2101 = vmatpush1.bf16.msra.mxu0 0
        %2102 = vmatprep.mubr.bf16.mxu0 0
        %2103 = vmatmul.mubr.bf16.gmra.mrb[0].mxu0 %v2065
        %v2104 = vpop.f32.mrb[0].mxu0
        %v2105 = vadd.f32 %v2050, %v2104
        %v2106 = vpop.f32.mrb[0].mxu0
        %v2107 = vpop.f32.mrb[0].mxu0
        %v2108 = vadd.f32 %v2050, %v2107
        %v2109 = vpop.f32.mrb[0].mxu0
        %2110 = vmatprep.mubr.bf16.mxu0 0
        %2111 = vmatmul.mubr.bf16.gmra.mrb[0].mxu0 %v2068
        %v2112 = vpop.f32.mrb[0].mxu0
        %v2113 = vadd.f32 %v2050, %v2112
        %v2114 = vpop.f32.mrb[0].mxu0
        %v2115 = vpop.f32.mrb[0].mxu0
        %v2116 = vpop.f32.mrb[0].mxu0
        %2117 = vdwg.mxu0
        %v2118 = vld [vmem:[%s801] sm:$0xf]
        %v2119 = vld [vmem:[%s801 + $0x4] sm:$0xf]
        %v2120 = vld [vmem:[%s801 + $0x8] sm:$0xf]
        %v2121 = vld [vmem:[%s801 + $0xc] sm:$0xf]
        %v2122 = vld [vmem:[%s822 + $0x2] sm:$0x1]
        %v2123 = vpack.c.bf16 %v2038, %v2035
        %v2124 = vpack.c.bf16 %v2108, %v2105
        %v2125 = vpack.c.bf16 %v2113, %v2113
        %v2127 = vunpack.c.l.b16 %v2123
        %v2128 = vunpack.c.h.b16 %v2123
        %v2129 = vpack.c.b16 %v2127, %v2127
        %v2130 = vpack.c.b16 %v2128, %v2128
        %v2133 = vcombine.high %v2124, %v2124
        %v2135 = vunpack.c.l.s4 1983009808
        %v2136 = vunpack.c.0.s8 %v2135
        %v2137 = vlaneseq
        %v2138 = vshrl.u32 %v2137, 7
        %v2139 = vsub.s32 %v2136, %v2138
        %v2140 = vrot.slane %v2124, %v2139
        %v2142 = vunpack.c.l.s4 1983009808
        %v2143 = vunpack.c.0.s8 %v2142
        %v2144 = vlaneseq
        %v2145 = vshrl.u32 %v2144, 7
        %v2146 = vsub.s32 %v2143, %v2145
        %v2147 = vrot.slane %v2133, %v2146
        %v2148 = vcombine.high %v2140, %v2140
        %v2149 = vcombine.high %v2147, %v2147
        %v2151 = vunpack.c.l.s4 1983009808
        %v2152 = vunpack.c.0.s8 %v2151
        %v2153 = vlaneseq
        %v2154 = vshrl.u32 %v2153, 7
        %v2155 = vsub.s32 %v2152, %v2154
        %v2156 = vrot.slane %v2125, %v2155
        %v2157 = vcombine.high %v2156, %v2156
        %v2160 = vlaneseq
        %v2161 = vshrl.u32 %v2160, 7
        %v2162 = vsub.s32 0, %v2161
        %v2163 = vrot.slane %v867, %v2162
        %v2164 = vlaneseq
        %v2165 = vshrl.u32 %v2164, 7
        %v2166 = vsub.s32 0, %v2165
        %v2167 = vrot.slane %v868, %v2166
        %v2170 = vcombine.low %v2140, %v2148
        %v2172 = vunpack.c.l.s4 1983009808
        %v2173 = vunpack.c.0.s8 %v2172
        %v2174 = vlaneseq
        %v2175 = vshrl.u32 %v2174, 7
        %v2176 = vsub.s32 %v2173, %v2175
        %v2177 = vrot.slane %v2170, %v2176
        %v2179 = vunpack.c.l.s4 1983009808
        %v2180 = vunpack.c.0.s8 %v2179
        %v2181 = vlaneseq
        %v2182 = vshrl.u32 %v2181, 7
        %v2183 = vsub.s32 %v2180, %v2182
        %v2184 = vrot.slane %v2147, %v2183
        %v2185 = vcombine.low %v2177, %v2184
        %v2187 = vsel %vm963, %v2129, 0
        %v2190 = vsel %vm963, %v2185, 0
        %2192 = vmatprep.subr.bf16.mxu0 0
        %2193 = vmatpush1.bf16.xpose.msra.mxu0 %v2190
        %2194 = vmatprep.subr.bf16.mxu0 0
        %2195 = vmatpush1.bf16.xpose.msra.mxu0 0
        %2196 = vmatprep.subr.bf16.mxu0 0
        %2197 = vmatpush1.bf16.xpose.msra.mxu0 0
        %2198 = vmatprep.subr.bf16.mxu0 0
        %2199 = vmatpush1.bf16.xpose.msra.mxu0 0
        %2200 = vmatprep.subr.bf16.mxu0 0
        %2201 = vmatpush1.bf16.xpose.msra.mxu0 0
        %2202 = vmatprep.subr.bf16.mxu0 0
        %2203 = vmatpush1.bf16.xpose.msra.mxu0 0
        %2204 = vmatprep.subr.bf16.mxu0 0
        %2205 = vmatpush1.bf16.xpose.msra.mxu0 0
        %2206 = vmatprep.subr.bf16.mxu0 0
        %2207 = vmatpush1.bf16.xpose.msra.mxu0 0
        %2208 = vmatprep.subr.bf16.mxu0 0
        %2209 = vmatpush1.bf16.xpose.msra.mxu0 0
        %2210 = vmatprep.subr.bf16.mxu0 0
        %2211 = vmatpush1.bf16.xpose.msra.mxu0 0
        %2212 = vmatprep.subr.bf16.mxu0 0
        %2213 = vmatpush1.bf16.xpose.msra.mxu0 0
        %2214 = vmatprep.subr.bf16.mxu0 0
        %2215 = vmatpush1.bf16.xpose.msra.mxu0 0
        %2216 = vmatprep.subr.bf16.mxu0 0
        %2217 = vmatpush1.bf16.xpose.msra.mxu0 0
        %2218 = vmatprep.subr.bf16.mxu0 0
        %2219 = vmatpush1.bf16.xpose.msra.mxu0 0
        %2220 = vmatprep.subr.bf16.mxu0 0
        %2221 = vmatpush1.bf16.xpose.msra.mxu0 0
        %2222 = vmatprep.subr.bf16.mxu0 0
        %2223 = vmatpush1.bf16.xpose.msra.mxu0 0
        %2224 = vmatprep.mubr.bf16.mxu0 0
        %2225 = vmatmul.mubr.bf16.gmra.mrb[0].mxu0 %v2187
        %v2226 = vpop.f32.mrb[0].mxu0
        %v2227 = vadd.f32 %v2163, %v2226
        %v2228 = vpop.f32.mrb[0].mxu0
        %v2229 = vpop.f32.mrb[0].mxu0
        %v2230 = vpop.f32.mrb[0].mxu0
        %2231 = vdwg.mxu0
        %v2232 = vcombine.low %v2149, %v2156
        %v2234 = vunpack.c.l.s4 1983009808
        %v2235 = vunpack.c.0.s8 %v2234
        %v2236 = vlaneseq
        %v2237 = vshrl.u32 %v2236, 7
        %v2238 = vsub.s32 %v2235, %v2237
        %v2239 = vrot.slane %v2232, %v2238
        %v2241 = vunpack.c.l.s4 1983009808
        %v2242 = vunpack.c.0.s8 %v2241
        %v2243 = vlaneseq
        %v2244 = vshrl.u32 %v2243, 7
        %v2245 = vsub.s32 %v2242, %v2244
        %v2246 = vrot.slane %v2157, %v2245
        %v2247 = vcombine.low %v2239, %v2246
        %v2249 = vsel %vm963, %v2130, 0
        %v2252 = vsel %vm963, %v2247, 0
        %2254 = vmatprep.subr.bf16.mxu0 0
        %2255 = vmatpush1.bf16.xpose.msra.mxu0 %v2252
        %2256 = vmatprep.subr.bf16.mxu0 0
        %2257 = vmatpush1.bf16.xpose.msra.mxu0 0
        %2258 = vmatprep.subr.bf16.mxu0 0
        %2259 = vmatpush1.bf16.xpose.msra.mxu0 0
        %2260 = vmatprep.subr.bf16.mxu0 0
        %2261 = vmatpush1.bf16.xpose.msra.mxu0 0
        %2262 = vmatprep.subr.bf16.mxu0 0
        %2263 = vmatpush1.bf16.xpose.msra.mxu0 0
        %2264 = vmatprep.subr.bf16.mxu0 0
        %2265 = vmatpush1.bf16.xpose.msra.mxu0 0
        %2266 = vmatprep.subr.bf16.mxu0 0
        %2267 = vmatpush1.bf16.xpose.msra.mxu0 0
        %2268 = vmatprep.subr.bf16.mxu0 0
        %2269 = vmatpush1.bf16.xpose.msra.mxu0 0
        %2270 = vmatprep.subr.bf16.mxu0 0
        %2271 = vmatpush1.bf16.xpose.msra.mxu0 0
        %2272 = vmatprep.subr.bf16.mxu0 0
        %2273 = vmatpush1.bf16.xpose.msra.mxu0 0
        %2274 = vmatprep.subr.bf16.mxu0 0
        %2275 = vmatpush1.bf16.xpose.msra.mxu0 0
        %2276 = vmatprep.subr.bf16.mxu0 0
        %2277 = vmatpush1.bf16.xpose.msra.mxu0 0
        %2278 = vmatprep.subr.bf16.mxu0 0
        %2279 = vmatpush1.bf16.xpose.msra.mxu0 0
        %2280 = vmatprep.subr.bf16.mxu0 0
        %2281 = vmatpush1.bf16.xpose.msra.mxu0 0
        %2282 = vmatprep.subr.bf16.mxu0 0
        %2283 = vmatpush1.bf16.xpose.msra.mxu0 0
        %2284 = vmatprep.subr.bf16.mxu0 0
        %2285 = vmatpush1.bf16.xpose.msra.mxu0 0
        %2286 = vmatprep.mubr.bf16.mxu0 0
        %2287 = vmatmul.mubr.bf16.gmra.mrb[0].mxu0 %v2249
        %v2288 = vpop.f32.mrb[0].mxu0
        %v2289 = vadd.f32 %v2167, %v2288
        %v2290 = vpop.f32.mrb[0].mxu0
        %v2291 = vpop.f32.mrb[0].mxu0
        %v2292 = vpop.f32.mrb[0].mxu0
        %2293 = vdwg.mxu0
        %vm2294 = vcmask 97280
        %v2295 = vsel %vm2294, %v2227, -inf
        %2296 = vmax.xlane.f32.xlu0 %v2295
        %v2297 = vpop.xlane.xlu0 %2296
        %v2298 = vsel %vm2294, %v2289, -inf
        %2299 = vmax.xlane.f32.xlu0 %v2298
        %v2300 = vpop.xlane.xlu0 %2299
        %v2301 = vsub.f32 %v2227, %v2297
        %v2302 = vsub.f32 %v2289, %v2300
        %v2303 = vmul.f32 %v2301, 1.442695
        %v2304 = vpow.pop %v2303
        %v2305 = vmul.f32 %v2302, 1.442695
        %v2306 = vpow.pop %v2305
        %v2307 = vsel %vm2294, %v2304, 0.0
        %2308 = vadd.xlane.f32.xlu0 %v2307
        %v2309 = vpop.xlane.xlu0 %2308
        %v2310 = vsel %vm2294, %v2306, 0.0
        %2311 = vadd.xlane.f32.xlu0 %v2310
        %v2312 = vpop.xlane.xlu0 %2311
        %v2313 = vrcp.pop %v2309
        %v2314 = vrcp.pop %v2312
        %v2315 = vmul.f32 %v2304, %v2313
        %v2316 = vmul.f32 %v2306, %v2314
        %v2317 = vpack.c.bf16 %v2315, %v2315
        %v2318 = vpack.c.bf16 %v2316, %v2316
        %2319 = vrot.lane.b32.xlu0 %v2185, 96
        %v2320 = vpop.permute.xlu0 %2319
        %v2322 = vsel %vm2294, %v2317, 0
        %vm2324 = vcmask 1045504
        %v2326 = vsel %vm2324, %v2320, 0
        %2328 = vmatprep.subr.bf16.mxu0 0
        %2329 = vmatpush1.bf16.msra.mxu0 %v2326
        %2330 = vmatprep.subr.bf16.mxu0 0
        %2331 = vmatpush1.bf16.msra.mxu0 0
        %2332 = vmatprep.subr.bf16.mxu0 0
        %2333 = vmatpush1.bf16.msra.mxu0 0
        %2334 = vmatprep.subr.bf16.mxu0 0
        %2335 = vmatpush1.bf16.msra.mxu0 0
        %2336 = vmatprep.subr.bf16.mxu0 0
        %2337 = vmatpush1.bf16.msra.mxu0 0
        %2338 = vmatprep.subr.bf16.mxu0 0
        %2339 = vmatpush1.bf16.msra.mxu0 0
        %2340 = vmatprep.subr.bf16.mxu0 0
        %2341 = vmatpush1.bf16.msra.mxu0 0
        %2342 = vmatprep.subr.bf16.mxu0 0
        %2343 = vmatpush1.bf16.msra.mxu0 0
        %2344 = vmatprep.subr.bf16.mxu0 0
        %2345 = vmatpush1.bf16.msra.mxu0 0
        %2346 = vmatprep.subr.bf16.mxu0 0
        %2347 = vmatpush1.bf16.msra.mxu0 0
        %2348 = vmatprep.subr.bf16.mxu0 0
        %2349 = vmatpush1.bf16.msra.mxu0 0
        %2350 = vmatprep.subr.bf16.mxu0 0
        %2351 = vmatpush1.bf16.msra.mxu0 0
        %2352 = vmatprep.subr.bf16.mxu0 0
        %2353 = vmatpush1.bf16.msra.mxu0 0
        %2354 = vmatprep.subr.bf16.mxu0 0
        %2355 = vmatpush1.bf16.msra.mxu0 0
        %2356 = vmatprep.subr.bf16.mxu0 0
        %2357 = vmatpush1.bf16.msra.mxu0 0
        %2358 = vmatprep.subr.bf16.mxu0 0
        %2359 = vmatpush1.bf16.msra.mxu0 0
        %2360 = vmatprep.mubr.bf16.mxu0 0
        %2361 = vmatmul.mubr.bf16.gmra.mrb[0].mxu0 %v2322
        %v2362 = vpop.f32.mrb[0].mxu0
        %v2363 = vadd.f32 0.0, %v2362
        %v2364 = vpop.f32.mrb[0].mxu0
        %v2365 = vpop.f32.mrb[0].mxu0
        %v2366 = vpop.f32.mrb[0].mxu0
        %2367 = vdwg.mxu0
        %2368 = vrot.lane.b32.xlu0 %v2247, 96
        %v2369 = vpop.permute.xlu0 %2368
        %v2371 = vsel %vm2294, %v2318, 0
        %v2374 = vsel %vm2324, %v2369, 0
        %2376 = vmatprep.subr.bf16.mxu0 0
        %2377 = vmatpush1.bf16.msra.mxu0 %v2374
        %2378 = vmatprep.subr.bf16.mxu0 0
        %2379 = vmatpush1.bf16.msra.mxu0 0
        %2380 = vmatprep.subr.bf16.mxu0 0
        %2381 = vmatpush1.bf16.msra.mxu0 0
        %2382 = vmatprep.subr.bf16.mxu0 0
        %2383 = vmatpush1.bf16.msra.mxu0 0
        %2384 = vmatprep.subr.bf16.mxu0 0
        %2385 = vmatpush1.bf16.msra.mxu0 0
        %2386 = vmatprep.subr.bf16.mxu0 0
        %2387 = vmatpush1.bf16.msra.mxu0 0
        %2388 = vmatprep.subr.bf16.mxu0 0
        %2389 = vmatpush1.bf16.msra.mxu0 0
        %2390 = vmatprep.subr.bf16.mxu0 0
        %2391 = vmatpush1.bf16.msra.mxu0 0
        %2392 = vmatprep.subr.bf16.mxu0 0
        %2393 = vmatpush1.bf16.msra.mxu0 0
        %2394 = vmatprep.subr.bf16.mxu0 0
        %2395 = vmatpush1.bf16.msra.mxu0 0
        %2396 = vmatprep.subr.bf16.mxu0 0
        %2397 = vmatpush1.bf16.msra.mxu0 0
        %2398 = vmatprep.subr.bf16.mxu0 0
        %2399 = vmatpush1.bf16.msra.mxu0 0
        %2400 = vmatprep.subr.bf16.mxu0 0
        %2401 = vmatpush1.bf16.msra.mxu0 0
        %2402 = vmatprep.subr.bf16.mxu0 0
        %2403 = vmatpush1.bf16.msra.mxu0 0
        %2404 = vmatprep.subr.bf16.mxu0 0
        %2405 = vmatpush1.bf16.msra.mxu0 0
        %2406 = vmatprep.subr.bf16.mxu0 0
        %2407 = vmatpush1.bf16.msra.mxu0 0
        %2408 = vmatprep.mubr.bf16.mxu0 0
        %2409 = vmatmul.mubr.bf16.gmra.mrb[0].mxu0 %v2371
        %v2410 = vpop.f32.mrb[0].mxu0
        %v2411 = vadd.f32 0.0, %v2410
        %v2412 = vpop.f32.mrb[0].mxu0
        %v2413 = vpop.f32.mrb[0].mxu0
        %v2414 = vpop.f32.mrb[0].mxu0
        %2415 = vdwg.mxu0
        %2416 = vrot.lane.b32.xlu0 %v2129, 120
        %v2417 = vpop.permute.xlu0 %2416
        %2418 = vrot.lane.b32.xlu0 %v2185, 120
        %v2419 = vpop.permute.xlu0 %2418
        %v2421 = vsel %vm963, %v2417, 0
        %v2424 = vsel %vm963, %v2419, 0
        %2426 = vmatprep.subr.bf16.mxu0 0
        %2427 = vmatpush1.bf16.xpose.msra.mxu0 %v2424
        %2428 = vmatprep.subr.bf16.mxu0 0
        %2429 = vmatpush1.bf16.xpose.msra.mxu0 0
        %2430 = vmatprep.subr.bf16.mxu0 0
        %2431 = vmatpush1.bf16.xpose.msra.mxu0 0
        %2432 = vmatprep.subr.bf16.mxu0 0
        %2433 = vmatpush1.bf16.xpose.msra.mxu0 0
        %2434 = vmatprep.subr.bf16.mxu0 0
        %2435 = vmatpush1.bf16.xpose.msra.mxu0 0
        %2436 = vmatprep.subr.bf16.mxu0 0
        %2437 = vmatpush1.bf16.xpose.msra.mxu0 0
        %2438 = vmatprep.subr.bf16.mxu0 0
        %2439 = vmatpush1.bf16.xpose.msra.mxu0 0
        %2440 = vmatprep.subr.bf16.mxu0 0
        %2441 = vmatpush1.bf16.xpose.msra.mxu0 0
        %2442 = vmatprep.subr.bf16.mxu0 0
        %2443 = vmatpush1.bf16.xpose.msra.mxu0 0
        %2444 = vmatprep.subr.bf16.mxu0 0
        %2445 = vmatpush1.bf16.xpose.msra.mxu0 0
        %2446 = vmatprep.subr.bf16.mxu0 0
        %2447 = vmatpush1.bf16.xpose.msra.mxu0 0
        %2448 = vmatprep.subr.bf16.mxu0 0
        %2449 = vmatpush1.bf16.xpose.msra.mxu0 0
        %2450 = vmatprep.subr.bf16.mxu0 0
        %2451 = vmatpush1.bf16.xpose.msra.mxu0 0
        %2452 = vmatprep.subr.bf16.mxu0 0
        %2453 = vmatpush1.bf16.xpose.msra.mxu0 0
        %2454 = vmatprep.subr.bf16.mxu0 0
        %2455 = vmatpush1.bf16.xpose.msra.mxu0 0
        %2456 = vmatprep.subr.bf16.mxu0 0
        %2457 = vmatpush1.bf16.xpose.msra.mxu0 0
        %2458 = vmatprep.mubr.bf16.mxu0 0
        %2459 = vmatmul.mubr.bf16.gmra.mrb[0].mxu0 %v2421
        %v2460 = vpop.f32.mrb[0].mxu0
        %v2461 = vadd.f32 %v2163, %v2460
        %v2462 = vpop.f32.mrb[0].mxu0
        %v2463 = vpop.f32.mrb[0].mxu0
        %v2464 = vpop.f32.mrb[0].mxu0
        %2465 = vdwg.mxu0
        %2466 = vrot.lane.b32.xlu0 %v2130, 120
        %v2467 = vpop.permute.xlu0 %2466
        %2468 = vrot.lane.b32.xlu0 %v2247, 120
        %v2469 = vpop.permute.xlu0 %2468
        %v2471 = vsel %vm963, %v2467, 0
        %v2474 = vsel %vm963, %v2469, 0
        %2476 = vmatprep.subr.bf16.mxu0 0
        %2477 = vmatpush1.bf16.xpose.msra.mxu0 %v2474
        %2478 = vmatprep.subr.bf16.mxu0 0
        %2479 = vmatpush1.bf16.xpose.msra.mxu0 0
        %2480 = vmatprep.subr.bf16.mxu0 0
        %2481 = vmatpush1.bf16.xpose.msra.mxu0 0
        %2482 = vmatprep.subr.bf16.mxu0 0
        %2483 = vmatpush1.bf16.xpose.msra.mxu0 0
        %2484 = vmatprep.subr.bf16.mxu0 0
        %2485 = vmatpush1.bf16.xpose.msra.mxu0 0
        %2486 = vmatprep.subr.bf16.mxu0 0
        %2487 = vmatpush1.bf16.xpose.msra.mxu0 0
        %2488 = vmatprep.subr.bf16.mxu0 0
        %2489 = vmatpush1.bf16.xpose.msra.mxu0 0
        %2490 = vmatprep.subr.bf16.mxu0 0
        %2491 = vmatpush1.bf16.xpose.msra.mxu0 0
        %2492 = vmatprep.subr.bf16.mxu0 0
        %2493 = vmatpush1.bf16.xpose.msra.mxu0 0
        %2494 = vmatprep.subr.bf16.mxu0 0
        %2495 = vmatpush1.bf16.xpose.msra.mxu0 0
        %2496 = vmatprep.subr.bf16.mxu0 0
        %2497 = vmatpush1.bf16.xpose.msra.mxu0 0
        %2498 = vmatprep.subr.bf16.mxu0 0
        %2499 = vmatpush1.bf16.xpose.msra.mxu0 0
        %2500 = vmatprep.subr.bf16.mxu0 0
        %2501 = vmatpush1.bf16.xpose.msra.mxu0 0
        %2502 = vmatprep.subr.bf16.mxu0 0
        %2503 = vmatpush1.bf16.xpose.msra.mxu0 0
        %2504 = vmatprep.subr.bf16.mxu0 0
        %2505 = vmatpush1.bf16.xpose.msra.mxu0 0
        %2506 = vmatprep.subr.bf16.mxu0 0
        %2507 = vmatpush1.bf16.xpose.msra.mxu0 0
        %2508 = vmatprep.mubr.bf16.mxu0 0
        %2509 = vmatmul.mubr.bf16.gmra.mrb[0].mxu0 %v2471
        %v2510 = vpop.f32.mrb[0].mxu0
        %v2511 = vadd.f32 %v2167, %v2510
        %v2512 = vpop.f32.mrb[0].mxu0
        %v2513 = vpop.f32.mrb[0].mxu0
        %v2514 = vpop.f32.mrb[0].mxu0
        %2515 = vdwg.mxu0
        %v2516 = vsel %vm2294, %v2461, -inf
        %2517 = vmax.xlane.f32.xlu0 %v2516
        %v2518 = vpop.xlane.xlu0 %2517
        %v2519 = vsel %vm2294, %v2511, -inf
        %2520 = vmax.xlane.f32.xlu0 %v2519
        %v2521 = vpop.xlane.xlu0 %2520
        %v2522 = vsub.f32 %v2461, %v2518
        %v2523 = vsub.f32 %v2511, %v2521
        %v2524 = vmul.f32 %v2522, 1.442695
        %v2525 = vpow.pop %v2524
        %v2526 = vmul.f32 %v2523, 1.442695
        %v2527 = vpow.pop %v2526
        %v2528 = vsel %vm2294, %v2525, 0.0
        %2529 = vadd.xlane.f32.xlu0 %v2528
        %v2530 = vpop.xlane.xlu0 %2529
        %v2531 = vsel %vm2294, %v2527, 0.0
        %2532 = vadd.xlane.f32.xlu0 %v2531
        %v2533 = vpop.xlane.xlu0 %2532
        %v2534 = vrcp.pop %v2530
        %v2535 = vrcp.pop %v2533
        %v2536 = vmul.f32 %v2525, %v2534
        %v2537 = vmul.f32 %v2527, %v2535
        %v2538 = vpack.c.bf16 %v2536, %v2536
        %v2539 = vpack.c.bf16 %v2537, %v2537
        %2540 = vrot.lane.b32.xlu0 %v2185, 88
        %v2541 = vpop.permute.xlu0 %2540
        %v2543 = vsel %vm2294, %v2538, 0
        %v2546 = vsel %vm2324, %v2541, 0
        %2548 = vmatprep.subr.bf16.mxu0 0
        %2549 = vmatpush1.bf16.msra.mxu0 %v2546
        %2550 = vmatprep.subr.bf16.mxu0 0
        %2551 = vmatpush1.bf16.msra.mxu0 0
        %2552 = vmatprep.subr.bf16.mxu0 0
        %2553 = vmatpush1.bf16.msra.mxu0 0
        %2554 = vmatprep.subr.bf16.mxu0 0
        %2555 = vmatpush1.bf16.msra.mxu0 0
        %2556 = vmatprep.subr.bf16.mxu0 0
        %2557 = vmatpush1.bf16.msra.mxu0 0
        %2558 = vmatprep.subr.bf16.mxu0 0
        %2559 = vmatpush1.bf16.msra.mxu0 0
        %2560 = vmatprep.subr.bf16.mxu0 0
        %2561 = vmatpush1.bf16.msra.mxu0 0
        %2562 = vmatprep.subr.bf16.mxu0 0
        %2563 = vmatpush1.bf16.msra.mxu0 0
        %2564 = vmatprep.subr.bf16.mxu0 0
        %2565 = vmatpush1.bf16.msra.mxu0 0
        %2566 = vmatprep.subr.bf16.mxu0 0
        %2567 = vmatpush1.bf16.msra.mxu0 0
        %2568 = vmatprep.subr.bf16.mxu0 0
        %2569 = vmatpush1.bf16.msra.mxu0 0
        %2570 = vmatprep.subr.bf16.mxu0 0
        %2571 = vmatpush1.bf16.msra.mxu0 0
        %2572 = vmatprep.subr.bf16.mxu0 0
        %2573 = vmatpush1.bf16.msra.mxu0 0
        %2574 = vmatprep.subr.bf16.mxu0 0
        %2575 = vmatpush1.bf16.msra.mxu0 0
        %2576 = vmatprep.subr.bf16.mxu0 0
        %2577 = vmatpush1.bf16.msra.mxu0 0
        %2578 = vmatprep.subr.bf16.mxu0 0
        %2579 = vmatpush1.bf16.msra.mxu0 0
        %2580 = vmatprep.mubr.bf16.mxu0 0
        %2581 = vmatmul.mubr.bf16.gmra.mrb[0].mxu0 %v2543
        %v2582 = vpop.f32.mrb[0].mxu0
        %v2583 = vadd.f32 0.0, %v2582
        %v2584 = vpop.f32.mrb[0].mxu0
        %v2585 = vpop.f32.mrb[0].mxu0
        %v2586 = vpop.f32.mrb[0].mxu0
        %2587 = vdwg.mxu0
        %2588 = vrot.lane.b32.xlu0 %v2247, 88
        %v2589 = vpop.permute.xlu0 %2588
        %v2591 = vsel %vm2294, %v2539, 0
        %v2594 = vsel %vm2324, %v2589, 0
        %2596 = vmatprep.subr.bf16.mxu0 0
        %2597 = vmatpush1.bf16.msra.mxu0 %v2594
        %2598 = vmatprep.subr.bf16.mxu0 0
        %2599 = vmatpush1.bf16.msra.mxu0 0
        %2600 = vmatprep.subr.bf16.mxu0 0
        %2601 = vmatpush1.bf16.msra.mxu0 0
        %2602 = vmatprep.subr.bf16.mxu0 0
        %2603 = vmatpush1.bf16.msra.mxu0 0
        %2604 = vmatprep.subr.bf16.mxu0 0
        %2605 = vmatpush1.bf16.msra.mxu0 0
        %2606 = vmatprep.subr.bf16.mxu0 0
        %2607 = vmatpush1.bf16.msra.mxu0 0
        %2608 = vmatprep.subr.bf16.mxu0 0
        %2609 = vmatpush1.bf16.msra.mxu0 0
        %2610 = vmatprep.subr.bf16.mxu0 0
        %2611 = vmatpush1.bf16.msra.mxu0 0
        %2612 = vmatprep.subr.bf16.mxu0 0
        %2613 = vmatpush1.bf16.msra.mxu0 0
        %2614 = vmatprep.subr.bf16.mxu0 0
        %2615 = vmatpush1.bf16.msra.mxu0 0
        %2616 = vmatprep.subr.bf16.mxu0 0
        %2617 = vmatpush1.bf16.msra.mxu0 0
        %2618 = vmatprep.subr.bf16.mxu0 0
        %2619 = vmatpush1.bf16.msra.mxu0 0
        %2620 = vmatprep.subr.bf16.mxu0 0
        %2621 = vmatpush1.bf16.msra.mxu0 0
        %2622 = vmatprep.subr.bf16.mxu0 0
        %2623 = vmatpush1.bf16.msra.mxu0 0
        %2624 = vmatprep.subr.bf16.mxu0 0
        %2625 = vmatpush1.bf16.msra.mxu0 0
        %2626 = vmatprep.subr.bf16.mxu0 0
        %2627 = vmatpush1.bf16.msra.mxu0 0
        %2628 = vmatprep.mubr.bf16.mxu0 0
        %2629 = vmatmul.mubr.bf16.gmra.mrb[0].mxu0 %v2591
        %v2630 = vpop.f32.mrb[0].mxu0
        %v2631 = vadd.f32 0.0, %v2630
        %v2632 = vpop.f32.mrb[0].mxu0
        %v2633 = vpop.f32.mrb[0].mxu0
        %v2634 = vpop.f32.mrb[0].mxu0
        %2635 = vdwg.mxu0
        %2636 = vrot.lane.b32.xlu0 %v2129, 112
        %v2637 = vpop.permute.xlu0 %2636
        %2638 = vrot.lane.b32.xlu0 %v2185, 112
        %v2639 = vpop.permute.xlu0 %2638
        %v2641 = vsel %vm963, %v2637, 0
        %v2644 = vsel %vm963, %v2639, 0
        %2646 = vmatprep.subr.bf16.mxu0 0
        %2647 = vmatpush1.bf16.xpose.msra.mxu0 %v2644
        %2648 = vmatprep.subr.bf16.mxu0 0
        %2649 = vmatpush1.bf16.xpose.msra.mxu0 0
        %2650 = vmatprep.subr.bf16.mxu0 0
        %2651 = vmatpush1.bf16.xpose.msra.mxu0 0
        %2652 = vmatprep.subr.bf16.mxu0 0
        %2653 = vmatpush1.bf16.xpose.msra.mxu0 0
        %2654 = vmatprep.subr.bf16.mxu0 0
        %2655 = vmatpush1.bf16.xpose.msra.mxu0 0
        %2656 = vmatprep.subr.bf16.mxu0 0
        %2657 = vmatpush1.bf16.xpose.msra.mxu0 0
        %2658 = vmatprep.subr.bf16.mxu0 0
        %2659 = vmatpush1.bf16.xpose.msra.mxu0 0
        %2660 = vmatprep.subr.bf16.mxu0 0
        %2661 = vmatpush1.bf16.xpose.msra.mxu0 0
        %2662 = vmatprep.subr.bf16.mxu0 0
        %2663 = vmatpush1.bf16.xpose.msra.mxu0 0
        %2664 = vmatprep.subr.bf16.mxu0 0
        %2665 = vmatpush1.bf16.xpose.msra.mxu0 0
        %2666 = vmatprep.subr.bf16.mxu0 0
        %2667 = vmatpush1.bf16.xpose.msra.mxu0 0
        %2668 = vmatprep.subr.bf16.mxu0 0
        %2669 = vmatpush1.bf16.xpose.msra.mxu0 0
        %2670 = vmatprep.subr.bf16.mxu0 0
        %2671 = vmatpush1.bf16.xpose.msra.mxu0 0
        %2672 = vmatprep.subr.bf16.mxu0 0
        %2673 = vmatpush1.bf16.xpose.msra.mxu0 0
        %2674 = vmatprep.subr.bf16.mxu0 0
        %2675 = vmatpush1.bf16.xpose.msra.mxu0 0
        %2676 = vmatprep.subr.bf16.mxu0 0
        %2677 = vmatpush1.bf16.xpose.msra.mxu0 0
        %2678 = vmatprep.mubr.bf16.mxu0 0
        %2679 = vmatmul.mubr.bf16.gmra.mrb[0].mxu0 %v2641
        %v2680 = vpop.f32.mrb[0].mxu0
        %v2681 = vadd.f32 %v2163, %v2680
        %v2682 = vpop.f32.mrb[0].mxu0
        %v2683 = vpop.f32.mrb[0].mxu0
        %v2684 = vpop.f32.mrb[0].mxu0
        %2685 = vdwg.mxu0
        %2686 = vrot.lane.b32.xlu0 %v2130, 112
        %v2687 = vpop.permute.xlu0 %2686
        %2688 = vrot.lane.b32.xlu0 %v2247, 112
        %v2689 = vpop.permute.xlu0 %2688
        %v2691 = vsel %vm963, %v2687, 0
        %v2694 = vsel %vm963, %v2689, 0
        %2696 = vmatprep.subr.bf16.mxu0 0
        %2697 = vmatpush1.bf16.xpose.msra.mxu0 %v2694
        %2698 = vmatprep.subr.bf16.mxu0 0
        %2699 = vmatpush1.bf16.xpose.msra.mxu0 0
        %2700 = vmatprep.subr.bf16.mxu0 0
        %2701 = vmatpush1.bf16.xpose.msra.mxu0 0
        %2702 = vmatprep.subr.bf16.mxu0 0
        %2703 = vmatpush1.bf16.xpose.msra.mxu0 0
        %2704 = vmatprep.subr.bf16.mxu0 0
        %2705 = vmatpush1.bf16.xpose.msra.mxu0 0
        %2706 = vmatprep.subr.bf16.mxu0 0
        %2707 = vmatpush1.bf16.xpose.msra.mxu0 0
        %2708 = vmatprep.subr.bf16.mxu0 0
        %2709 = vmatpush1.bf16.xpose.msra.mxu0 0
        %2710 = vmatprep.subr.bf16.mxu0 0
        %2711 = vmatpush1.bf16.xpose.msra.mxu0 0
        %2712 = vmatprep.subr.bf16.mxu0 0
        %2713 = vmatpush1.bf16.xpose.msra.mxu0 0
        %2714 = vmatprep.subr.bf16.mxu0 0
        %2715 = vmatpush1.bf16.xpose.msra.mxu0 0
        %2716 = vmatprep.subr.bf16.mxu0 0
        %2717 = vmatpush1.bf16.xpose.msra.mxu0 0
        %2718 = vmatprep.subr.bf16.mxu0 0
        %2719 = vmatpush1.bf16.xpose.msra.mxu0 0
        %2720 = vmatprep.subr.bf16.mxu0 0
        %2721 = vmatpush1.bf16.xpose.msra.mxu0 0
        %2722 = vmatprep.subr.bf16.mxu0 0
        %2723 = vmatpush1.bf16.xpose.msra.mxu0 0
        %2724 = vmatprep.subr.bf16.mxu0 0
        %2725 = vmatpush1.bf16.xpose.msra.mxu0 0
        %2726 = vmatprep.subr.bf16.mxu0 0
        %2727 = vmatpush1.bf16.xpose.msra.mxu0 0
        %2728 = vmatprep.mubr.bf16.mxu0 0
        %2729 = vmatmul.mubr.bf16.gmra.mrb[0].mxu0 %v2691
        %v2730 = vpop.f32.mrb[0].mxu0
        %v2731 = vadd.f32 %v2167, %v2730
        %v2732 = vpop.f32.mrb[0].mxu0
        %v2733 = vpop.f32.mrb[0].mxu0
        %v2734 = vpop.f32.mrb[0].mxu0
        %2735 = vdwg.mxu0
        %v2736 = vsel %vm2294, %v2681, -inf
        %2737 = vmax.xlane.f32.xlu0 %v2736
        %v2738 = vpop.xlane.xlu0 %2737
        %v2739 = vsel %vm2294, %v2731, -inf
        %2740 = vmax.xlane.f32.xlu0 %v2739
        %v2741 = vpop.xlane.xlu0 %2740
        %v2742 = vsub.f32 %v2681, %v2738
        %v2743 = vsub.f32 %v2731, %v2741
        %v2744 = vmul.f32 %v2742, 1.442695
        %v2745 = vpow.pop %v2744
        %v2746 = vmul.f32 %v2743, 1.442695
        %v2747 = vpow.pop %v2746
        %v2748 = vsel %vm2294, %v2745, 0.0
        %2749 = vadd.xlane.f32.xlu0 %v2748
        %v2750 = vpop.xlane.xlu0 %2749
        %v2751 = vsel %vm2294, %v2747, 0.0
        %2752 = vadd.xlane.f32.xlu0 %v2751
        %v2753 = vpop.xlane.xlu0 %2752
        %v2754 = vrcp.pop %v2750
        %v2755 = vrcp.pop %v2753
        %v2756 = vmul.f32 %v2745, %v2754
        %v2757 = vmul.f32 %v2747, %v2755
        %v2758 = vpack.c.bf16 %v2756, %v2756
        %v2759 = vpack.c.bf16 %v2757, %v2757
        %2760 = vrot.lane.b32.xlu0 %v2185, 80
        %v2761 = vpop.permute.xlu0 %2760
        %v2763 = vsel %vm2294, %v2758, 0
        %v2766 = vsel %vm2324, %v2761, 0
        %2768 = vmatprep.subr.bf16.mxu0 0
        %2769 = vmatpush1.bf16.msra.mxu0 %v2766
        %2770 = vmatprep.subr.bf16.mxu0 0
        %2771 = vmatpush1.bf16.msra.mxu0 0
        %2772 = vmatprep.subr.bf16.mxu0 0
        %2773 = vmatpush1.bf16.msra.mxu0 0
        %2774 = vmatprep.subr.bf16.mxu0 0
        %2775 = vmatpush1.bf16.msra.mxu0 0
        %2776 = vmatprep.subr.bf16.mxu0 0
        %2777 = vmatpush1.bf16.msra.mxu0 0
        %2778 = vmatprep.subr.bf16.mxu0 0
        %2779 = vmatpush1.bf16.msra.mxu0 0
        %2780 = vmatprep.subr.bf16.mxu0 0
        %2781 = vmatpush1.bf16.msra.mxu0 0
        %2782 = vmatprep.subr.bf16.mxu0 0
        %2783 = vmatpush1.bf16.msra.mxu0 0
        %2784 = vmatprep.subr.bf16.mxu0 0
        %2785 = vmatpush1.bf16.msra.mxu0 0
        %2786 = vmatprep.subr.bf16.mxu0 0
        %2787 = vmatpush1.bf16.msra.mxu0 0
        %2788 = vmatprep.subr.bf16.mxu0 0
        %2789 = vmatpush1.bf16.msra.mxu0 0
        %2790 = vmatprep.subr.bf16.mxu0 0
        %2791 = vmatpush1.bf16.msra.mxu0 0
        %2792 = vmatprep.subr.bf16.mxu0 0
        %2793 = vmatpush1.bf16.msra.mxu0 0
        %2794 = vmatprep.subr.bf16.mxu0 0
        %2795 = vmatpush1.bf16.msra.mxu0 0
        %2796 = vmatprep.subr.bf16.mxu0 0
        %2797 = vmatpush1.bf16.msra.mxu0 0
        %2798 = vmatprep.subr.bf16.mxu0 0
        %2799 = vmatpush1.bf16.msra.mxu0 0
        %2800 = vmatprep.mubr.bf16.mxu0 0
        %2801 = vmatmul.mubr.bf16.gmra.mrb[0].mxu0 %v2763
        %v2802 = vpop.f32.mrb[0].mxu0
        %v2803 = vadd.f32 0.0, %v2802
        %v2804 = vpop.f32.mrb[0].mxu0
        %v2805 = vpop.f32.mrb[0].mxu0
        %v2806 = vpop.f32.mrb[0].mxu0
        %2807 = vdwg.mxu0
        %2808 = vrot.lane.b32.xlu0 %v2247, 80
        %v2809 = vpop.permute.xlu0 %2808
        %v2811 = vsel %vm2294, %v2759, 0
        %v2814 = vsel %vm2324, %v2809, 0
        %2816 = vmatprep.subr.bf16.mxu0 0
        %2817 = vmatpush1.bf16.msra.mxu0 %v2814
        %2818 = vmatprep.subr.bf16.mxu0 0
        %2819 = vmatpush1.bf16.msra.mxu0 0
        %2820 = vmatprep.subr.bf16.mxu0 0
        %2821 = vmatpush1.bf16.msra.mxu0 0
        %2822 = vmatprep.subr.bf16.mxu0 0
        %2823 = vmatpush1.bf16.msra.mxu0 0
        %2824 = vmatprep.subr.bf16.mxu0 0
        %2825 = vmatpush1.bf16.msra.mxu0 0
        %2826 = vmatprep.subr.bf16.mxu0 0
        %2827 = vmatpush1.bf16.msra.mxu0 0
        %2828 = vmatprep.subr.bf16.mxu0 0
        %2829 = vmatpush1.bf16.msra.mxu0 0
        %2830 = vmatprep.subr.bf16.mxu0 0
        %2831 = vmatpush1.bf16.msra.mxu0 0
        %2832 = vmatprep.subr.bf16.mxu0 0
        %2833 = vmatpush1.bf16.msra.mxu0 0
        %2834 = vmatprep.subr.bf16.mxu0 0
        %2835 = vmatpush1.bf16.msra.mxu0 0
        %2836 = vmatprep.subr.bf16.mxu0 0
        %2837 = vmatpush1.bf16.msra.mxu0 0
        %2838 = vmatprep.subr.bf16.mxu0 0
        %2839 = vmatpush1.bf16.msra.mxu0 0
        %2840 = vmatprep.subr.bf16.mxu0 0
        %2841 = vmatpush1.bf16.msra.mxu0 0
        %2842 = vmatprep.subr.bf16.mxu0 0
        %2843 = vmatpush1.bf16.msra.mxu0 0
        %2844 = vmatprep.subr.bf16.mxu0 0
        %2845 = vmatpush1.bf16.msra.mxu0 0
        %2846 = vmatprep.subr.bf16.mxu0 0
        %2847 = vmatpush1.bf16.msra.mxu0 0
        %2848 = vmatprep.mubr.bf16.mxu0 0
        %2849 = vmatmul.mubr.bf16.gmra.mrb[0].mxu0 %v2811
        %v2850 = vpop.f32.mrb[0].mxu0
        %v2851 = vadd.f32 0.0, %v2850
        %v2852 = vpop.f32.mrb[0].mxu0
        %v2853 = vpop.f32.mrb[0].mxu0
        %v2854 = vpop.f32.mrb[0].mxu0
        %2855 = vdwg.mxu0
        %2856 = vrot.lane.b32.xlu0 %v2129, 104
        %v2857 = vpop.permute.xlu0 %2856
        %2858 = vrot.lane.b32.xlu0 %v2185, 104
        %v2859 = vpop.permute.xlu0 %2858
        %v2861 = vsel %vm963, %v2857, 0
        %v2864 = vsel %vm963, %v2859, 0
        %2866 = vmatprep.subr.bf16.mxu0 0
        %2867 = vmatpush1.bf16.xpose.msra.mxu0 %v2864
        %2868 = vmatprep.subr.bf16.mxu0 0
        %2869 = vmatpush1.bf16.xpose.msra.mxu0 0
        %2870 = vmatprep.subr.bf16.mxu0 0
        %2871 = vmatpush1.bf16.xpose.msra.mxu0 0
        %2872 = vmatprep.subr.bf16.mxu0 0
        %2873 = vmatpush1.bf16.xpose.msra.mxu0 0
        %2874 = vmatprep.subr.bf16.mxu0 0
        %2875 = vmatpush1.bf16.xpose.msra.mxu0 0
        %2876 = vmatprep.subr.bf16.mxu0 0
        %2877 = vmatpush1.bf16.xpose.msra.mxu0 0
        %2878 = vmatprep.subr.bf16.mxu0 0
        %2879 = vmatpush1.bf16.xpose.msra.mxu0 0
        %2880 = vmatprep.subr.bf16.mxu0 0
        %2881 = vmatpush1.bf16.xpose.msra.mxu0 0
        %2882 = vmatprep.subr.bf16.mxu0 0
        %2883 = vmatpush1.bf16.xpose.msra.mxu0 0
        %2884 = vmatprep.subr.bf16.mxu0 0
        %2885 = vmatpush1.bf16.xpose.msra.mxu0 0
        %2886 = vmatprep.subr.bf16.mxu0 0
        %2887 = vmatpush1.bf16.xpose.msra.mxu0 0
        %2888 = vmatprep.subr.bf16.mxu0 0
        %2889 = vmatpush1.bf16.xpose.msra.mxu0 0
        %2890 = vmatprep.subr.bf16.mxu0 0
        %2891 = vmatpush1.bf16.xpose.msra.mxu0 0
        %2892 = vmatprep.subr.bf16.mxu0 0
        %2893 = vmatpush1.bf16.xpose.msra.mxu0 0
        %2894 = vmatprep.subr.bf16.mxu0 0
        %2895 = vmatpush1.bf16.xpose.msra.mxu0 0
        %2896 = vmatprep.subr.bf16.mxu0 0
        %2897 = vmatpush1.bf16.xpose.msra.mxu0 0
        %2898 = vmatprep.mubr.bf16.mxu0 0
        %2899 = vmatmul.mubr.bf16.gmra.mrb[0].mxu0 %v2861
        %v2900 = vpop.f32.mrb[0].mxu0
        %v2901 = vadd.f32 %v2163, %v2900
        %v2902 = vpop.f32.mrb[0].mxu0
        %v2903 = vpop.f32.mrb[0].mxu0
        %v2904 = vpop.f32.mrb[0].mxu0
        %2905 = vdwg.mxu0
        %2906 = vrot.lane.b32.xlu0 %v2130, 104
        %v2907 = vpop.permute.xlu0 %2906
        %2908 = vrot.lane.b32.xlu0 %v2247, 104
        %v2909 = vpop.permute.xlu0 %2908
        %v2911 = vsel %vm963, %v2907, 0
        %v2914 = vsel %vm963, %v2909, 0
        %2916 = vmatprep.subr.bf16.mxu0 0
        %2917 = vmatpush1.bf16.xpose.msra.mxu0 %v2914
        %2918 = vmatprep.subr.bf16.mxu0 0
        %2919 = vmatpush1.bf16.xpose.msra.mxu0 0
        %2920 = vmatprep.subr.bf16.mxu0 0
        %2921 = vmatpush1.bf16.xpose.msra.mxu0 0
        %2922 = vmatprep.subr.bf16.mxu0 0
        %2923 = vmatpush1.bf16.xpose.msra.mxu0 0
        %2924 = vmatprep.subr.bf16.mxu0 0
        %2925 = vmatpush1.bf16.xpose.msra.mxu0 0
        %2926 = vmatprep.subr.bf16.mxu0 0
        %2927 = vmatpush1.bf16.xpose.msra.mxu0 0
        %2928 = vmatprep.subr.bf16.mxu0 0
        %2929 = vmatpush1.bf16.xpose.msra.mxu0 0
        %2930 = vmatprep.subr.bf16.mxu0 0
        %2931 = vmatpush1.bf16.xpose.msra.mxu0 0
        %2932 = vmatprep.subr.bf16.mxu0 0
        %2933 = vmatpush1.bf16.xpose.msra.mxu0 0
        %2934 = vmatprep.subr.bf16.mxu0 0
        %2935 = vmatpush1.bf16.xpose.msra.mxu0 0
        %2936 = vmatprep.subr.bf16.mxu0 0
        %2937 = vmatpush1.bf16.xpose.msra.mxu0 0
        %2938 = vmatprep.subr.bf16.mxu0 0
        %2939 = vmatpush1.bf16.xpose.msra.mxu0 0
        %2940 = vmatprep.subr.bf16.mxu0 0
        %2941 = vmatpush1.bf16.xpose.msra.mxu0 0
        %2942 = vmatprep.subr.bf16.mxu0 0
        %2943 = vmatpush1.bf16.xpose.msra.mxu0 0
        %2944 = vmatprep.subr.bf16.mxu0 0
        %2945 = vmatpush1.bf16.xpose.msra.mxu0 0
        %2946 = vmatprep.subr.bf16.mxu0 0
        %2947 = vmatpush1.bf16.xpose.msra.mxu0 0
        %2948 = vmatprep.mubr.bf16.mxu0 0
        %2949 = vmatmul.mubr.bf16.gmra.mrb[0].mxu0 %v2911
        %v2950 = vpop.f32.mrb[0].mxu0
        %v2951 = vadd.f32 %v2167, %v2950
        %v2952 = vpop.f32.mrb[0].mxu0
        %v2953 = vpop.f32.mrb[0].mxu0
        %v2954 = vpop.f32.mrb[0].mxu0
        %2955 = vdwg.mxu0
        %v2956 = vsel %vm2294, %v2901, -inf
        %2957 = vmax.xlane.f32.xlu0 %v2956
        %v2958 = vpop.xlane.xlu0 %2957
        %v2959 = vsel %vm2294, %v2951, -inf
        %2960 = vmax.xlane.f32.xlu0 %v2959
        %v2961 = vpop.xlane.xlu0 %2960
        %v2962 = vsub.f32 %v2901, %v2958
        %v2963 = vsub.f32 %v2951, %v2961
        %v2964 = vmul.f32 %v2962, 1.442695
        %v2965 = vpow.pop %v2964
        %v2966 = vmul.f32 %v2963, 1.442695
        %v2967 = vpow.pop %v2966
        %v2968 = vsel %vm2294, %v2965, 0.0
        %2969 = vadd.xlane.f32.xlu0 %v2968
        %v2970 = vpop.xlane.xlu0 %2969
        %v2971 = vsel %vm2294, %v2967, 0.0
        %2972 = vadd.xlane.f32.xlu0 %v2971
        %v2973 = vpop.xlane.xlu0 %2972
        %v2974 = vrcp.pop %v2970
        %v2975 = vrcp.pop %v2973
        %v2976 = vmul.f32 %v2965, %v2974
        %v2977 = vmul.f32 %v2967, %v2975
        %v2978 = vpack.c.bf16 %v2976, %v2976
        %v2979 = vpack.c.bf16 %v2977, %v2977
        %2980 = vrot.lane.b32.xlu0 %v2185, 72
        %v2981 = vpop.permute.xlu0 %2980
        %v2983 = vsel %vm2294, %v2978, 0
        %v2986 = vsel %vm2324, %v2981, 0
        %2988 = vmatprep.subr.bf16.mxu0 0
        %2989 = vmatpush1.bf16.msra.mxu0 %v2986
        %2990 = vmatprep.subr.bf16.mxu0 0
        %2991 = vmatpush1.bf16.msra.mxu0 0
        %2992 = vmatprep.subr.bf16.mxu0 0
        %2993 = vmatpush1.bf16.msra.mxu0 0
        %2994 = vmatprep.subr.bf16.mxu0 0
        %2995 = vmatpush1.bf16.msra.mxu0 0
        %2996 = vmatprep.subr.bf16.mxu0 0
        %2997 = vmatpush1.bf16.msra.mxu0 0
        %2998 = vmatprep.subr.bf16.mxu0 0
        %2999 = vmatpush1.bf16.msra.mxu0 0
        %3000 = vmatprep.subr.bf16.mxu0 0
        %3001 = vmatpush1.bf16.msra.mxu0 0
        %3002 = vmatprep.subr.bf16.mxu0 0
        %3003 = vmatpush1.bf16.msra.mxu0 0
        %3004 = vmatprep.subr.bf16.mxu0 0
        %3005 = vmatpush1.bf16.msra.mxu0 0
        %3006 = vmatprep.subr.bf16.mxu0 0
        %3007 = vmatpush1.bf16.msra.mxu0 0
        %3008 = vmatprep.subr.bf16.mxu0 0
        %3009 = vmatpush1.bf16.msra.mxu0 0
        %3010 = vmatprep.subr.bf16.mxu0 0
        %3011 = vmatpush1.bf16.msra.mxu0 0
        %3012 = vmatprep.subr.bf16.mxu0 0
        %3013 = vmatpush1.bf16.msra.mxu0 0
        %3014 = vmatprep.subr.bf16.mxu0 0
        %3015 = vmatpush1.bf16.msra.mxu0 0
        %3016 = vmatprep.subr.bf16.mxu0 0
        %3017 = vmatpush1.bf16.msra.mxu0 0
        %3018 = vmatprep.subr.bf16.mxu0 0
        %3019 = vmatpush1.bf16.msra.mxu0 0
        %3020 = vmatprep.mubr.bf16.mxu0 0
        %3021 = vmatmul.mubr.bf16.gmra.mrb[0].mxu0 %v2983
        %v3022 = vpop.f32.mrb[0].mxu0
        %v3023 = vadd.f32 0.0, %v3022
        %v3024 = vpop.f32.mrb[0].mxu0
        %v3025 = vpop.f32.mrb[0].mxu0
        %v3026 = vpop.f32.mrb[0].mxu0
        %3027 = vdwg.mxu0
        %3028 = vrot.lane.b32.xlu0 %v2247, 72
        %v3029 = vpop.permute.xlu0 %3028
        %v3031 = vsel %vm2294, %v2979, 0
        %v3034 = vsel %vm2324, %v3029, 0
        %3036 = vmatprep.subr.bf16.mxu0 0
        %3037 = vmatpush1.bf16.msra.mxu0 %v3034
        %3038 = vmatprep.subr.bf16.mxu0 0
        %3039 = vmatpush1.bf16.msra.mxu0 0
        %3040 = vmatprep.subr.bf16.mxu0 0
        %3041 = vmatpush1.bf16.msra.mxu0 0
        %3042 = vmatprep.subr.bf16.mxu0 0
        %3043 = vmatpush1.bf16.msra.mxu0 0
        %3044 = vmatprep.subr.bf16.mxu0 0
        %3045 = vmatpush1.bf16.msra.mxu0 0
        %3046 = vmatprep.subr.bf16.mxu0 0
        %3047 = vmatpush1.bf16.msra.mxu0 0
        %3048 = vmatprep.subr.bf16.mxu0 0
        %3049 = vmatpush1.bf16.msra.mxu0 0
        %3050 = vmatprep.subr.bf16.mxu0 0
        %3051 = vmatpush1.bf16.msra.mxu0 0
        %3052 = vmatprep.subr.bf16.mxu0 0
        %3053 = vmatpush1.bf16.msra.mxu0 0
        %3054 = vmatprep.subr.bf16.mxu0 0
        %3055 = vmatpush1.bf16.msra.mxu0 0
        %3056 = vmatprep.subr.bf16.mxu0 0
        %3057 = vmatpush1.bf16.msra.mxu0 0
        %3058 = vmatprep.subr.bf16.mxu0 0
        %3059 = vmatpush1.bf16.msra.mxu0 0
        %3060 = vmatprep.subr.bf16.mxu0 0
        %3061 = vmatpush1.bf16.msra.mxu0 0
        %3062 = vmatprep.subr.bf16.mxu0 0
        %3063 = vmatpush1.bf16.msra.mxu0 0
        %3064 = vmatprep.subr.bf16.mxu0 0
        %3065 = vmatpush1.bf16.msra.mxu0 0
        %3066 = vmatprep.subr.bf16.mxu0 0
        %3067 = vmatpush1.bf16.msra.mxu0 0
        %3068 = vmatprep.mubr.bf16.mxu0 0
        %3069 = vmatmul.mubr.bf16.gmra.mrb[0].mxu0 %v3031
        %v3070 = vpop.f32.mrb[0].mxu0
        %v3071 = vadd.f32 0.0, %v3070
        %v3072 = vpop.f32.mrb[0].mxu0
        %v3073 = vpop.f32.mrb[0].mxu0
        %v3074 = vpop.f32.mrb[0].mxu0
        %3075 = vdwg.mxu0
        %3078 = vrot.lane.b32.xlu0 %v2583, 8
        %v3079 = vpop.permute.xlu0 %3078
        %3080 = vrot.lane.b32.xlu0 %v2631, 8
        %v3081 = vpop.permute.xlu0 %3080
        %3086 = vrot.lane.b32.xlu0 %v2803, 16
        %v3087 = vpop.permute.xlu0 %3086
        %3088 = vrot.lane.b32.xlu0 %v2851, 16
        %v3089 = vpop.permute.xlu0 %3088
        %3094 = vrot.lane.b32.xlu0 %v3023, 24
        %v3095 = vpop.permute.xlu0 %3094
        %3096 = vrot.lane.b32.xlu0 %v3071, 24
        %v3097 = vpop.permute.xlu0 %3096
        %v3100 = vsel %vm963, %v2363, %v3079
        %v3101 = vsel %vm963, %v2411, %v3081
        %v3102 = vsel %vm1865, %v3100, %v3087
        %v3103 = vsel %vm1865, %v3101, %v3089
        %v3104 = vsel %vm1868, %v3102, %v3095
        %v3105 = vsel %vm1868, %v3103, %v3097
        %v3106 = vpack.c.bf16 %v3105, %v3104
        %v3107 = vlaneseq
        %v3108 = vshrl.u32 %v3107, 7
        %v3109 = vsub.s32 0, %v3108
        %v3110 = vrot.slane %v2122, %v3109
        %v3115 = vunpack.c.l.b16 %v2118
        %v3116 = vunpack.c.l.b16 %v2119
        %v3117 = vunpack.c.l.b16 %v2120
        %v3118 = vunpack.c.l.b16 %v2121
        %v3119 = vpack.c.b16 %v3116, %v3115
        %v3120 = vpack.c.b16 %v3118, %v3117
        %v3124 = vsel %vm893, %v3106, 0
        %3126 = vmatprep.subr.bf16.mxu0 0
        %3127 = vmatpush1.bf16.msra.mxu0 %v3119
        %3128 = vmatprep.subr.bf16.mxu0 0
        %3129 = vmatpush1.bf16.msra.mxu0 %v3120
        %3130 = vmatprep.subr.bf16.mxu0 0
        %3131 = vmatpush1.bf16.msra.mxu0 0
        %3132 = vmatprep.subr.bf16.mxu0 0
        %3133 = vmatpush1.bf16.msra.mxu0 0
        %3134 = vmatprep.subr.bf16.mxu0 0
        %3135 = vmatpush1.bf16.msra.mxu0 0
        %3136 = vmatprep.subr.bf16.mxu0 0
        %3137 = vmatpush1.bf16.msra.mxu0 0
        %3138 = vmatprep.subr.bf16.mxu0 0
        %3139 = vmatpush1.bf16.msra.mxu0 0
        %3140 = vmatprep.subr.bf16.mxu0 0
        %3141 = vmatpush1.bf16.msra.mxu0 0
        %3142 = vmatprep.subr.bf16.mxu0 0
        %3143 = vmatpush1.bf16.msra.mxu0 0
        %3144 = vmatprep.subr.bf16.mxu0 0
        %3145 = vmatpush1.bf16.msra.mxu0 0
        %3146 = vmatprep.subr.bf16.mxu0 0
        %3147 = vmatpush1.bf16.msra.mxu0 0
        %3148 = vmatprep.subr.bf16.mxu0 0
        %3149 = vmatpush1.bf16.msra.mxu0 0
        %3150 = vmatprep.subr.bf16.mxu0 0
        %3151 = vmatpush1.bf16.msra.mxu0 0
        %3152 = vmatprep.subr.bf16.mxu0 0
        %3153 = vmatpush1.bf16.msra.mxu0 0
        %3154 = vmatprep.subr.bf16.mxu0 0
        %3155 = vmatpush1.bf16.msra.mxu0 0
        %3156 = vmatprep.subr.bf16.mxu0 0
        %3157 = vmatpush1.bf16.msra.mxu0 0
        %3158 = vmatprep.mubr.bf16.mxu0 0
        %3159 = vmatmul.mubr.bf16.gmra.mrb[0].mxu0 %v3124
        %v3160 = vpop.f32.mrb[0].mxu0
        %v3161 = vadd.f32 %v3110, %v3160
        %v3162 = vpop.f32.mrb[0].mxu0
        %v3163 = vpop.f32.mrb[0].mxu0
        %v3164 = vadd.f32 %v3110, %v3163
        %v3165 = vpop.f32.mrb[0].mxu0
        %3166 = vdwg.mxu0
        %v3167 = vadd.f32 %v1973, %v3161
        %v3168 = vadd.f32 %v1974, %v3164
        %v3169 = vld [vmem:[%s822 + $0x6] sm:$0x1]
        %v3170 = vld [vmem:[%s822 + $0x7] sm:$0x1]
        %v3171 = vsel %vm893, %v3167, 0.0
        %3172 = vadd.xlane.f32.xlu0 %v3171
        %v3173 = vpop.xlane.xlu0 %3172
        %v3174 = vsel %vm893, %v3168, 0.0
        %3175 = vadd.xlane.f32.xlu0 %v3174
        %v3176 = vpop.xlane.xlu0 %3175
        %v3177 = vmul.f32 %v3173, %v1942
        %v3178 = vmul.f32 %v3176, %v1942
        %v3179 = vsub.f32 %v3167, %v3177
        %v3180 = vsub.f32 %v3168, %v3178
        %v3181 = vmul.f32 %v3179, %v3179
        %v3182 = vmul.f32 %v3180, %v3180
        %v3183 = vsel %vm893, %v3181, 0.0
        %3184 = vadd.xlane.f32.xlu0 %v3183
        %v3185 = vpop.xlane.xlu0 %3184
        %v3186 = vsel %vm893, %v3182, 0.0
        %3187 = vadd.xlane.f32.xlu0 %v3186
        %v3188 = vpop.xlane.xlu0 %3187
        %v3189 = vmul.f32 %v3185, %v1942
        %v3190 = vmul.f32 %v3188, %v1942
        %v3191 = vadd.f32 %v3189, 1e-05
        %v3192 = vadd.f32 %v3190, 1e-05
        %v3193 = vrsqrt.pop %v3191
        %v3194 = vrsqrt.pop %v3192
        %v3195 = vmul.f32 %v3179, %v3193
        %v3196 = vmul.f32 %v3180, %v3194
        %v3197 = vlaneseq
        %v3198 = vshrl.u32 %v3197, 7
        %v3199 = vsub.s32 0, %v3198
        %v3200 = vrot.slane %v3169, %v3199
        %v3201 = vmul.f32 %v3195, %v3200
        %v3202 = vmul.f32 %v3196, %v3200
        %v3203 = vlaneseq
        %v3204 = vshrl.u32 %v3203, 7
        %v3205 = vsub.s32 0, %v3204
        %v3206 = vrot.slane %v3170, %v3205
        %v3207 = vadd.f32 %v3201, %v3206
        %v3208 = vadd.f32 %v3202, %v3206
        %v3209 = vpack.c.bf16 %v3208, %v3207
        %v3210 = vld [vmem:[%s806] sm:$0xf]
        %v3211 = vld [vmem:[%s806 + $0x4] sm:$0xf]
        %v3212 = vld [vmem:[%s806 + $0x8] sm:$0xf]
        %v3213 = vld [vmem:[%s806 + $0xc] sm:$0xf]
        %v3214 = vld [vmem:[%s825] sm:$0x1]
        %v3216 = vlaneseq
        %v3217 = vshrl.u32 %v3216, 7
        %v3218 = vsub.s32 0, %v3217
        %v3219 = vrot.slane %v3214, %v3218
        %v3225 = vunpack.c.l.b16 %v3210
        %v3226 = vunpack.c.l.b16 %v3211
        %v3227 = vunpack.c.l.b16 %v3212
        %v3228 = vunpack.c.l.b16 %v3213
        %v3229 = vpack.c.b16 %v3226, %v3225
        %v3230 = vpack.c.b16 %v3228, %v3227
        %v3234 = vsel %vm893, %v3209, 0
        %3236 = vmatprep.subr.bf16.mxu0 0
        %3237 = vmatpush1.bf16.msra.mxu0 %v3229
        %3238 = vmatprep.subr.bf16.mxu0 0
        %3239 = vmatpush1.bf16.msra.mxu0 %v3230
        %3240 = vmatprep.subr.bf16.mxu0 0
        %3241 = vmatpush1.bf16.msra.mxu0 0
        %3242 = vmatprep.subr.bf16.mxu0 0
        %3243 = vmatpush1.bf16.msra.mxu0 0
        %3244 = vmatprep.subr.bf16.mxu0 0
        %3245 = vmatpush1.bf16.msra.mxu0 0
        %3246 = vmatprep.subr.bf16.mxu0 0
        %3247 = vmatpush1.bf16.msra.mxu0 0
        %3248 = vmatprep.subr.bf16.mxu0 0
        %3249 = vmatpush1.bf16.msra.mxu0 0
        %3250 = vmatprep.subr.bf16.mxu0 0
        %3251 = vmatpush1.bf16.msra.mxu0 0
        %3252 = vmatprep.subr.bf16.mxu0 0
        %3253 = vmatpush1.bf16.msra.mxu0 0
        %3254 = vmatprep.subr.bf16.mxu0 0
        %3255 = vmatpush1.bf16.msra.mxu0 0
        %3256 = vmatprep.subr.bf16.mxu0 0
        %3257 = vmatpush1.bf16.msra.mxu0 0
        %3258 = vmatprep.subr.bf16.mxu0 0
        %3259 = vmatpush1.bf16.msra.mxu0 0
        %3260 = vmatprep.subr.bf16.mxu0 0
        %3261 = vmatpush1.bf16.msra.mxu0 0
        %3262 = vmatprep.subr.bf16.mxu0 0
        %3263 = vmatpush1.bf16.msra.mxu0 0
        %3264 = vmatprep.subr.bf16.mxu0 0
        %3265 = vmatpush1.bf16.msra.mxu0 0
        %3266 = vmatprep.subr.bf16.mxu0 0
        %3267 = vmatpush1.bf16.msra.mxu0 0
        %3268 = vmatprep.mubr.bf16.mxu0 0
        %3269 = vmatmul.mubr.bf16.gmra.mrb[0].mxu0 %v3234
        %v3270 = vpop.f32.mrb[0].mxu0
        %v3271 = vadd.f32 %v3219, %v3270
        %v3272 = vpop.f32.mrb[0].mxu0
        %v3273 = vpop.f32.mrb[0].mxu0
        %v3274 = vadd.f32 %v3219, %v3273
        %v3275 = vpop.f32.mrb[0].mxu0
        %3276 = vdwg.mxu0
        %v3277 = vmax.f32 %v3271, 0.0
        %v3278 = vmax.f32 %v3274, 0.0
        %v3279 = vpack.c.bf16 %v3278, %v3277
        %v3280 = vld [vmem:[%s811] sm:$0xf]
        %v3281 = vld [vmem:[%s811 + $0x4] sm:$0xf]
        %v3282 = vld [vmem:[%s811 + $0x8] sm:$0xf]
        %v3283 = vld [vmem:[%s811 + $0xc] sm:$0xf]
        %v3284 = vld [vmem:[%s811 + $0x10] sm:$0xf]
        %v3285 = vld [vmem:[%s811 + $0x14] sm:$0xf]
        %v3286 = vld [vmem:[%s811 + $0x18] sm:$0xf]
        %v3287 = vld [vmem:[%s811 + $0x1c] sm:$0xf]
        %v3288 = vld [vmem:[%s822 + $0x3] sm:$0x1]
        %v3289 = vlaneseq
        %v3290 = vshrl.u32 %v3289, 7
        %v3291 = vsub.s32 0, %v3290
        %v3292 = vrot.slane %v3288, %v3291
        %v3301 = vunpack.c.l.b16 %v3280
        %v3302 = vunpack.c.l.b16 %v3281
        %v3303 = vunpack.c.l.b16 %v3282
        %v3304 = vunpack.c.l.b16 %v3283
        %v3305 = vunpack.c.l.b16 %v3284
        %v3306 = vunpack.c.l.b16 %v3285
        %v3307 = vunpack.c.l.b16 %v3286
        %v3308 = vunpack.c.l.b16 %v3287
        %v3309 = vpack.c.b16 %v3302, %v3301
        %v3310 = vpack.c.b16 %v3304, %v3303
        %v3311 = vpack.c.b16 %v3306, %v3305
        %v3312 = vpack.c.b16 %v3308, %v3307
        %vm3317 = vcmask 523264
        %v3319 = vsel %vm3317, %v3279, 0
        %3321 = vmatprep.subr.bf16.mxu0 0
        %3322 = vmatpush1.bf16.msra.mxu0 %v3309
        %3323 = vmatprep.subr.bf16.mxu0 0
        %3324 = vmatpush1.bf16.msra.mxu0 %v3310
        %3325 = vmatprep.subr.bf16.mxu0 0
        %3326 = vmatpush1.bf16.msra.mxu0 %v3311
        %3327 = vmatprep.subr.bf16.mxu0 0
        %3328 = vmatpush1.bf16.msra.mxu0 %v3312
        %3329 = vmatprep.subr.bf16.mxu0 0
        %3330 = vmatpush1.bf16.msra.mxu0 0
        %3331 = vmatprep.subr.bf16.mxu0 0
        %3332 = vmatpush1.bf16.msra.mxu0 0
        %3333 = vmatprep.subr.bf16.mxu0 0
        %3334 = vmatpush1.bf16.msra.mxu0 0
        %3335 = vmatprep.subr.bf16.mxu0 0
        %3336 = vmatpush1.bf16.msra.mxu0 0
        %3337 = vmatprep.subr.bf16.mxu0 0
        %3338 = vmatpush1.bf16.msra.mxu0 0
        %3339 = vmatprep.subr.bf16.mxu0 0
        %3340 = vmatpush1.bf16.msra.mxu0 0
        %3341 = vmatprep.subr.bf16.mxu0 0
        %3342 = vmatpush1.bf16.msra.mxu0 0
        %3343 = vmatprep.subr.bf16.mxu0 0
        %3344 = vmatpush1.bf16.msra.mxu0 0
        %3345 = vmatprep.subr.bf16.mxu0 0
        %3346 = vmatpush1.bf16.msra.mxu0 0
        %3347 = vmatprep.subr.bf16.mxu0 0
        %3348 = vmatpush1.bf16.msra.mxu0 0
        %3349 = vmatprep.subr.bf16.mxu0 0
        %3350 = vmatpush1.bf16.msra.mxu0 0
        %3351 = vmatprep.subr.bf16.mxu0 0
        %3352 = vmatpush1.bf16.msra.mxu0 0
        %3353 = vmatprep.mubr.bf16.mxu0 0
        %3354 = vmatmul.mubr.bf16.gmra.mrb[0].mxu0 %v3319
        %v3355 = vpop.f32.mrb[0].mxu0
        %v3356 = vadd.f32 %v3292, %v3355
        %v3357 = vpop.f32.mrb[0].mxu0
        %v3358 = vpop.f32.mrb[0].mxu0
        %v3359 = vadd.f32 %v3292, %v3358
        %v3360 = vpop.f32.mrb[0].mxu0
        %3361 = vdwg.mxu0
        %v3362 = vadd.f32 %v3207, %v3356
        %v3363 = vadd.f32 %v3208, %v3359
        %v3364 = vld [vmem:[%s822 + $0x8] sm:$0x1]
        %v3365 = vld [vmem:[%s822 + $0x9] sm:$0x1]
        %v3366 = vsel %vm893, %v3362, 0.0
        %3367 = vadd.xlane.f32.xlu0 %v3366
        %v3368 = vpop.xlane.xlu0 %3367
        %v3369 = vsel %vm893, %v3363, 0.0
        %3370 = vadd.xlane.f32.xlu0 %v3369
        %v3371 = vpop.xlane.xlu0 %3370
        %v3372 = vmul.f32 %v3368, %v1942
        %v3373 = vmul.f32 %v3371, %v1942
        %v3374 = vsub.f32 %v3362, %v3372
        %v3375 = vsub.f32 %v3363, %v3373
        %v3376 = vmul.f32 %v3374, %v3374
        %v3377 = vmul.f32 %v3375, %v3375
        %v3378 = vsel %vm893, %v3376, 0.0
        %3379 = vadd.xlane.f32.xlu0 %v3378
        %v3380 = vpop.xlane.xlu0 %3379
        %v3381 = vsel %vm893, %v3377, 0.0
        %3382 = vadd.xlane.f32.xlu0 %v3381
        %v3383 = vpop.xlane.xlu0 %3382
        %v3384 = vmul.f32 %v3380, %v1942
        %v3385 = vmul.f32 %v3383, %v1942
        %v3386 = vadd.f32 %v3384, 1e-05
        %v3387 = vadd.f32 %v3385, 1e-05
        %v3388 = vrsqrt.pop %v3386
        %v3389 = vrsqrt.pop %v3387
        %v3390 = vmul.f32 %v3374, %v3388
        %v3391 = vmul.f32 %v3375, %v3389
        %v3392 = vlaneseq
        %v3393 = vshrl.u32 %v3392, 7
        %v3394 = vsub.s32 0, %v3393
        %v3395 = vrot.slane %v3364, %v3394
        %v3396 = vmul.f32 %v3390, %v3395
        %v3397 = vmul.f32 %v3391, %v3395
        %v3398 = vlaneseq
        %v3399 = vshrl.u32 %v3398, 7
        %v3400 = vsub.s32 0, %v3399
        %v3401 = vrot.slane %v3365, %v3400
        %v3402 = vadd.f32 %v3396, %v3401
        %v3403 = vadd.f32 %v3397, %v3401
        %3404 = vst.msk [vmem:[#allocation2] sm:$0xff] %vm893, %v3402
        %3405 = vst.msk [vmem:[#allocation2 + $0x8] sm:$0xff] %vm893, %v3403
        %p3406 = scmp.eq.s32.totalorder %s36, 1
        // Predicated region
        $region101: #{tpu_custom_call.1} parent=87 // pred_check
          %p3407 = pneg %p3406
        $region102: #{tpu_custom_call.1} parent=87 // pred_check_branch
          %3409 = sbr.rel (%p3407) target = $region104
        $region103: #{tpu_custom_call.1} parent=87 // pred_region
          %v3411 = vsel %vm963, %v857, 0
          %3413 = vmatprep.subr.mxu0 0.0
          %3414 = vmatpush1.msra.mxu0 %v3402
          %3415 = vmatprep.subr.mxu0 0.0
          %3416 = vmatpush1.msra.mxu0 0.0
          %3417 = vmatprep.subr.mxu0 0.0
          %3418 = vmatpush1.msra.mxu0 0.0
          %3419 = vmatprep.subr.mxu0 0.0
          %3420 = vmatpush1.msra.mxu0 0.0
          %3421 = vmatprep.subr.mxu0 0.0
          %3422 = vmatpush1.msra.mxu0 0.0
          %3423 = vmatprep.subr.mxu0 0.0
          %3424 = vmatpush1.msra.mxu0 0.0
          %3425 = vmatprep.subr.mxu0 0.0
          %3426 = vmatpush1.msra.mxu0 0.0
          %3427 = vmatprep.subr.mxu0 0.0
          %3428 = vmatpush1.msra.mxu0 0.0
          %3429 = vmatprep.subr.mxu0 0.0
          %3430 = vmatpush1.msra.mxu0 0.0
          %3431 = vmatprep.subr.mxu0 0.0
          %3432 = vmatpush1.msra.mxu0 0.0
          %3433 = vmatprep.subr.mxu0 0.0
          %3434 = vmatpush1.msra.mxu0 0.0
          %3435 = vmatprep.subr.mxu0 0.0
          %3436 = vmatpush1.msra.mxu0 0.0
          %3437 = vmatprep.subr.mxu0 0.0
          %3438 = vmatpush1.msra.mxu0 0.0
          %3439 = vmatprep.subr.mxu0 0.0
          %3440 = vmatpush1.msra.mxu0 0.0
          %3441 = vmatprep.subr.mxu0 0.0
          %3442 = vmatpush1.msra.mxu0 0.0
          %3443 = vmatprep.subr.mxu0 0.0
          %3444 = vmatpush1.msra.mxu0 0.0
          %3445 = vmatprep.subr.mxu0 0.0
          %3446 = vmatpush1.msra.mxu0 0.0
          %3447 = vmatprep.subr.mxu0 0.0
          %3448 = vmatpush1.msra.mxu0 0.0
          %3449 = vmatprep.subr.mxu0 0.0
          %3450 = vmatpush1.msra.mxu0 0.0
          %3451 = vmatprep.subr.mxu0 0.0
          %3452 = vmatpush1.msra.mxu0 0.0
          %3453 = vmatprep.subr.mxu0 0.0
          %3454 = vmatpush1.msra.mxu0 0.0
          %3455 = vmatprep.subr.mxu0 0.0
          %3456 = vmatpush1.msra.mxu0 0.0
          %3457 = vmatprep.subr.mxu0 0.0
          %3458 = vmatpush1.msra.mxu0 0.0
          %3459 = vmatprep.subr.mxu0 0.0
          %3460 = vmatpush1.msra.mxu0 0.0
          %3461 = vmatprep.subr.mxu0 0.0
          %3462 = vmatpush1.msra.mxu0 0.0
          %3463 = vmatprep.subr.mxu0 0.0
          %3464 = vmatpush1.msra.mxu0 0.0
          %3465 = vmatprep.subr.mxu0 0.0
          %3466 = vmatpush1.msra.mxu0 0.0
          %3467 = vmatprep.subr.mxu0 0.0
          %3468 = vmatpush1.msra.mxu0 0.0
          %3469 = vmatprep.subr.mxu0 0.0
          %3470 = vmatpush1.msra.mxu0 0.0
          %3471 = vmatprep.subr.mxu0 0.0
          %3472 = vmatpush1.msra.mxu0 0.0
          %3473 = vmatprep.subr.mxu0 0.0
          %3474 = vmatpush1.msra.mxu0 0.0
          %3475 = vmatprep.subr.mxu0 0.0
          %3476 = vmatpush1.msra.mxu0 0.0
          %3477 = vmatprep.mubr.f32.mxu0 0.0
          %3478 = vmatmul.mubr.f32.gmra.mrb[0].mxu0 %v3411
          %v3479 = vpop.f32.mrb[0].mxu0
          %v3480 = vadd.f32 0.0, %v3479
          %v3481 = vpop.f32.mrb[0].mxu0
          %3482 = vdwg.mxu0
          %v3484 = vsel %vm963, %v858, 0
          %3486 = vmatprep.subr.mxu0 0.0
          %3487 = vmatpush1.msra.mxu0 %v3403
          %3488 = vmatprep.subr.mxu0 0.0
          %3489 = vmatpush1.msra.mxu0 0.0
          %3490 = vmatprep.subr.mxu0 0.0
          %3491 = vmatpush1.msra.mxu0 0.0
          %3492 = vmatprep.subr.mxu0 0.0
          %3493 = vmatpush1.msra.mxu0 0.0
          %3494 = vmatprep.subr.mxu0 0.0
          %3495 = vmatpush1.msra.mxu0 0.0
          %3496 = vmatprep.subr.mxu0 0.0
          %3497 = vmatpush1.msra.mxu0 0.0
          %3498 = vmatprep.subr.mxu0 0.0
          %3499 = vmatpush1.msra.mxu0 0.0
          %3500 = vmatprep.subr.mxu0 0.0
          %3501 = vmatpush1.msra.mxu0 0.0
          %3502 = vmatprep.subr.mxu0 0.0
          %3503 = vmatpush1.msra.mxu0 0.0
          %3504 = vmatprep.subr.mxu0 0.0
          %3505 = vmatpush1.msra.mxu0 0.0
          %3506 = vmatprep.subr.mxu0 0.0
          %3507 = vmatpush1.msra.mxu0 0.0
          %3508 = vmatprep.subr.mxu0 0.0
          %3509 = vmatpush1.msra.mxu0 0.0
          %3510 = vmatprep.subr.mxu0 0.0
          %3511 = vmatpush1.msra.mxu0 0.0
          %3512 = vmatprep.subr.mxu0 0.0
          %3513 = vmatpush1.msra.mxu0 0.0
          %3514 = vmatprep.subr.mxu0 0.0
          %3515 = vmatpush1.msra.mxu0 0.0
          %3516 = vmatprep.subr.mxu0 0.0
          %3517 = vmatpush1.msra.mxu0 0.0
          %3518 = vmatprep.subr.mxu0 0.0
          %3519 = vmatpush1.msra.mxu0 0.0
          %3520 = vmatprep.subr.mxu0 0.0
          %3521 = vmatpush1.msra.mxu0 0.0
          %3522 = vmatprep.subr.mxu0 0.0
          %3523 = vmatpush1.msra.mxu0 0.0
          %3524 = vmatprep.subr.mxu0 0.0
          %3525 = vmatpush1.msra.mxu0 0.0
          %3526 = vmatprep.subr.mxu0 0.0
          %3527 = vmatpush1.msra.mxu0 0.0
          %3528 = vmatprep.subr.mxu0 0.0
          %3529 = vmatpush1.msra.mxu0 0.0
          %3530 = vmatprep.subr.mxu0 0.0
          %3531 = vmatpush1.msra.mxu0 0.0
          %3532 = vmatprep.subr.mxu0 0.0
          %3533 = vmatpush1.msra.mxu0 0.0
          %3534 = vmatprep.subr.mxu0 0.0
          %3535 = vmatpush1.msra.mxu0 0.0
          %3536 = vmatprep.subr.mxu0 0.0
          %3537 = vmatpush1.msra.mxu0 0.0
          %3538 = vmatprep.subr.mxu0 0.0
          %3539 = vmatpush1.msra.mxu0 0.0
          %3540 = vmatprep.subr.mxu0 0.0
          %3541 = vmatpush1.msra.mxu0 0.0
          %3542 = vmatprep.subr.mxu0 0.0
          %3543 = vmatpush1.msra.mxu0 0.0
          %3544 = vmatprep.subr.mxu0 0.0
          %3545 = vmatpush1.msra.mxu0 0.0
          %3546 = vmatprep.subr.mxu0 0.0
          %3547 = vmatpush1.msra.mxu0 0.0
          %3548 = vmatprep.subr.mxu0 0.0
          %3549 = vmatpush1.msra.mxu0 0.0
          %3550 = vmatprep.mubr.f32.mxu0 0.0
          %3551 = vmatmul.mubr.f32.gmra.mrb[0].mxu0 %v3484
          %v3552 = vpop.f32.mrb[0].mxu0
          %v3553 = vadd.f32 0.0, %v3552
          %v3554 = vpop.f32.mrb[0].mxu0
          %3555 = vdwg.mxu0
          %v3556 = vrcp.pop 8.0
          %v3557 = vmul.f32 %v3480, %v3556
          %v3558 = vmul.f32 %v3553, %v3556
          %v3559 = vpack.c.bf16 %v3557, %v3557
          %v3560 = vpack.c.bf16 %v3558, %v3558
          %v3561 = vld [vmem:[%s15] sm:$0xf]
          %v3562 = vld [vmem:[%s15 + $0x4] sm:$0xf]
          %v3563 = vld [vmem:[%s15 + $0x8] sm:$0xf]
          %v3564 = vld [vmem:[%s15 + $0xc] sm:$0xf]
          %v3565 = vld [vmem:[%s16] sm:$0x1]
          %v3567 = vlaneseq
          %v3568 = vshrl.u32 %v3567, 7
          %v3569 = vsub.s32 0, %v3568
          %v3570 = vrot.slane %v3565, %v3569
          %v3574 = vunpack.c.l.b16 %v3559
          %v3575 = vunpack.c.l.b16 %v3560
          %v3576 = vrot.slane %v3575, 7
          %vm3577 = vcmask 1041409
          %v3578 = vsel %vm3577, %v3576, %v3574
          %v3579 = vpack.c.b16 %v3578, %v3578
          %v3584 = vunpack.c.l.b16 %v3561
          %v3585 = vunpack.c.l.b16 %v3562
          %v3586 = vunpack.c.l.b16 %v3563
          %v3587 = vunpack.c.l.b16 %v3564
          %v3588 = vpack.c.b16 %v3585, %v3584
          %v3589 = vpack.c.b16 %v3587, %v3586
          %v3593 = vsel %vm893, %v3579, 0
          %3595 = vmatprep.subr.bf16.mxu0 0
          %3596 = vmatpush1.bf16.msra.mxu0 %v3588
          %3597 = vmatprep.subr.bf16.mxu0 0
          %3598 = vmatpush1.bf16.msra.mxu0 %v3589
          %3599 = vmatprep.subr.bf16.mxu0 0
          %3600 = vmatpush1.bf16.msra.mxu0 0
          %3601 = vmatprep.subr.bf16.mxu0 0
          %3602 = vmatpush1.bf16.msra.mxu0 0
          %3603 = vmatprep.subr.bf16.mxu0 0
          %3604 = vmatpush1.bf16.msra.mxu0 0
          %3605 = vmatprep.subr.bf16.mxu0 0
          %3606 = vmatpush1.bf16.msra.mxu0 0
          %3607 = vmatprep.subr.bf16.mxu0 0
          %3608 = vmatpush1.bf16.msra.mxu0 0
          %3609 = vmatprep.subr.bf16.mxu0 0
          %3610 = vmatpush1.bf16.msra.mxu0 0
          %3611 = vmatprep.subr.bf16.mxu0 0
          %3612 = vmatpush1.bf16.msra.mxu0 0
          %3613 = vmatprep.subr.bf16.mxu0 0
          %3614 = vmatpush1.bf16.msra.mxu0 0
          %3615 = vmatprep.subr.bf16.mxu0 0
          %3616 = vmatpush1.bf16.msra.mxu0 0
          %3617 = vmatprep.subr.bf16.mxu0 0
          %3618 = vmatpush1.bf16.msra.mxu0 0
          %3619 = vmatprep.subr.bf16.mxu0 0
          %3620 = vmatpush1.bf16.msra.mxu0 0
          %3621 = vmatprep.subr.bf16.mxu0 0
          %3622 = vmatpush1.bf16.msra.mxu0 0
          %3623 = vmatprep.subr.bf16.mxu0 0
          %3624 = vmatpush1.bf16.msra.mxu0 0
          %3625 = vmatprep.subr.bf16.mxu0 0
          %3626 = vmatpush1.bf16.msra.mxu0 0
          %3627 = vmatprep.mubr.bf16.mxu0 0
          %3628 = vmatmul.mubr.bf16.gmra.mrb[0].mxu0 %v3593
          %v3629 = vpop.f32.mrb[0].mxu0
          %v3630 = vadd.f32 %v3570, %v3629
          %v3631 = vpop.f32.mrb[0].mxu0
          %v3632 = vpop.f32.mrb[0].mxu0
          %v3633 = vpop.f32.mrb[0].mxu0
          %3634 = vdwg.mxu0
          %v3637 = vunpack.c.l.s4 1966171168
          %v3638 = vunpack.c.0.s8 %v3637
          %v3639 = vlaneseq
          %v3640 = vshrl.u32 %v3639, 7
          %v3641 = vsub.s32 %v3638, %v3640
          %v3642 = vrot.slane %v3630, %v3641
          %v3643 = vcombine.high %v3642, %v3642
          %v3645 = vunpack.c.l.s4 1966171168
          %v3646 = vunpack.c.0.s8 %v3645
          %v3647 = vlaneseq
          %v3648 = vshrl.u32 %v3647, 7
          %v3649 = vsub.s32 %v3646, %v3648
          %v3650 = vrot.slane %v3642, %v3649
          %v3652 = vunpack.c.l.s4 1966171168
          %v3653 = vunpack.c.0.s8 %v3652
          %v3654 = vlaneseq
          %v3655 = vshrl.u32 %v3654, 7
          %v3656 = vsub.s32 %v3653, %v3655
          %v3657 = vrot.slane %v3643, %v3656
          %vm3660 = vcmask 122880
          %3661 = vst.msk [vmem:[#allocation8] sm:$0x1] %vm3660, %v3650
          %3662 = vst.msk [vmem:[#allocation8 + $0x1] sm:$0x1] %vm3660, %v3657
        $region104: #{tpu_custom_call.1} parent=87 // pred_fallthru
          _
        // Predicated region
        $region105: #{tpu_custom_call.1} parent=87 // pred_check
          %p3663 = pneg %p493
        $region106: #{tpu_custom_call.1} parent=87 // pred_check_branch
          %3665 = sbr.rel (%p3663) target = $region108
        $region107: #{tpu_custom_call.1} parent=87 // pred_region
          %s3666 = smul.u32 2, %s35
          %s3668 = ssub.s32 32, 32
          %3669 = vsyncadd [#allocation5], %s3668
          %s3670 = smul.addr %s3666, 16
          %s3671 = scalar_lea.hbm %s17, %s3670
          %s3672 = sshll.u32 [#allocation8], 4
          %s3673 = int_to_ptr.vmem [resolvable:$true] %s3672
          %3678 = dma.vmem_to_hbm [thread:$0]  %s3673, 32, %s3671, [#allocation5], 16, 16, 1
        $region108: #{tpu_custom_call.1} parent=87 // pred_fallthru
          _
        // Predicated region
        $region109: #{tpu_custom_call.1} parent=87 // pred_check
          %p3679 = pneg %p493
        $region110: #{tpu_custom_call.1} parent=87 // pred_check_branch
          %3681 = sbr.rel (%p3679) target = $region112
        $region111: #{tpu_custom_call.1} parent=87 // pred_region
          %3682 = dma.done [#allocation5], 32
        $region112: #{tpu_custom_call.1} parent=87 // pred_fallthru
          _
      $region88: #{tpu_custom_call.1} parent=5 // pred_fallthru
        _
      %p3683 = scmp.le.s32.totalorder 2, %s26
      // Predicated region
      $region113: #{tpu_custom_call.1} parent=5 // pred_check
        %p3684 = pneg %p3683
      $region114: #{tpu_custom_call.1} parent=5 // pred_check_branch
        %3686 = sbr.rel (%p3684) target = $region116
      $region115: #{tpu_custom_call.1} parent=5 // pred_region
        %s3687 = ssub.s32 %s26, 2
      $region116: #{tpu_custom_call.1} parent=5 // pred_fallthru
        _
    $region6: #{tpu_custom_call.1} parent=1 // loop_footer
      %s30 = sadd.s32 1, %s26
    $region7: #{tpu_custom_call.1} parent=1 // loop_footer_branch
      %25 = sbr.rel target = $region3
    $region8: #{tpu_custom_call.1} parent=1 // loop_exit
      _
    %3688 = vsyncpa [#allocation4], 1
    %s3689 = scalar_lea.sflag [#allocation4], 1
    %3690 = vsyncpa %s3689, 1
    %3691 = vsyncpa [#allocation7], 1
    %3692 = vsyncpa [#allocation5], 1
    %s3693 = scalar_lea.sflag [#allocation5], 1
    %3694 = vsyncpa %s3693, 1

</llo_original>
